<compile_context>
chip_gen: v7x
topology: tpu7x:2x2x1
jax: 0.10.0
libtpu: 0.0.40
codegen_flags: <defaults>
</compile_context>

<pallas_src>
import functools

import jax
import jax.numpy as jnp
from jax.experimental import pallas as pl
from jax.experimental.pallas import tpu as pltpu

_LANE = 128


def _round_up(x, m):
    return (x + m - 1) // m * m


def _pick_row_tile(oh, max_rows=128):
    """Largest divisor of `oh` <= max_rows that yields >= 2 row blocks.

    Falls back to the full extent (single block) when no such divisor exists
    (e.g. prime or very small OH).
    """
    for t in range(min(oh // 2, max_rows), 3, -1):
        if oh % t == 0:
            return t
    return oh


def _conv_bn_relu_kernel(x_ref, w_ref, s_ref, t_ref, o_ref, *,
                         kh_sz, kw_sz, toh, ow, has_relu):
    """One (image, OH-block, Cout-block) tile of conv + folded-BN + ReLU.

    x_ref: (Hp, Wp, Cin_p)          full padded image (bf16), VMEM-resident
                                    across the OH / Cout grid axes
    w_ref: (KH*KW*Cin_p, Cout_t)    flattened conv weights (bf16)
    s_ref, t_ref: (1, Cout_t)       folded affine: y = conv * s + t (f32)
    o_ref: (tOH, OW, Cout_t)        output tile (f32)
    """
    row0 = pl.program_id(1) * toh

    # im2col slab built once per tile: all KH*KW taps side-by-side on the lane
    # axis (each chunk is a 128-multiple wide -> aligned concat), then a single
    # MXU matmul with contraction K = KH*KW*Cin_p.
    taps = []
    for kh in range(kh_sz):
        for kw in range(kw_sz):
            taps.append(x_ref[pl.ds(row0 + kh, toh), pl.ds(kw, ow), :])
    slab = jnp.concatenate(taps, axis=-1)            # (tOH, OW, KH*KW*Cin_p) bf16

    acc = jnp.einsum("hwk,ko->hwo", slab, w_ref[...],
                     preferred_element_type=jnp.float32)
    acc = acc * s_ref[...] + t_ref[...]              # conv bias + BN folded in
    if has_relu:
        acc = jnp.maximum(acc, 0.0)
    o_ref[...] = acc.astype(o_ref.dtype)


def conv_bn_relu_forward(x_nchw, weight_oihw, bias, gamma, beta,
                         running_mean, running_var, *, stride=1, pad=0,
                         eps=1e-5, has_bn=True, has_relu=True):
    """Forward pass of conv_bn_relu (inference-mode BN). NCHW / OIHW in & out."""
    # TODO(synk): stride > 1 and groups != 1 not implemented (module defaults).
    assert stride == 1, "only stride=1 supported"
    N, Cin, H, W = x_nchw.shape
    Cout, Cin_w, KH, KW = weight_oihw.shape
    assert Cin_w == Cin, "groups != 1 not supported"

    cin_p = _round_up(Cin, _LANE)     # lane-dense input channels
    cout_p = _round_up(Cout, _LANE)   # lane-dense output channels

    # ---- plain-JAX glue: layout, padding, dtype, BN/bias folding -----------
    x = jnp.transpose(x_nchw, (0, 2, 3, 1))                        # NHWC
    x = jnp.pad(x, ((0, 0), (pad, pad), (pad, pad), (0, cin_p - Cin)))
    x = x.astype(jnp.bfloat16)
    Hp, Wp = x.shape[1], x.shape[2]
    OH = (Hp - KH) // stride + 1
    OW = (Wp - KW) // stride + 1

    w = jnp.transpose(weight_oihw, (2, 3, 1, 0))                   # (KH,KW,Cin,Cout)
    w = jnp.pad(w, ((0, 0), (0, 0), (0, cin_p - Cin), (0, cout_p - Cout)))
    w_flat = w.reshape(KH * KW * cin_p, cout_p).astype(jnp.bfloat16)

    bias_f = (jnp.zeros((Cout,), jnp.float32) if bias is None
              else bias.astype(jnp.float32))
    if has_bn:
        scale = gamma.astype(jnp.float32) / jnp.sqrt(
            running_var.astype(jnp.float32) + eps)
        shift = beta.astype(jnp.float32) + (
            bias_f - running_mean.astype(jnp.float32)) * scale
    else:
        scale = jnp.ones((Cout,), jnp.float32)
        shift = bias_f
    s2 = jnp.pad(scale, (0, cout_p - Cout)).reshape(1, cout_p)     # padded lanes: 0
    t2 = jnp.pad(shift, (0, cout_p - Cout)).reshape(1, cout_p)

    # ---- tiling -------------------------------------------------------------
    toh = _pick_row_tile(OH)
    n_h = OH // toh
    t_co = _LANE
    n_c = cout_p // t_co

    kernel = functools.partial(_conv_bn_relu_kernel, kh_sz=KH, kw_sz=KW,
                               toh=toh, ow=OW, has_relu=has_relu)

    out_nhwc = pl.pallas_call(
        kernel,
        out_shape=jax.ShapeDtypeStruct((N, OH, OW, cout_p), jnp.float32),
        grid_spec=pltpu.PrefetchScalarGridSpec(
            num_scalar_prefetch=0,
            grid=(N, n_h, n_c),
            in_specs=[
                # Full padded image; block index depends only on n, so the
                # image stays resident in VMEM across the OH / Cout grid axes.
                pl.BlockSpec((None, Hp, Wp, cin_p), lambda n, h, c: (n, 0, 0, 0)),
                pl.BlockSpec((KH * KW * cin_p, t_co), lambda n, h, c: (0, c)),
                pl.BlockSpec((1, t_co), lambda n, h, c: (0, c)),
                pl.BlockSpec((1, t_co), lambda n, h, c: (0, c)),
            ],
            out_specs=pl.BlockSpec((None, toh, OW, t_co),
                                   lambda n, h, c: (n, h, 0, c)),
        ),
        # NOTE: for large spatial/channel shapes also raise vmem_limit_bytes
        # (the default scoped VMEM limit, not physical capacity, gates tiles).
        compiler_params=pltpu.CompilerParams(
            dimension_semantics=("parallel", "parallel", "parallel")),
    )(x, w_flat, s2, t2)

    out = out_nhwc[..., :Cout]                                     # drop padded lanes
    return jnp.transpose(out, (0, 3, 1, 2))                        # back to NCHW


def _reference(x_nchw, weight_oihw, bias, gamma, beta, running_mean,
               running_var, *, stride=1, pad=0, eps=1e-5,
               has_bn=True, has_relu=True):
    Cout = weight_oihw.shape[0]
    y = jax.lax.conv_general_dilated(
        x_nchw, weight_oihw, (stride, stride), [(pad, pad), (pad, pad)],
        dimension_numbers=("NCHW", "OIHW", "NCHW"))
    y = y + bias.reshape(1, Cout, 1, 1)
    if has_bn:
        y = (y - running_mean.reshape(1, Cout, 1, 1)) / jnp.sqrt(
            running_var.reshape(1, Cout, 1, 1) + eps)
        y = y * gamma.reshape(1, Cout, 1, 1) + beta.reshape(1, Cout, 1, 1)
    if has_relu:
        y = jnp.maximum(y, 0.0)
    return y


if __name__ == "__main__":
    key = jax.random.PRNGKey(0)
    k_x, k_w, k_b, k_g, k_be, k_m, k_v = jax.random.split(key, 7)

    # conv_bn_relu(in_channel=4, out_channel=8, stride=1, kszie=3, pad=0)
    N, Cin, H, W = 2, 4, 16, 16
    Cout, K = 8, 3

    x = jax.random.normal(k_x, (N, Cin, H, W), jnp.float32)
    weight = jax.random.normal(k_w, (Cout, Cin, K, K), jnp.float32) * 0.1
    bias = jax.random.normal(k_b, (Cout,), jnp.float32) * 0.1
    gamma = 1.0 + 0.1 * jax.random.normal(k_g, (Cout,), jnp.float32)
    beta = 0.1 * jax.random.normal(k_be, (Cout,), jnp.float32)
    running_mean = 0.1 * jax.random.normal(k_m, (Cout,), jnp.float32)
    running_var = 1.0 + 0.1 * jnp.abs(jax.random.normal(k_v, (Cout,), jnp.float32))

    # pad=0 (module defaults): OH=OW=14, grid (2, 2, 1)
    out = conv_bn_relu_forward(x, weight, bias, gamma, beta,
                               running_mean, running_var, stride=1, pad=0)
    out = jax.block_until_ready(out)
    ref = _reference(x, weight, bias, gamma, beta, running_mean, running_var,
                     stride=1, pad=0)
    assert out.shape == ref.shape == (N, Cout, H - K + 1, W - K + 1)
    assert jnp.allclose(out, ref, rtol=5e-2, atol=5e-2), \
        "mismatch vs reference conv (pad=0)"

    # pad=1: OH=OW=16, exercises spatial padding and a different row tile.
    out1 = jax.block_until_ready(
        conv_bn_relu_forward(x, weight, bias, gamma, beta,
                             running_mean, running_var, stride=1, pad=1))
    ref1 = _reference(x, weight, bias, gamma, beta, running_mean, running_var,
                      stride=1, pad=1)
    assert out1.shape == ref1.shape == (N, Cout, H, W)
    assert jnp.allclose(out1, ref1, rtol=5e-2, atol=5e-2), \
        "mismatch vs reference conv (pad=1)"

    # has_bn=False / has_relu=False path (bias folded into a unit-scale affine).
    out2 = jax.block_until_ready(
        conv_bn_relu_forward(x, weight, bias, gamma, beta,
                             running_mean, running_var, stride=1, pad=0,
                             has_bn=False, has_relu=False))
    ref2 = _reference(x, weight, bias, gamma, beta, running_mean, running_var,
                      stride=1, pad=0, has_bn=False, has_relu=False)
    assert jnp.allclose(out2, ref2, rtol=5e-2, atol=5e-2), \
        "mismatch vs reference conv (no bn / no relu)"

    print("KERNEL_OK")
</pallas_src>

<mosaic_0001>
module attributes {stable_mosaic.version = 11 : i64} {
  func.func @_conv_bn_relu_kernel(%arg0: i32, %arg1: i32, %arg2: i32, %arg3: memref<1x16x16x128xbf16, #tpu.memory_space<vmem>>, %arg4: memref<1152x128xbf16, #tpu.memory_space<vmem>>, %arg5: memref<1x128xf32, #tpu.memory_space<vmem>>, %arg6: memref<1x128xf32, #tpu.memory_space<vmem>>, %arg7: memref<1x7x14x128xf32, #tpu.memory_space<vmem>>) attributes {dimension_semantics = [#tpu.dimension_semantics<parallel>, #tpu.dimension_semantics<parallel>, #tpu.dimension_semantics<parallel>], iteration_bounds = array<i64: 2, 2, 1>, scalar_prefetch = 0 : i64, scratch_operands = 0 : i64, tpu.core_type = #tpu.core_type<tc>, window_params = [{transform_indices = @transform_0, window_bounds = array<i64: 1, 16, 16, 128>}, {transform_indices = @transform_1, window_bounds = array<i64: 1152, 128>}, {transform_indices = @transform_2, window_bounds = array<i64: 1, 128>}, {transform_indices = @transform_3, window_bounds = array<i64: 1, 128>}, {transform_indices = @transform_4, window_bounds = array<i64: 1, 7, 14, 128>}]} {
    %c7_i32 = arith.constant 7 : i32
    %0 = arith.muli %arg1, %c7_i32 : i32
    %c0_i32 = arith.constant 0 : i32
    %1 = arith.addi %0, %c0_i32 : i32
    %c0 = arith.constant 0 : index
    %2 = arith.index_cast %1 : i32 to index
    %c0_0 = arith.constant 0 : index
    %c0_1 = arith.constant 0 : index
    %3 = vector.load %arg3[%c0, %2, %c0_0, %c0_1] : memref<1x16x16x128xbf16, #tpu.memory_space<vmem>>, vector<1x7x14x128xbf16>
    %4 = vector.shape_cast %3 : vector<1x7x14x128xbf16> to vector<7x14x128xbf16>
    %c0_i32_2 = arith.constant 0 : i32
    %5 = arith.addi %0, %c0_i32_2 : i32
    %c0_3 = arith.constant 0 : index
    %6 = arith.index_cast %5 : i32 to index
    %c1 = arith.constant 1 : index
    %c0_4 = arith.constant 0 : index
    %7 = vector.load %arg3[%c0_3, %6, %c1, %c0_4] : memref<1x16x16x128xbf16, #tpu.memory_space<vmem>>, vector<1x7x14x128xbf16>
    %8 = vector.shape_cast %7 : vector<1x7x14x128xbf16> to vector<7x14x128xbf16>
    %c0_i32_5 = arith.constant 0 : i32
    %9 = arith.addi %0, %c0_i32_5 : i32
    %c0_6 = arith.constant 0 : index
    %10 = arith.index_cast %9 : i32 to index
    %c2 = arith.constant 2 : index
    %c0_7 = arith.constant 0 : index
    %11 = vector.load %arg3[%c0_6, %10, %c2, %c0_7] : memref<1x16x16x128xbf16, #tpu.memory_space<vmem>>, vector<1x7x14x128xbf16>
    %12 = vector.shape_cast %11 : vector<1x7x14x128xbf16> to vector<7x14x128xbf16>
    %c1_i32 = arith.constant 1 : i32
    %13 = arith.addi %0, %c1_i32 : i32
    %c0_8 = arith.constant 0 : index
    %14 = arith.index_cast %13 : i32 to index
    %c0_9 = arith.constant 0 : index
    %c0_10 = arith.constant 0 : index
    %15 = vector.load %arg3[%c0_8, %14, %c0_9, %c0_10] : memref<1x16x16x128xbf16, #tpu.memory_space<vmem>>, vector<1x7x14x128xbf16>
    %16 = vector.shape_cast %15 : vector<1x7x14x128xbf16> to vector<7x14x128xbf16>
    %c1_i32_11 = arith.constant 1 : i32
    %17 = arith.addi %0, %c1_i32_11 : i32
    %c0_12 = arith.constant 0 : index
    %18 = arith.index_cast %17 : i32 to index
    %c1_13 = arith.constant 1 : index
    %c0_14 = arith.constant 0 : index
    %19 = vector.load %arg3[%c0_12, %18, %c1_13, %c0_14] : memref<1x16x16x128xbf16, #tpu.memory_space<vmem>>, vector<1x7x14x128xbf16>
    %20 = vector.shape_cast %19 : vector<1x7x14x128xbf16> to vector<7x14x128xbf16>
    %c1_i32_15 = arith.constant 1 : i32
    %21 = arith.addi %0, %c1_i32_15 : i32
    %c0_16 = arith.constant 0 : index
    %22 = arith.index_cast %21 : i32 to index
    %c2_17 = arith.constant 2 : index
    %c0_18 = arith.constant 0 : index
    %23 = vector.load %arg3[%c0_16, %22, %c2_17, %c0_18] : memref<1x16x16x128xbf16, #tpu.memory_space<vmem>>, vector<1x7x14x128xbf16>
    %24 = vector.shape_cast %23 : vector<1x7x14x128xbf16> to vector<7x14x128xbf16>
    %c2_i32 = arith.constant 2 : i32
    %25 = arith.addi %0, %c2_i32 : i32
    %c0_19 = arith.constant 0 : index
    %26 = arith.index_cast %25 : i32 to index
    %c0_20 = arith.constant 0 : index
    %c0_21 = arith.constant 0 : index
    %27 = vector.load %arg3[%c0_19, %26, %c0_20, %c0_21] : memref<1x16x16x128xbf16, #tpu.memory_space<vmem>>, vector<1x7x14x128xbf16>
    %28 = vector.shape_cast %27 : vector<1x7x14x128xbf16> to vector<7x14x128xbf16>
    %c2_i32_22 = arith.constant 2 : i32
    %29 = arith.addi %0, %c2_i32_22 : i32
    %c0_23 = arith.constant 0 : index
    %30 = arith.index_cast %29 : i32 to index
    %c1_24 = arith.constant 1 : index
    %c0_25 = arith.constant 0 : index
    %31 = vector.load %arg3[%c0_23, %30, %c1_24, %c0_25] : memref<1x16x16x128xbf16, #tpu.memory_space<vmem>>, vector<1x7x14x128xbf16>
    %32 = vector.shape_cast %31 : vector<1x7x14x128xbf16> to vector<7x14x128xbf16>
    %c2_i32_26 = arith.constant 2 : i32
    %33 = arith.addi %0, %c2_i32_26 : i32
    %c0_27 = arith.constant 0 : index
    %34 = arith.index_cast %33 : i32 to index
    %c2_28 = arith.constant 2 : index
    %c0_29 = arith.constant 0 : index
    %35 = vector.load %arg3[%c0_27, %34, %c2_28, %c0_29] : memref<1x16x16x128xbf16, #tpu.memory_space<vmem>>, vector<1x7x14x128xbf16>
    %36 = vector.shape_cast %35 : vector<1x7x14x128xbf16> to vector<7x14x128xbf16>
    %37 = tpu.concatenate %4, %8, %12, %16, %20, %24, %28, %32, %36 in 2 : vector<7x14x128xbf16>, vector<7x14x128xbf16>, vector<7x14x128xbf16>, vector<7x14x128xbf16>, vector<7x14x128xbf16>, vector<7x14x128xbf16>, vector<7x14x128xbf16>, vector<7x14x128xbf16>, vector<7x14x128xbf16> -> vector<7x14x1152xbf16>
    %c0_30 = arith.constant 0 : index
    %c0_31 = arith.constant 0 : index
    %38 = vector.load %arg4[%c0_30, %c0_31] : memref<1152x128xbf16, #tpu.memory_space<vmem>>, vector<1152x128xbf16>
    "tpu.trace_start"() <{level = 10 : i32, message = "hwk,ko->hwo"}> : () -> ()
    %cst = arith.constant dense<0.000000e+00> : vector<7x14x128xf32>
    %39 = tpu.matmul %37, %38, %cst {dimension_numbers = #tpu.dot_dimension_numbers<[2], [0], [0, 1], [1], [0, 0, 0, 1, 1, 1], [], []>} : vector<7x14x1152xbf16>, vector<1152x128xbf16>, vector<7x14x128xf32> -> vector<7x14x128xf32>
    "tpu.trace_stop"() : () -> ()
    %c0_32 = arith.constant 0 : index
    %c0_33 = arith.constant 0 : index
    %40 = vector.load %arg5[%c0_32, %c0_33] : memref<1x128xf32, #tpu.memory_space<vmem>>, vector<1x128xf32>
    %41 = vector.shape_cast %40 : vector<1x128xf32> to vector<1x1x128xf32>
    %42 = vector.broadcast %41 : vector<1x1x128xf32> to vector<7x14x128xf32>
    %43 = arith.mulf %39, %42 : vector<7x14x128xf32>
    %c0_34 = arith.constant 0 : index
    %c0_35 = arith.constant 0 : index
    %44 = vector.load %arg6[%c0_34, %c0_35] : memref<1x128xf32, #tpu.memory_space<vmem>>, vector<1x128xf32>
    %45 = vector.shape_cast %44 : vector<1x128xf32> to vector<1x1x128xf32>
    %46 = vector.broadcast %45 : vector<1x1x128xf32> to vector<7x14x128xf32>
    %47 = arith.addf %43, %46 : vector<7x14x128xf32>
    %cst_36 = arith.constant 0.000000e+00 : f32
    %48 = vector.broadcast %cst_36 : f32 to vector<7x14x128xf32>
    %49 = arith.maximumf %47, %48 : vector<7x14x128xf32>
    %c0_37 = arith.constant 0 : index
    %c0_38 = arith.constant 0 : index
    %c0_39 = arith.constant 0 : index
    %c0_40 = arith.constant 0 : index
    %50 = vector.load %arg7[%c0_37, %c0_38, %c0_39, %c0_40] : memref<1x7x14x128xf32, #tpu.memory_space<vmem>>, vector<1x7x14x128xf32>
    %51 = vector.shape_cast %50 : vector<1x7x14x128xf32> to vector<7x14x128xf32>
    %52 = vector.shape_cast %49 : vector<7x14x128xf32> to vector<1x7x14x128xf32>
    tpu.vector_store %arg7[%c0_37, %c0_38, %c0_39, %c0_40], %52 {strides = array<i32>} : memref<1x7x14x128xf32, #tpu.memory_space<vmem>>, vector<1x7x14x128xf32>,
    return
  }
  func.func @transform_0(%arg0: i32, %arg1: i32, %arg2: i32) -> (i32, i32, i32, i32) {
    %c0_i32 = arith.constant 0 : i32
    %c0_i32_0 = arith.constant 0 : i32
    %c0_i32_1 = arith.constant 0 : i32
    %c0_i32_2 = arith.constant 0 : i32
    return %arg0, %c0_i32, %c0_i32_0, %c0_i32_1 : i32, i32, i32, i32
  }
  func.func @transform_1(%arg0: i32, %arg1: i32, %arg2: i32) -> (i32, i32) {
    %c0_i32 = arith.constant 0 : i32
    %c0_i32_0 = arith.constant 0 : i32
    return %c0_i32, %arg2 : i32, i32
  }
  func.func @transform_2(%arg0: i32, %arg1: i32, %arg2: i32) -> (i32, i32) {
    %c0_i32 = arith.constant 0 : i32
    %c0_i32_0 = arith.constant 0 : i32
    return %c0_i32, %arg2 : i32, i32
  }
  func.func @transform_3(%arg0: i32, %arg1: i32, %arg2: i32) -> (i32, i32) {
    %c0_i32 = arith.constant 0 : i32
    %c0_i32_0 = arith.constant 0 : i32
    return %c0_i32, %arg2 : i32, i32
  }
  func.func @transform_4(%arg0: i32, %arg1: i32, %arg2: i32) -> (i32, i32, i32, i32) {
    %c0_i32 = arith.constant 0 : i32
    %c0_i32_0 = arith.constant 0 : i32
    return %arg0, %arg1, %c0_i32, %arg2 : i32, i32, i32, i32
  }
}

</mosaic_0001>

<llo_original>
// kernel: tpu_custom_call.1
$region0: #{tpu_custom_call.1}
  #allocation0 [shape = 'u32[]', space=smem, size = 0x4, offset = 0x4, fixed_abs, tag = 'smem constant byte address 0x4 - core index']
  #allocation1 [shape = 'u32[144,128]{1,0:T(1,128)}', space=vmem, size = 0x12000, scoped, tag = 'internal scratch']
  %s0 = inlined_call_operand.hbm [shape: bf16[2,16,16,128], index: 0, kind: input, shape index: {}]
  %s1 = inlined_call_operand.hbm [shape: bf16[1152,128], index: 1, kind: input, shape index: {}]
  %s2 = inlined_call_operand.vmem [shape: f32[1,128], index: 2, kind: input, shape index: {}]
  %s3 = inlined_call_operand.vmem [shape: f32[1,128], index: 3, kind: input, shape index: {}]
  %s4 = inlined_call_operand.vmem [shape: f32[2,14,14,128], index: 4, kind: output, shape index: {}]
  %s5 = sld [smem:[#allocation0]]
  $region57: #{tpu_custom_call.1} parent=0
    _
  %s7 = ssub.s32 1, %s5
  %s8 = scalar_select 0, %s7, %s5
  $region1: #{tpu_custom_call.1} parent=0
    #allocation2 [shape = 'u8[131072]{0}', space=vmem, size = 0x20000, scoped, tag = 'input window, operand 0']
    #allocation3 [shape = 's32[2]{0}', space=sflag, size = 0x8, scoped, tag = 'scoped memory for tpu_custom_call.1']
    #allocation4 [shape = 'u8[294912]{0}', space=vmem, size = 0x48000, scoped, tag = 'input window, operand 1, single buffered']
    #allocation5 [shape = 's32[1]{0}', space=sflag, size = 0x4, scoped, tag = 'scoped memory for tpu_custom_call.1']
    %9 = vsyncpa [#allocation3], 0
    %s10 = scalar_lea.sflag [#allocation3], 1
    %11 = vsyncpa %s10, 0
    %12 = vsyncpa [#allocation5], 0
    loop: start=0, step=1, limit=6
    $region2: #{tpu_custom_call.1} parent=1 // loop_pre_header
      _
    $region3: #{tpu_custom_call.1} parent=1 // loop_header
      %s14 = sphi 0, %s18
      %p15 = scmp.ge.s32.totalorder %s14, 6
      %s21 = sphi 0, %s40
      %s22 = sphi 0, %s36
      %s23 = sphi 0, %s32
      %s24 = sphi 0, %s21
      %s25 = sphi 0, %s22
      %s26 = sphi 0, %s23
      %s27 = sphi 0, %s24
      %s28 = sphi 0, %s25
      %s29 = sphi 0, %s26
      %s43 = sphi 0, %s45
      %s46 = sphi 0, %s43
      %s47 = sphi 0, %s46
      %s63 = sphi 0, %s47
      %s69 = sphi 0, %s71
      %s72 = sphi 0, %s69
      %s73 = sphi 0, %s72
      %s89 = sphi 0, %s73
      %s95 = sphi 0, %s97
      %s98 = sphi 0, %s95
      %s99 = sphi 0, %s98
      %s115 = sphi 0, %s99
      %s121 = sphi 0, %s123
      %s124 = sphi 0, %s121
      %s125 = sphi 0, %s124
      %s141 = sphi 0, %s125
      %s151 = sphi 0, %s153
      %s154 = sphi 0, %s151
      %s155 = sphi 0, %s154
      %s171 = sphi 0, %s155
    $region4: #{tpu_custom_call.1} parent=1 // loop_header_branch
      %17 = sbr.rel (%p15) target = $region8
    $region5: #{tpu_custom_call.1} parent=1 // loop_body
      %s19 = ssub.s32 %s14, 1
      %s20 = ssub.s32 %s14, 2
      %s30 = sadd.s32 1, %s23
      %p31 = scmp.ge.s32.totalorder %s30, 1
      %s32 = scalar_select %p31, 0, %s30
      %s33 = sadd.s32 1, %s22
      %s34 = scalar_select %p31, %s33, %s22
      %p35 = scmp.ge.s32.totalorder %s34, 2
      %s36 = scalar_select %p35, 0, %s34
      %s37 = sadd.s32 1, %s21
      %s38 = scalar_select %p35, %s37, %s21
      %p39 = scmp.ge.s32.totalorder %s38, 2
      %s40 = scalar_select %p39, 0, %s38
      %s41 = ssub.s32 %s21, %s40
      %p42 = scmp.eq.s32.totalorder %s41, 0
      %s44 = sadd.s32 %s43, 1
      %s45 = scalar_select %p42, %s43, %s44
      %p48 = pneg %p42
      %p49 = scmp.eq.s32.totalorder %s14, 3
      %p50 = por %p48, %p49
      %p51 = scmp.ne.s32.totalorder %s43, %s46
      %p52 = scmp.eq.s32.totalorder %s14, 0
      %p53 = por %p51, %p52
      %p54 = scmp.ne.s32.totalorder %s43, %s46
      %p55 = scmp.eq.s32.totalorder %s19, 3
      %p56 = por %p54, %p55
      %p57 = scmp.ne.s32.totalorder %s46, %s47
      %p58 = scmp.eq.s32.totalorder %s19, 0
      %p59 = por %p57, %p58
      %p60 = scmp.ne.s32.totalorder %s46, %s47
      %p61 = scmp.eq.s32.totalorder %s20, 3
      %p62 = por %p60, %p61
      %p64 = scmp.ne.s32.totalorder %s47, %s63
      %p65 = scmp.eq.s32.totalorder %s20, 0
      %p66 = por %p64, %p65
      %s67 = ssub.s32 %s23, %s32
      %p68 = scmp.eq.s32.totalorder %s67, 0
      %s70 = sadd.s32 %s69, 1
      %s71 = scalar_select %p68, %s69, %s70
      %p74 = pneg %p68
      %p75 = scmp.eq.s32.totalorder %s14, 3
      %p76 = por %p74, %p75
      %p77 = scmp.ne.s32.totalorder %s69, %s72
      %p78 = scmp.eq.s32.totalorder %s14, 0
      %p79 = por %p77, %p78
      %p80 = scmp.ne.s32.totalorder %s69, %s72
      %p81 = scmp.eq.s32.totalorder %s19, 3
      %p82 = por %p80, %p81
      %p83 = scmp.ne.s32.totalorder %s72, %s73
      %p84 = scmp.eq.s32.totalorder %s19, 0
      %p85 = por %p83, %p84
      %p86 = scmp.ne.s32.totalorder %s72, %s73
      %p87 = scmp.eq.s32.totalorder %s20, 3
      %p88 = por %p86, %p87
      %p90 = scmp.ne.s32.totalorder %s73, %s89
      %p91 = scmp.eq.s32.totalorder %s20, 0
      %p92 = por %p90, %p91
      %s93 = ssub.s32 %s23, %s32
      %p94 = scmp.eq.s32.totalorder %s93, 0
      %s96 = sadd.s32 %s95, 1
      %s97 = scalar_select %p94, %s95, %s96
      %p100 = pneg %p94
      %p101 = scmp.eq.s32.totalorder %s14, 3
      %p102 = por %p100, %p101
      %p103 = scmp.ne.s32.totalorder %s95, %s98
      %p104 = scmp.eq.s32.totalorder %s14, 0
      %p105 = por %p103, %p104
      %p106 = scmp.ne.s32.totalorder %s95, %s98
      %p107 = scmp.eq.s32.totalorder %s19, 3
      %p108 = por %p106, %p107
      %p109 = scmp.ne.s32.totalorder %s98, %s99
      %p110 = scmp.eq.s32.totalorder %s19, 0
      %p111 = por %p109, %p110
      %p112 = scmp.ne.s32.totalorder %s98, %s99
      %p113 = scmp.eq.s32.totalorder %s20, 3
      %p114 = por %p112, %p113
      %p116 = scmp.ne.s32.totalorder %s99, %s115
      %p117 = scmp.eq.s32.totalorder %s20, 0
      %p118 = por %p116, %p117
      %s119 = ssub.s32 %s23, %s32
      %p120 = scmp.eq.s32.totalorder %s119, 0
      %s122 = sadd.s32 %s121, 1
      %s123 = scalar_select %p120, %s121, %s122
      %p126 = pneg %p120
      %p127 = scmp.eq.s32.totalorder %s14, 3
      %p128 = por %p126, %p127
      %p129 = scmp.ne.s32.totalorder %s121, %s124
      %p130 = scmp.eq.s32.totalorder %s14, 0
      %p131 = por %p129, %p130
      %p132 = scmp.ne.s32.totalorder %s121, %s124
      %p133 = scmp.eq.s32.totalorder %s19, 3
      %p134 = por %p132, %p133
      %p135 = scmp.ne.s32.totalorder %s124, %s125
      %p136 = scmp.eq.s32.totalorder %s19, 0
      %p137 = por %p135, %p136
      %p138 = scmp.ne.s32.totalorder %s124, %s125
      %p139 = scmp.eq.s32.totalorder %s20, 3
      %p140 = por %p138, %p139
      %p142 = scmp.ne.s32.totalorder %s125, %s141
      %p143 = scmp.eq.s32.totalorder %s20, 0
      %p144 = por %p142, %p143
      %s145 = ssub.s32 %s21, %s40
      %s146 = ssub.s32 %s22, %s36
      %s147 = sor.u32 %s145, %s146
      %s148 = ssub.s32 %s23, %s32
      %s149 = sor.u32 %s147, %s148
      %p150 = scmp.eq.s32.totalorder %s149, 0
      %s152 = sadd.s32 %s151, 1
      %s153 = scalar_select %p150, %s151, %s152
      %p156 = pneg %p150
      %p157 = scmp.eq.s32.totalorder %s14, 3
      %p158 = por %p156, %p157
      %p159 = scmp.ne.s32.totalorder %s151, %s154
      %p160 = scmp.eq.s32.totalorder %s14, 0
      %p161 = por %p159, %p160
      %p162 = scmp.ne.s32.totalorder %s151, %s154
      %p163 = scmp.eq.s32.totalorder %s19, 3
      %p164 = por %p162, %p163
      %p165 = scmp.ne.s32.totalorder %s154, %s155
      %p166 = scmp.eq.s32.totalorder %s19, 0
      %p167 = por %p165, %p166
      %p168 = scmp.ne.s32.totalorder %s154, %s155
      %p169 = scmp.eq.s32.totalorder %s20, 3
      %p170 = por %p168, %p169
      %p172 = scmp.ne.s32.totalorder %s155, %s171
      %p173 = scmp.eq.s32.totalorder %s20, 0
      %p174 = por %p172, %p173
      %p175 = scmp.le.s32.totalorder 1, %s14
      %p176 = scmp.lt.s32.totalorder %s14, 5
      %p177 = pnand %p175, %p176
      %p178 = pneg %p177
      // Predicated region
      $region9: #{tpu_custom_call.1} parent=5 // pred_check
        _
      $region10: #{tpu_custom_call.1} parent=5 // pred_check_branch
        %180 = sbr.rel (%p177) target = $region12
      $region11: #{tpu_custom_call.1} parent=5 // pred_region
        %s181 = ssub.s32 %s14, 1
        // Predicated region
        $region13: #{tpu_custom_call.1} parent=11 // pred_check
          %p182 = pneg %p85
        $region14: #{tpu_custom_call.1} parent=11 // pred_check_branch
          %184 = sbr.rel (%p182) target = $region16
        $region15: #{tpu_custom_call.1} parent=11 // pred_region
          %s186 = ssub.s32 9216, 9216
          %187 = vsyncadd [#allocation5], %s186
          %s188 = smul.addr %s26, 64
          %s189 = scalar_lea.hbm %s1, %s188
          %s190 = sshll.u32 [#allocation4], 4
          %s191 = int_to_ptr.vmem [resolvable:$true] %s190
          %196 = dma.hbm_to_vmem [thread:$0]  %s189, 9216, %s191, [#allocation5], 64, 64, 4
        $region16: #{tpu_custom_call.1} parent=11 // pred_fallthru
          _
        // Predicated region
        $region17: #{tpu_custom_call.1} parent=11 // pred_check
          %p197 = pneg %p111
        $region18: #{tpu_custom_call.1} parent=11 // pred_check_branch
          %199 = sbr.rel (%p197) target = $region20
        $region19: #{tpu_custom_call.1} parent=11 // pred_region
          %p200 = scmp.lt.s32.totalorder %s26, 0
          %s201 = scalar_select %p200, %s26, 0
          %s202 = scalar_lea.vmem %s2, %s201
        $region20: #{tpu_custom_call.1} parent=11 // pred_fallthru
          _
        // Predicated region
        $region21: #{tpu_custom_call.1} parent=11 // pred_check
          %p203 = pneg %p137
        $region22: #{tpu_custom_call.1} parent=11 // pred_check_branch
          %205 = sbr.rel (%p203) target = $region24
        $region23: #{tpu_custom_call.1} parent=11 // pred_region
          %p206 = scmp.lt.s32.totalorder %s26, 0
          %s207 = scalar_select %p206, %s26, 0
          %s208 = scalar_lea.vmem %s3, %s207
        $region24: #{tpu_custom_call.1} parent=11 // pred_fallthru
          _
      $region12: #{tpu_custom_call.1} parent=5 // pred_fallthru
        _
      %p209 = scmp.lt.s32.totalorder %s14, 4
      // Predicated region
      $region25: #{tpu_custom_call.1} parent=5 // pred_check
        %p210 = pneg %p209
      $region26: #{tpu_custom_call.1} parent=5 // pred_check_branch
        %212 = sbr.rel (%p210) target = $region28
      $region27: #{tpu_custom_call.1} parent=5 // pred_region
        // Predicated region
        $region29: #{tpu_custom_call.1} parent=27 // pred_check
          %p213 = pneg %p53
        $region30: #{tpu_custom_call.1} parent=27 // pred_check_branch
          %215 = sbr.rel (%p213) target = $region32
        $region31: #{tpu_custom_call.1} parent=27 // pred_region
          %s216 = sand.u32 %s43, 1
          %s217 = scalar_lea.sflag [#allocation3], %s216
          %s218 = sand.u32 %s43, 1
          %s219 = smul.addr %s218, 128
          %s220 = scalar_lea.vmem [#allocation2], %s219
          %s222 = ssub.s32 2048, 2048
          %223 = vsyncadd %s217, %s222
          %s224 = smul.addr %s21, 32
          %s225 = smul.addr %s224, 64
          %s226 = scalar_lea.hbm %s0, %s225
          %s227 = sshll.u32 %s220, 4
          %s228 = int_to_ptr.vmem [resolvable:$true] %s227
          %233 = dma.hbm_to_vmem [thread:$0]  %s226, 2048, %s228, %s217, 64, 64, 4
        $region32: #{tpu_custom_call.1} parent=27 // pred_fallthru
          _
      $region28: #{tpu_custom_call.1} parent=5 // pred_fallthru
        _
      %p234 = scmp.le.s32.totalorder 1, %s14
      %p235 = scmp.lt.s32.totalorder %s14, 5
      %p236 = pnand %p234, %p235
      %p237 = pneg %p236
      // Predicated region
      $region33: #{tpu_custom_call.1} parent=5 // pred_check
        _
      $region34: #{tpu_custom_call.1} parent=5 // pred_check_branch
        %239 = sbr.rel (%p236) target = $region36
      $region35: #{tpu_custom_call.1} parent=5 // pred_region
        %s240 = ssub.s32 %s14, 1
        %s241 = sand.u32 %s46, 1
        %s242 = scalar_lea.sflag [#allocation3], %s241
        %s243 = sand.u32 %s46, 1
        %s244 = smul.addr %s243, 128
        %s245 = scalar_lea.vmem [#allocation2], %s244
        // Predicated region
        $region37: #{tpu_custom_call.1} parent=35 // pred_check
          %p246 = pneg %p59
        $region38: #{tpu_custom_call.1} parent=35 // pred_check_branch
          %248 = sbr.rel (%p246) target = $region40
        $region39: #{tpu_custom_call.1} parent=35 // pred_region
          %249 = dma.done %s242, 2048
        $region40: #{tpu_custom_call.1} parent=35 // pred_fallthru
          _
        // Predicated region
        $region41: #{tpu_custom_call.1} parent=35 // pred_check
          %p250 = pneg %p85
        $region42: #{tpu_custom_call.1} parent=35 // pred_check_branch
          %252 = sbr.rel (%p250) target = $region44
        $region43: #{tpu_custom_call.1} parent=35 // pred_region
          %253 = dma.done [#allocation5], 9216
        $region44: #{tpu_custom_call.1} parent=35 // pred_fallthru
          _
        %s254 = sand.u32 %s46, 1
        %s255 = scalar_lea.sflag [#allocation3], %s254
        %s256 = sand.u32 %s46, 1
        %s257 = smul.addr %s256, 128
        %s258 = scalar_lea.vmem [#allocation2], %s257
        %p259 = pneg %p59
        %p260 = pneg %p56
        %p261 = pneg %p85
        %p262 = pneg %p82
        %p263 = scmp.lt.s32.totalorder %s26, 0
        %s264 = scalar_select %p263, %s26, 0
        %s265 = scalar_lea.vmem %s2, %s264
        %p266 = pneg %p111
        %p267 = pneg %p108
        %p268 = scmp.lt.s32.totalorder %s26, 0
        %s269 = scalar_select %p268, %s26, 0
        %s270 = scalar_lea.vmem %s3, %s269
        %p271 = pneg %p137
        %p272 = pneg %p134
        %p273 = pneg %p167
        %p274 = pneg %p164
        %s275 = smul.u32 7, %s25
        %p276 = scmp.lt.s32.totalorder %s24, 1
        %s277 = scalar_select %p276, %s24, 1
        %p278 = scmp.lt.s32.totalorder %s275, 13
        %s279 = scalar_select %p278, %s275, 13
        %p280 = scmp.lt.s32.totalorder %s26, 0
        %s281 = scalar_select %p280, %s26, 0
        %s282 = smul.addr %s279, 2
        %s283 = sadd.s32 %s281, %s282
        %s284 = smul.addr %s277, 28
        %s285 = sadd.s32 %s283, %s284
        %s286 = smul.addr %s285, 8
        %s287 = scalar_lea.vmem %s4, %s286
        %p288 = scmp.lt.s32.totalorder %s26, 0
        %s289 = scalar_select %p288, %s26, 0
        %s290 = scalar_lea.vmem %s2, %s289
        %p291 = scmp.lt.s32.totalorder %s26, 0
        %s292 = scalar_select %p291, %s26, 0
        %s293 = scalar_lea.vmem %s3, %s292
        %s294 = smul.u32 7, %s25
        %p295 = scmp.lt.s32.totalorder %s24, 1
        %s296 = scalar_select %p295, %s24, 1
        %p297 = scmp.lt.s32.totalorder %s294, 13
        %s298 = scalar_select %p297, %s294, 13
        %p299 = scmp.lt.s32.totalorder %s26, 0
        %s300 = scalar_select %p299, %s26, 0
        %s301 = smul.addr %s298, 2
        %s302 = sadd.s32 %s300, %s301
        %s303 = smul.addr %s296, 28
        %s304 = sadd.s32 %s302, %s303
        %s305 = smul.addr %s304, 8
        %s306 = scalar_lea.vmem %s4, %s305
        %s307 = smul.u32 7, %s25
        %s309 = smul.u32 %s25, 7
        %s310 = smul.u32 %s309, 2
        %s311 = smul.addr %s310, 4
        %s312 = scalar_lea.vmem %s245, %s311 [#allocation2]
        %v313 = vld [vmem:[%s312] sm:$0xf]
        %v314 = vld [vmem:[%s312 + $0x4] sm:$0x7]
        %v315 = vld [vmem:[%s312 + $0x8] sm:$0xf]
        %v316 = vld [vmem:[%s312 + $0xc] sm:$0x7]
        %v317 = vld [vmem:[%s312 + $0x10] sm:$0xf]
        %v318 = vld [vmem:[%s312 + $0x14] sm:$0x7]
        %v319 = vld [vmem:[%s312 + $0x18] sm:$0xf]
        %v320 = vld [vmem:[%s312 + $0x1c] sm:$0x7]
        %v321 = vld [vmem:[%s312 + $0x20] sm:$0xf]
        %v322 = vld [vmem:[%s312 + $0x24] sm:$0x7]
        %v323 = vld [vmem:[%s312 + $0x28] sm:$0xf]
        %v324 = vld [vmem:[%s312 + $0x2c] sm:$0x7]
        %v325 = vld [vmem:[%s312 + $0x30] sm:$0xf]
        %v326 = vld [vmem:[%s312 + $0x34] sm:$0x7]
        %v327 = vld [vmem:[%s312 + $0x4] sm:$0xf]
        %v328 = vld [vmem:[%s312 + $0xc] sm:$0xf]
        %v329 = vld [vmem:[%s312 + $0x14] sm:$0xf]
        %v330 = vld [vmem:[%s312 + $0x1c] sm:$0xf]
        %v331 = vld [vmem:[%s312 + $0x24] sm:$0xf]
        %v332 = vld [vmem:[%s312 + $0x2c] sm:$0xf]
        %v333 = vld [vmem:[%s312 + $0x34] sm:$0xf]
        %v334 = vld [vmem:[%s312] sm:$0xe]
        %v335 = vld [vmem:[%s312 + $0x8] sm:$0xe]
        %v336 = vld [vmem:[%s312 + $0x10] sm:$0xe]
        %v337 = vld [vmem:[%s312 + $0x18] sm:$0xe]
        %v338 = vld [vmem:[%s312 + $0x20] sm:$0xe]
        %v339 = vld [vmem:[%s312 + $0x28] sm:$0xe]
        %v340 = vld [vmem:[%s312 + $0x30] sm:$0xe]
        %s341 = sadd.s32 %s309, 1
        %s342 = smul.u32 %s341, 2
        %s343 = smul.addr %s342, 4
        %s344 = scalar_lea.vmem %s245, %s343 [#allocation2]
        %v345 = vld [vmem:[%s344] sm:$0xf]
        %v346 = vld [vmem:[%s344 + $0x4] sm:$0x7]
        %v347 = vld [vmem:[%s344 + $0x8] sm:$0xf]
        %v348 = vld [vmem:[%s344 + $0xc] sm:$0x7]
        %v349 = vld [vmem:[%s344 + $0x10] sm:$0xf]
        %v350 = vld [vmem:[%s344 + $0x14] sm:$0x7]
        %v351 = vld [vmem:[%s344 + $0x18] sm:$0xf]
        %v352 = vld [vmem:[%s344 + $0x1c] sm:$0x7]
        %v353 = vld [vmem:[%s344 + $0x20] sm:$0xf]
        %v354 = vld [vmem:[%s344 + $0x24] sm:$0x7]
        %v355 = vld [vmem:[%s344 + $0x28] sm:$0xf]
        %v356 = vld [vmem:[%s344 + $0x2c] sm:$0x7]
        %v357 = vld [vmem:[%s344 + $0x30] sm:$0xf]
        %v358 = vld [vmem:[%s344 + $0x34] sm:$0x7]
        %v359 = vld [vmem:[%s344 + $0x4] sm:$0xf]
        %v360 = vld [vmem:[%s344 + $0xc] sm:$0xf]
        %v361 = vld [vmem:[%s344 + $0x14] sm:$0xf]
        %v362 = vld [vmem:[%s344 + $0x1c] sm:$0xf]
        %v363 = vld [vmem:[%s344 + $0x24] sm:$0xf]
        %v364 = vld [vmem:[%s344 + $0x2c] sm:$0xf]
        %v365 = vld [vmem:[%s344 + $0x34] sm:$0xf]
        %v366 = vld [vmem:[%s344] sm:$0xe]
        %v367 = vld [vmem:[%s344 + $0x8] sm:$0xe]
        %v368 = vld [vmem:[%s344 + $0x10] sm:$0xe]
        %v369 = vld [vmem:[%s344 + $0x18] sm:$0xe]
        %v370 = vld [vmem:[%s344 + $0x20] sm:$0xe]
        %v371 = vld [vmem:[%s344 + $0x28] sm:$0xe]
        %v372 = vld [vmem:[%s344 + $0x30] sm:$0xe]
        %s373 = sadd.s32 %s309, 2
        %s374 = smul.u32 %s373, 2
        %s375 = smul.addr %s374, 4
        %s376 = scalar_lea.vmem %s245, %s375 [#allocation2]
        %v377 = vld [vmem:[%s376] sm:$0xf]
        %v378 = vld [vmem:[%s376 + $0x4] sm:$0x7]
        %v379 = vld [vmem:[%s376 + $0x8] sm:$0xf]
        %v380 = vld [vmem:[%s376 + $0xc] sm:$0x7]
        %v381 = vld [vmem:[%s376 + $0x10] sm:$0xf]
        %v382 = vld [vmem:[%s376 + $0x14] sm:$0x7]
        %v383 = vld [vmem:[%s376 + $0x18] sm:$0xf]
        %v384 = vld [vmem:[%s376 + $0x1c] sm:$0x7]
        %v385 = vld [vmem:[%s376 + $0x20] sm:$0xf]
        %v386 = vld [vmem:[%s376 + $0x24] sm:$0x7]
        %v387 = vld [vmem:[%s376 + $0x28] sm:$0xf]
        %v388 = vld [vmem:[%s376 + $0x2c] sm:$0x7]
        %v389 = vld [vmem:[%s376 + $0x30] sm:$0xf]
        %v390 = vld [vmem:[%s376 + $0x34] sm:$0x7]
        %v391 = vld [vmem:[%s376 + $0x4] sm:$0xf]
        %v392 = vld [vmem:[%s376 + $0xc] sm:$0xf]
        %v393 = vld [vmem:[%s376 + $0x14] sm:$0xf]
        %v394 = vld [vmem:[%s376 + $0x1c] sm:$0xf]
        %v395 = vld [vmem:[%s376 + $0x24] sm:$0xf]
        %v396 = vld [vmem:[%s376 + $0x2c] sm:$0xf]
        %v397 = vld [vmem:[%s376 + $0x34] sm:$0xf]
        %v398 = vld [vmem:[%s376] sm:$0xe]
        %v399 = vld [vmem:[%s376 + $0x8] sm:$0xe]
        %v400 = vld [vmem:[%s376 + $0x10] sm:$0xe]
        %v401 = vld [vmem:[%s376 + $0x18] sm:$0xe]
        %v402 = vld [vmem:[%s376 + $0x20] sm:$0xe]
        %v403 = vld [vmem:[%s376 + $0x28] sm:$0xe]
        %v404 = vld [vmem:[%s376 + $0x30] sm:$0xe]
        %v419 = vunpack.c.l.b16 %v313
        %v420 = vunpack.c.l.b16 %v314
        %v421 = vunpack.c.l.b16 %v315
        %v422 = vunpack.c.l.b16 %v316
        %v423 = vunpack.c.l.b16 %v317
        %v424 = vunpack.c.l.b16 %v318
        %v425 = vunpack.c.l.b16 %v319
        %v426 = vunpack.c.l.b16 %v320
        %v427 = vunpack.c.l.b16 %v321
        %v428 = vunpack.c.l.b16 %v322
        %v429 = vunpack.c.l.b16 %v323
        %v430 = vunpack.c.l.b16 %v324
        %v431 = vunpack.c.l.b16 %v325
        %v432 = vunpack.c.l.b16 %v326
        %v433 = vpack.c.b16 %v420, %v419
        %v434 = vpack.c.b16 %v422, %v421
        %v435 = vpack.c.b16 %v424, %v423
        %v436 = vpack.c.b16 %v426, %v425
        %v437 = vpack.c.b16 %v428, %v427
        %v438 = vpack.c.b16 %v430, %v429
        %v439 = vpack.c.b16 %v432, %v431
        %v447 = vunpack.c.l.b16 %v327
        %v448 = vunpack.c.l.b16 %v328
        %v449 = vunpack.c.l.b16 %v329
        %v450 = vunpack.c.l.b16 %v330
        %v451 = vunpack.c.l.b16 %v331
        %v452 = vunpack.c.l.b16 %v332
        %v453 = vunpack.c.l.b16 %v333
        %v454 = vpack.c.b16 %v447, %v419
        %v455 = vpack.c.b16 %v448, %v421
        %v456 = vpack.c.b16 %v449, %v423
        %v457 = vpack.c.b16 %v450, %v425
        %v458 = vpack.c.b16 %v451, %v427
        %v459 = vpack.c.b16 %v452, %v429
        %v460 = vpack.c.b16 %v453, %v431
        %v462 = vshrl.u32 %v454, 16
        %v464 = vshll.u32 %v454, 16
        %v466 = vrot.slane %v464, 1
        %v467 = vor.u32 %v462, %v466
        %v469 = vshrl.u32 %v455, 16
        %v471 = vshll.u32 %v455, 16
        %v473 = vrot.slane %v471, 1
        %v474 = vor.u32 %v469, %v473
        %v476 = vshrl.u32 %v456, 16
        %v478 = vshll.u32 %v456, 16
        %v480 = vrot.slane %v478, 1
        %v481 = vor.u32 %v476, %v480
        %v483 = vshrl.u32 %v457, 16
        %v485 = vshll.u32 %v457, 16
        %v487 = vrot.slane %v485, 1
        %v488 = vor.u32 %v483, %v487
        %v490 = vshrl.u32 %v458, 16
        %v492 = vshll.u32 %v458, 16
        %v494 = vrot.slane %v492, 1
        %v495 = vor.u32 %v490, %v494
        %v497 = vshrl.u32 %v459, 16
        %v499 = vshll.u32 %v459, 16
        %v501 = vrot.slane %v499, 1
        %v502 = vor.u32 %v497, %v501
        %v504 = vshrl.u32 %v460, 16
        %v506 = vshll.u32 %v460, 16
        %v508 = vrot.slane %v506, 1
        %v509 = vor.u32 %v504, %v508
        %v517 = vunpack.c.l.b16 %v334
        %v518 = vunpack.c.l.b16 %v335
        %v519 = vunpack.c.l.b16 %v336
        %v520 = vunpack.c.l.b16 %v337
        %v521 = vunpack.c.l.b16 %v338
        %v522 = vunpack.c.l.b16 %v339
        %v523 = vunpack.c.l.b16 %v340
        %v524 = vpack.c.b16 %v447, %v517
        %v525 = vpack.c.b16 %v448, %v518
        %v526 = vpack.c.b16 %v449, %v519
        %v527 = vpack.c.b16 %v450, %v520
        %v528 = vpack.c.b16 %v451, %v521
        %v529 = vpack.c.b16 %v452, %v522
        %v530 = vpack.c.b16 %v453, %v523
        %v531 = vrot.slane %v524, 1
        %v532 = vrot.slane %v525, 1
        %v533 = vrot.slane %v526, 1
        %v534 = vrot.slane %v527, 1
        %v535 = vrot.slane %v528, 1
        %v536 = vrot.slane %v529, 1
        %v537 = vrot.slane %v530, 1
        %v552 = vunpack.c.l.b16 %v345
        %v553 = vunpack.c.l.b16 %v346
        %v554 = vunpack.c.l.b16 %v347
        %v555 = vunpack.c.l.b16 %v348
        %v556 = vunpack.c.l.b16 %v349
        %v557 = vunpack.c.l.b16 %v350
        %v558 = vunpack.c.l.b16 %v351
        %v559 = vunpack.c.l.b16 %v352
        %v560 = vunpack.c.l.b16 %v353
        %v561 = vunpack.c.l.b16 %v354
        %v562 = vunpack.c.l.b16 %v355
        %v563 = vunpack.c.l.b16 %v356
        %v564 = vunpack.c.l.b16 %v357
        %v565 = vunpack.c.l.b16 %v358
        %v566 = vpack.c.b16 %v553, %v552
        %v567 = vpack.c.b16 %v555, %v554
        %v568 = vpack.c.b16 %v557, %v556
        %v569 = vpack.c.b16 %v559, %v558
        %v570 = vpack.c.b16 %v561, %v560
        %v571 = vpack.c.b16 %v563, %v562
        %v572 = vpack.c.b16 %v565, %v564
        %v580 = vunpack.c.l.b16 %v359
        %v581 = vunpack.c.l.b16 %v360
        %v582 = vunpack.c.l.b16 %v361
        %v583 = vunpack.c.l.b16 %v362
        %v584 = vunpack.c.l.b16 %v363
        %v585 = vunpack.c.l.b16 %v364
        %v586 = vunpack.c.l.b16 %v365
        %v587 = vpack.c.b16 %v580, %v552
        %v588 = vpack.c.b16 %v581, %v554
        %v589 = vpack.c.b16 %v582, %v556
        %v590 = vpack.c.b16 %v583, %v558
        %v591 = vpack.c.b16 %v584, %v560
        %v592 = vpack.c.b16 %v585, %v562
        %v593 = vpack.c.b16 %v586, %v564
        %v595 = vshrl.u32 %v587, 16
        %v597 = vshll.u32 %v587, 16
        %v599 = vrot.slane %v597, 1
        %v600 = vor.u32 %v595, %v599
        %v602 = vshrl.u32 %v588, 16
        %v604 = vshll.u32 %v588, 16
        %v606 = vrot.slane %v604, 1
        %v607 = vor.u32 %v602, %v606
        %v609 = vshrl.u32 %v589, 16
        %v611 = vshll.u32 %v589, 16
        %v613 = vrot.slane %v611, 1
        %v614 = vor.u32 %v609, %v613
        %v616 = vshrl.u32 %v590, 16
        %v618 = vshll.u32 %v590, 16
        %v620 = vrot.slane %v618, 1
        %v621 = vor.u32 %v616, %v620
        %v623 = vshrl.u32 %v591, 16
        %v625 = vshll.u32 %v591, 16
        %v627 = vrot.slane %v625, 1
        %v628 = vor.u32 %v623, %v627
        %v630 = vshrl.u32 %v592, 16
        %v632 = vshll.u32 %v592, 16
        %v634 = vrot.slane %v632, 1
        %v635 = vor.u32 %v630, %v634
        %v637 = vshrl.u32 %v593, 16
        %v639 = vshll.u32 %v593, 16
        %v641 = vrot.slane %v639, 1
        %v642 = vor.u32 %v637, %v641
        %v650 = vunpack.c.l.b16 %v366
        %v651 = vunpack.c.l.b16 %v367
        %v652 = vunpack.c.l.b16 %v368
        %v653 = vunpack.c.l.b16 %v369
        %v654 = vunpack.c.l.b16 %v370
        %v655 = vunpack.c.l.b16 %v371
        %v656 = vunpack.c.l.b16 %v372
        %v657 = vpack.c.b16 %v580, %v650
        %v658 = vpack.c.b16 %v581, %v651
        %v659 = vpack.c.b16 %v582, %v652
        %v660 = vpack.c.b16 %v583, %v653
        %v661 = vpack.c.b16 %v584, %v654
        %v662 = vpack.c.b16 %v585, %v655
        %v663 = vpack.c.b16 %v586, %v656
        %v664 = vrot.slane %v657, 1
        %v665 = vrot.slane %v658, 1
        %v666 = vrot.slane %v659, 1
        %v667 = vrot.slane %v660, 1
        %v668 = vrot.slane %v661, 1
        %v669 = vrot.slane %v662, 1
        %v670 = vrot.slane %v663, 1
        %v685 = vunpack.c.l.b16 %v377
        %v686 = vunpack.c.l.b16 %v378
        %v687 = vunpack.c.l.b16 %v379
        %v688 = vunpack.c.l.b16 %v380
        %v689 = vunpack.c.l.b16 %v381
        %v690 = vunpack.c.l.b16 %v382
        %v691 = vunpack.c.l.b16 %v383
        %v692 = vunpack.c.l.b16 %v384
        %v693 = vunpack.c.l.b16 %v385
        %v694 = vunpack.c.l.b16 %v386
        %v695 = vunpack.c.l.b16 %v387
        %v696 = vunpack.c.l.b16 %v388
        %v697 = vunpack.c.l.b16 %v389
        %v698 = vunpack.c.l.b16 %v390
        %v699 = vpack.c.b16 %v686, %v685
        %v700 = vpack.c.b16 %v688, %v687
        %v701 = vpack.c.b16 %v690, %v689
        %v702 = vpack.c.b16 %v692, %v691
        %v703 = vpack.c.b16 %v694, %v693
        %v704 = vpack.c.b16 %v696, %v695
        %v705 = vpack.c.b16 %v698, %v697
        %v713 = vunpack.c.l.b16 %v391
        %v714 = vunpack.c.l.b16 %v392
        %v715 = vunpack.c.l.b16 %v393
        %v716 = vunpack.c.l.b16 %v394
        %v717 = vunpack.c.l.b16 %v395
        %v718 = vunpack.c.l.b16 %v396
        %v719 = vunpack.c.l.b16 %v397
        %v720 = vpack.c.b16 %v713, %v685
        %v721 = vpack.c.b16 %v714, %v687
        %v722 = vpack.c.b16 %v715, %v689
        %v723 = vpack.c.b16 %v716, %v691
        %v724 = vpack.c.b16 %v717, %v693
        %v725 = vpack.c.b16 %v718, %v695
        %v726 = vpack.c.b16 %v719, %v697
        %v728 = vshrl.u32 %v720, 16
        %v730 = vshll.u32 %v720, 16
        %v732 = vrot.slane %v730, 1
        %v733 = vor.u32 %v728, %v732
        %v735 = vshrl.u32 %v721, 16
        %v737 = vshll.u32 %v721, 16
        %v739 = vrot.slane %v737, 1
        %v740 = vor.u32 %v735, %v739
        %v742 = vshrl.u32 %v722, 16
        %v744 = vshll.u32 %v722, 16
        %v746 = vrot.slane %v744, 1
        %v747 = vor.u32 %v742, %v746
        %v749 = vshrl.u32 %v723, 16
        %v751 = vshll.u32 %v723, 16
        %v753 = vrot.slane %v751, 1
        %v754 = vor.u32 %v749, %v753
        %v756 = vshrl.u32 %v724, 16
        %v758 = vshll.u32 %v724, 16
        %v760 = vrot.slane %v758, 1
        %v761 = vor.u32 %v756, %v760
        %v763 = vshrl.u32 %v725, 16
        %v765 = vshll.u32 %v725, 16
        %v767 = vrot.slane %v765, 1
        %v768 = vor.u32 %v763, %v767
        %v770 = vshrl.u32 %v726, 16
        %v772 = vshll.u32 %v726, 16
        %v774 = vrot.slane %v772, 1
        %v775 = vor.u32 %v770, %v774
        %v783 = vunpack.c.l.b16 %v398
        %v784 = vunpack.c.l.b16 %v399
        %v785 = vunpack.c.l.b16 %v400
        %v786 = vunpack.c.l.b16 %v401
        %v787 = vunpack.c.l.b16 %v402
        %v788 = vunpack.c.l.b16 %v403
        %v789 = vunpack.c.l.b16 %v404
        %v790 = vpack.c.b16 %v713, %v783
        %v791 = vpack.c.b16 %v714, %v784
        %v792 = vpack.c.b16 %v715, %v785
        %v793 = vpack.c.b16 %v716, %v786
        %v794 = vpack.c.b16 %v717, %v787
        %v795 = vpack.c.b16 %v718, %v788
        %v796 = vpack.c.b16 %v719, %v789
        %v797 = vrot.slane %v790, 1
        %v798 = vrot.slane %v791, 1
        %v799 = vrot.slane %v792, 1
        %v800 = vrot.slane %v793, 1
        %v801 = vrot.slane %v794, 1
        %v802 = vrot.slane %v795, 1
        %v803 = vrot.slane %v796, 1
        %v804 = vld [vmem:[#allocation4] sm:$0xf]
        %v805 = vld [vmem:[#allocation4 + $0x4] sm:$0xf]
        %v806 = vld [vmem:[#allocation4 + $0x8] sm:$0xf]
        %v807 = vld [vmem:[#allocation4 + $0xc] sm:$0xf]
        %v808 = vld [vmem:[#allocation4 + $0x10] sm:$0xf]
        %v809 = vld [vmem:[#allocation4 + $0x14] sm:$0xf]
        %v810 = vld [vmem:[#allocation4 + $0x18] sm:$0xf]
        %v811 = vld [vmem:[#allocation4 + $0x1c] sm:$0xf]
        %v812 = vld [vmem:[#allocation4 + $0x20] sm:$0xf]
        %v813 = vld [vmem:[#allocation4 + $0x24] sm:$0xf]
        %v814 = vld [vmem:[#allocation4 + $0x28] sm:$0xf]
        %v815 = vld [vmem:[#allocation4 + $0x2c] sm:$0xf]
        %v816 = vld [vmem:[#allocation4 + $0x30] sm:$0xf]
        %v817 = vld [vmem:[#allocation4 + $0x34] sm:$0xf]
        %v818 = vld [vmem:[#allocation4 + $0x38] sm:$0xf]
        %v819 = vld [vmem:[#allocation4 + $0x3c] sm:$0xf]
        %v820 = vld [vmem:[#allocation4 + $0x40] sm:$0xf]
        %v821 = vld [vmem:[#allocation4 + $0x44] sm:$0xf]
        %v822 = vld [vmem:[#allocation4 + $0x48] sm:$0xf]
        %v823 = vld [vmem:[#allocation4 + $0x4c] sm:$0xf]
        %v824 = vld [vmem:[#allocation4 + $0x50] sm:$0xf]
        %v825 = vld [vmem:[#allocation4 + $0x54] sm:$0xf]
        %v826 = vld [vmem:[#allocation4 + $0x58] sm:$0xf]
        %v827 = vld [vmem:[#allocation4 + $0x5c] sm:$0xf]
        %v828 = vld [vmem:[#allocation4 + $0x60] sm:$0xf]
        %v829 = vld [vmem:[#allocation4 + $0x64] sm:$0xf]
        %v830 = vld [vmem:[#allocation4 + $0x68] sm:$0xf]
        %v831 = vld [vmem:[#allocation4 + $0x6c] sm:$0xf]
        %v832 = vld [vmem:[#allocation4 + $0x70] sm:$0xf]
        %v833 = vld [vmem:[#allocation4 + $0x74] sm:$0xf]
        %v834 = vld [vmem:[#allocation4 + $0x78] sm:$0xf]
        %v835 = vld [vmem:[#allocation4 + $0x7c] sm:$0xf]
        %v836 = vld [vmem:[#allocation4 + $0x80] sm:$0xf]
        %v837 = vld [vmem:[#allocation4 + $0x84] sm:$0xf]
        %v838 = vld [vmem:[#allocation4 + $0x88] sm:$0xf]
        %v839 = vld [vmem:[#allocation4 + $0x8c] sm:$0xf]
        %v840 = vld [vmem:[#allocation4 + $0x90] sm:$0xf]
        %v841 = vld [vmem:[#allocation4 + $0x94] sm:$0xf]
        %v842 = vld [vmem:[#allocation4 + $0x98] sm:$0xf]
        %v843 = vld [vmem:[#allocation4 + $0x9c] sm:$0xf]
        %v844 = vld [vmem:[#allocation4 + $0xa0] sm:$0xf]
        %v845 = vld [vmem:[#allocation4 + $0xa4] sm:$0xf]
        %v846 = vld [vmem:[#allocation4 + $0xa8] sm:$0xf]
        %v847 = vld [vmem:[#allocation4 + $0xac] sm:$0xf]
        %v848 = vld [vmem:[#allocation4 + $0xb0] sm:$0xf]
        %v849 = vld [vmem:[#allocation4 + $0xb4] sm:$0xf]
        %v850 = vld [vmem:[#allocation4 + $0xb8] sm:$0xf]
        %v851 = vld [vmem:[#allocation4 + $0xbc] sm:$0xf]
        %v852 = vld [vmem:[#allocation4 + $0xc0] sm:$0xf]
        %v853 = vld [vmem:[#allocation4 + $0xc4] sm:$0xf]
        %v854 = vld [vmem:[#allocation4 + $0xc8] sm:$0xf]
        %v855 = vld [vmem:[#allocation4 + $0xcc] sm:$0xf]
        %v856 = vld [vmem:[#allocation4 + $0xd0] sm:$0xf]
        %v857 = vld [vmem:[#allocation4 + $0xd4] sm:$0xf]
        %v858 = vld [vmem:[#allocation4 + $0xd8] sm:$0xf]
        %v859 = vld [vmem:[#allocation4 + $0xdc] sm:$0xf]
        %v860 = vld [vmem:[#allocation4 + $0xe0] sm:$0xf]
        %v861 = vld [vmem:[#allocation4 + $0xe4] sm:$0xf]
        %v862 = vld [vmem:[#allocation4 + $0xe8] sm:$0xf]
        %v863 = vld [vmem:[#allocation4 + $0xec] sm:$0xf]
        %v864 = vld [vmem:[#allocation4 + $0xf0] sm:$0xf]
        %v865 = vld [vmem:[#allocation4 + $0xf4] sm:$0xf]
        %v866 = vld [vmem:[#allocation4 + $0xf8] sm:$0xf]
        %v867 = vld [vmem:[#allocation4 + $0xfc] sm:$0xf]
        %v868 = vld [vmem:[#allocation4 + $0x100] sm:$0xf]
        %v869 = vld [vmem:[#allocation4 + $0x104] sm:$0xf]
        %v870 = vld [vmem:[#allocation4 + $0x108] sm:$0xf]
        %v871 = vld [vmem:[#allocation4 + $0x10c] sm:$0xf]
        %v872 = vld [vmem:[#allocation4 + $0x110] sm:$0xf]
        %v873 = vld [vmem:[#allocation4 + $0x114] sm:$0xf]
        %v874 = vld [vmem:[#allocation4 + $0x118] sm:$0xf]
        %v875 = vld [vmem:[#allocation4 + $0x11c] sm:$0xf]
        %v876 = vld [vmem:[#allocation4 + $0x120] sm:$0xf]
        %v877 = vld [vmem:[#allocation4 + $0x124] sm:$0xf]
        %v878 = vld [vmem:[#allocation4 + $0x128] sm:$0xf]
        %v879 = vld [vmem:[#allocation4 + $0x12c] sm:$0xf]
        %v880 = vld [vmem:[#allocation4 + $0x130] sm:$0xf]
        %v881 = vld [vmem:[#allocation4 + $0x134] sm:$0xf]
        %v882 = vld [vmem:[#allocation4 + $0x138] sm:$0xf]
        %v883 = vld [vmem:[#allocation4 + $0x13c] sm:$0xf]
        %v884 = vld [vmem:[#allocation4 + $0x140] sm:$0xf]
        %v885 = vld [vmem:[#allocation4 + $0x144] sm:$0xf]
        %v886 = vld [vmem:[#allocation4 + $0x148] sm:$0xf]
        %v887 = vld [vmem:[#allocation4 + $0x14c] sm:$0xf]
        %v888 = vld [vmem:[#allocation4 + $0x150] sm:$0xf]
        %v889 = vld [vmem:[#allocation4 + $0x154] sm:$0xf]
        %v890 = vld [vmem:[#allocation4 + $0x158] sm:$0xf]
        %v891 = vld [vmem:[#allocation4 + $0x15c] sm:$0xf]
        %v892 = vld [vmem:[#allocation4 + $0x160] sm:$0xf]
        %v893 = vld [vmem:[#allocation4 + $0x164] sm:$0xf]
        %v894 = vld [vmem:[#allocation4 + $0x168] sm:$0xf]
        %v895 = vld [vmem:[#allocation4 + $0x16c] sm:$0xf]
        %v896 = vld [vmem:[#allocation4 + $0x170] sm:$0xf]
        %v897 = vld [vmem:[#allocation4 + $0x174] sm:$0xf]
        %v898 = vld [vmem:[#allocation4 + $0x178] sm:$0xf]
        %v899 = vld [vmem:[#allocation4 + $0x17c] sm:$0xf]
        %v900 = vld [vmem:[#allocation4 + $0x180] sm:$0xf]
        %v901 = vld [vmem:[#allocation4 + $0x184] sm:$0xf]
        %v902 = vld [vmem:[#allocation4 + $0x188] sm:$0xf]
        %v903 = vld [vmem:[#allocation4 + $0x18c] sm:$0xf]
        %v904 = vld [vmem:[#allocation4 + $0x190] sm:$0xf]
        %v905 = vld [vmem:[#allocation4 + $0x194] sm:$0xf]
        %v906 = vld [vmem:[#allocation4 + $0x198] sm:$0xf]
        %v907 = vld [vmem:[#allocation4 + $0x19c] sm:$0xf]
        %v908 = vld [vmem:[#allocation4 + $0x1a0] sm:$0xf]
        %v909 = vld [vmem:[#allocation4 + $0x1a4] sm:$0xf]
        %v910 = vld [vmem:[#allocation4 + $0x1a8] sm:$0xf]
        %v911 = vld [vmem:[#allocation4 + $0x1ac] sm:$0xf]
        %v912 = vld [vmem:[#allocation4 + $0x1b0] sm:$0xf]
        %v913 = vld [vmem:[#allocation4 + $0x1b4] sm:$0xf]
        %v914 = vld [vmem:[#allocation4 + $0x1b8] sm:$0xf]
        %v915 = vld [vmem:[#allocation4 + $0x1bc] sm:$0xf]
        %v916 = vld [vmem:[#allocation4 + $0x1c0] sm:$0xf]
        %v917 = vld [vmem:[#allocation4 + $0x1c4] sm:$0xf]
        %v918 = vld [vmem:[#allocation4 + $0x1c8] sm:$0xf]
        %v919 = vld [vmem:[#allocation4 + $0x1cc] sm:$0xf]
        %v920 = vld [vmem:[#allocation4 + $0x1d0] sm:$0xf]
        %v921 = vld [vmem:[#allocation4 + $0x1d4] sm:$0xf]
        %v922 = vld [vmem:[#allocation4 + $0x1d8] sm:$0xf]
        %v923 = vld [vmem:[#allocation4 + $0x1dc] sm:$0xf]
        %v924 = vld [vmem:[#allocation4 + $0x1e0] sm:$0xf]
        %v925 = vld [vmem:[#allocation4 + $0x1e4] sm:$0xf]
        %v926 = vld [vmem:[#allocation4 + $0x1e8] sm:$0xf]
        %v927 = vld [vmem:[#allocation4 + $0x1ec] sm:$0xf]
        %v928 = vld [vmem:[#allocation4 + $0x1f0] sm:$0xf]
        %v929 = vld [vmem:[#allocation4 + $0x1f4] sm:$0xf]
        %v930 = vld [vmem:[#allocation4 + $0x1f8] sm:$0xf]
        %v931 = vld [vmem:[#allocation4 + $0x1fc] sm:$0xf]
        %v932 = vld [vmem:[#allocation4 + $0x200] sm:$0xf]
        %v933 = vld [vmem:[#allocation4 + $0x204] sm:$0xf]
        %v934 = vld [vmem:[#allocation4 + $0x208] sm:$0xf]
        %v935 = vld [vmem:[#allocation4 + $0x20c] sm:$0xf]
        %v936 = vld [vmem:[#allocation4 + $0x210] sm:$0xf]
        %v937 = vld [vmem:[#allocation4 + $0x214] sm:$0xf]
        %v938 = vld [vmem:[#allocation4 + $0x218] sm:$0xf]
        %v939 = vld [vmem:[#allocation4 + $0x21c] sm:$0xf]
        %v940 = vld [vmem:[#allocation4 + $0x220] sm:$0xf]
        %v941 = vld [vmem:[#allocation4 + $0x224] sm:$0xf]
        %v942 = vld [vmem:[#allocation4 + $0x228] sm:$0xf]
        %v943 = vld [vmem:[#allocation4 + $0x22c] sm:$0xf]
        %v944 = vld [vmem:[#allocation4 + $0x230] sm:$0xf]
        %v945 = vld [vmem:[#allocation4 + $0x234] sm:$0xf]
        %v946 = vld [vmem:[#allocation4 + $0x238] sm:$0xf]
        %v947 = vld [vmem:[#allocation4 + $0x23c] sm:$0xf]
        %v948 = vcombine.low %v433, %v467
        %v949 = vcombine.high %v433, %v467
        %v950 = vcombine.low %v531, %v566
        %v951 = vcombine.high %v531, %v566
        %v952 = vcombine.low %v600, %v664
        %v953 = vcombine.high %v600, %v664
        %v954 = vcombine.low %v699, %v733
        %v955 = vcombine.high %v699, %v733
        %v957 = vunpack.c.l.s4 1966171168
        %v958 = vunpack.c.0.s8 %v957
        %v959 = vlaneseq
        %v960 = vshrl.u32 %v959, 7
        %v961 = vsub.s32 %v958, %v960
        %v962 = vrot.slane %v948, %v961
        %v964 = vunpack.c.l.s4 1966171168
        %v965 = vunpack.c.0.s8 %v964
        %v966 = vlaneseq
        %v967 = vshrl.u32 %v966, 7
        %v968 = vsub.s32 %v965, %v967
        %v969 = vrot.slane %v949, %v968
        %v971 = vunpack.c.l.s4 1966171168
        %v972 = vunpack.c.0.s8 %v971
        %v973 = vlaneseq
        %v974 = vshrl.u32 %v973, 7
        %v975 = vsub.s32 %v972, %v974
        %v976 = vrot.slane %v950, %v975
        %v978 = vunpack.c.l.s4 1966171168
        %v979 = vunpack.c.0.s8 %v978
        %v980 = vlaneseq
        %v981 = vshrl.u32 %v980, 7
        %v982 = vsub.s32 %v979, %v981
        %v983 = vrot.slane %v951, %v982
        %v985 = vunpack.c.l.s4 1966171168
        %v986 = vunpack.c.0.s8 %v985
        %v987 = vlaneseq
        %v988 = vshrl.u32 %v987, 7
        %v989 = vsub.s32 %v986, %v988
        %v990 = vrot.slane %v952, %v989
        %v992 = vunpack.c.l.s4 1966171168
        %v993 = vunpack.c.0.s8 %v992
        %v994 = vlaneseq
        %v995 = vshrl.u32 %v994, 7
        %v996 = vsub.s32 %v993, %v995
        %v997 = vrot.slane %v953, %v996
        %v999 = vunpack.c.l.s4 1966171168
        %v1000 = vunpack.c.0.s8 %v999
        %v1001 = vlaneseq
        %v1002 = vshrl.u32 %v1001, 7
        %v1003 = vsub.s32 %v1000, %v1002
        %v1004 = vrot.slane %v954, %v1003
        %v1006 = vunpack.c.l.s4 1966171168
        %v1007 = vunpack.c.0.s8 %v1006
        %v1008 = vlaneseq
        %v1009 = vshrl.u32 %v1008, 7
        %v1010 = vsub.s32 %v1007, %v1009
        %v1011 = vrot.slane %v955, %v1010
        %v1012 = vcombine.low %v962, %v976
        %v1013 = vcombine.high %v962, %v976
        %v1014 = vcombine.low %v969, %v983
        %v1015 = vcombine.high %v969, %v983
        %v1016 = vcombine.low %v990, %v1004
        %v1017 = vcombine.high %v990, %v1004
        %v1018 = vcombine.low %v997, %v1011
        %v1019 = vcombine.high %v997, %v1011
        %v1021 = vunpack.c.l.s4 1966171168
        %v1022 = vunpack.c.0.s8 %v1021
        %v1023 = vlaneseq
        %v1024 = vshrl.u32 %v1023, 7
        %v1025 = vsub.s32 %v1022, %v1024
        %v1026 = vrot.slane %v1012, %v1025
        %v1028 = vunpack.c.l.s4 1966171168
        %v1029 = vunpack.c.0.s8 %v1028
        %v1030 = vlaneseq
        %v1031 = vshrl.u32 %v1030, 7
        %v1032 = vsub.s32 %v1029, %v1031
        %v1033 = vrot.slane %v1014, %v1032
        %v1035 = vunpack.c.l.s4 1966171168
        %v1036 = vunpack.c.0.s8 %v1035
        %v1037 = vlaneseq
        %v1038 = vshrl.u32 %v1037, 7
        %v1039 = vsub.s32 %v1036, %v1038
        %v1040 = vrot.slane %v1013, %v1039
        %v1042 = vunpack.c.l.s4 1966171168
        %v1043 = vunpack.c.0.s8 %v1042
        %v1044 = vlaneseq
        %v1045 = vshrl.u32 %v1044, 7
        %v1046 = vsub.s32 %v1043, %v1045
        %v1047 = vrot.slane %v1015, %v1046
        %v1049 = vunpack.c.l.s4 1966171168
        %v1050 = vunpack.c.0.s8 %v1049
        %v1051 = vlaneseq
        %v1052 = vshrl.u32 %v1051, 7
        %v1053 = vsub.s32 %v1050, %v1052
        %v1054 = vrot.slane %v1016, %v1053
        %v1056 = vunpack.c.l.s4 1966171168
        %v1057 = vunpack.c.0.s8 %v1056
        %v1058 = vlaneseq
        %v1059 = vshrl.u32 %v1058, 7
        %v1060 = vsub.s32 %v1057, %v1059
        %v1061 = vrot.slane %v1018, %v1060
        %v1063 = vunpack.c.l.s4 1966171168
        %v1064 = vunpack.c.0.s8 %v1063
        %v1065 = vlaneseq
        %v1066 = vshrl.u32 %v1065, 7
        %v1067 = vsub.s32 %v1064, %v1066
        %v1068 = vrot.slane %v1017, %v1067
        %v1070 = vunpack.c.l.s4 1966171168
        %v1071 = vunpack.c.0.s8 %v1070
        %v1072 = vlaneseq
        %v1073 = vshrl.u32 %v1072, 7
        %v1074 = vsub.s32 %v1071, %v1073
        %v1075 = vrot.slane %v1019, %v1074
        %v1076 = vcombine.low %v1026, %v1054
        %v1077 = vcombine.high %v1026, %v1054
        %v1078 = vcombine.low %v1033, %v1061
        %v1079 = vcombine.high %v1033, %v1061
        %v1080 = vcombine.low %v1040, %v1068
        %v1081 = vcombine.high %v1040, %v1068
        %v1082 = vcombine.low %v1047, %v1075
        %v1083 = vcombine.high %v797, %v797
        %v1085 = vunpack.c.l.s4 1966171168
        %v1086 = vunpack.c.0.s8 %v1085
        %v1087 = vlaneseq
        %v1088 = vshrl.u32 %v1087, 7
        %v1089 = vsub.s32 %v1086, %v1088
        %v1090 = vrot.slane %v797, %v1089
        %v1092 = vunpack.c.l.s4 1966171168
        %v1093 = vunpack.c.0.s8 %v1092
        %v1094 = vlaneseq
        %v1095 = vshrl.u32 %v1094, 7
        %v1096 = vsub.s32 %v1093, %v1095
        %v1097 = vrot.slane %v1083, %v1096
        %v1098 = vcombine.high %v1090, %v1090
        %v1099 = vcombine.high %v1097, %v1097
        %v1101 = vunpack.c.l.s4 1966171168
        %v1102 = vunpack.c.0.s8 %v1101
        %v1103 = vlaneseq
        %v1104 = vshrl.u32 %v1103, 7
        %v1105 = vsub.s32 %v1102, %v1104
        %v1106 = vrot.slane %v1090, %v1105
        %v1108 = vunpack.c.l.s4 1966171168
        %v1109 = vunpack.c.0.s8 %v1108
        %v1110 = vlaneseq
        %v1111 = vshrl.u32 %v1110, 7
        %v1112 = vsub.s32 %v1109, %v1111
        %v1113 = vrot.slane %v1097, %v1112
        %v1115 = vunpack.c.l.s4 1966171168
        %v1116 = vunpack.c.0.s8 %v1115
        %v1117 = vlaneseq
        %v1118 = vshrl.u32 %v1117, 7
        %v1119 = vsub.s32 %v1116, %v1118
        %v1120 = vrot.slane %v1098, %v1119
        %v1122 = vunpack.c.l.s4 1966171168
        %v1123 = vunpack.c.0.s8 %v1122
        %v1124 = vlaneseq
        %v1125 = vshrl.u32 %v1124, 7
        %v1126 = vsub.s32 %v1123, %v1125
        %v1127 = vrot.slane %v1099, %v1126
        %v1128 = vcombine.high %v1106, %v1106
        %v1129 = vcombine.high %v1113, %v1113
        %v1130 = vcombine.high %v1120, %v1120
        %v1131 = vcombine.low %v434, %v474
        %v1132 = vcombine.high %v434, %v474
        %v1133 = vcombine.low %v532, %v567
        %v1134 = vcombine.high %v532, %v567
        %v1135 = vcombine.low %v607, %v665
        %v1136 = vcombine.high %v607, %v665
        %v1137 = vcombine.low %v700, %v740
        %v1138 = vcombine.high %v700, %v740
        %v1140 = vunpack.c.l.s4 1966171168
        %v1141 = vunpack.c.0.s8 %v1140
        %v1142 = vlaneseq
        %v1143 = vshrl.u32 %v1142, 7
        %v1144 = vsub.s32 %v1141, %v1143
        %v1145 = vrot.slane %v1131, %v1144
        %v1147 = vunpack.c.l.s4 1966171168
        %v1148 = vunpack.c.0.s8 %v1147
        %v1149 = vlaneseq
        %v1150 = vshrl.u32 %v1149, 7
        %v1151 = vsub.s32 %v1148, %v1150
        %v1152 = vrot.slane %v1132, %v1151
        %v1154 = vunpack.c.l.s4 1966171168
        %v1155 = vunpack.c.0.s8 %v1154
        %v1156 = vlaneseq
        %v1157 = vshrl.u32 %v1156, 7
        %v1158 = vsub.s32 %v1155, %v1157
        %v1159 = vrot.slane %v1133, %v1158
        %v1161 = vunpack.c.l.s4 1966171168
        %v1162 = vunpack.c.0.s8 %v1161
        %v1163 = vlaneseq
        %v1164 = vshrl.u32 %v1163, 7
        %v1165 = vsub.s32 %v1162, %v1164
        %v1166 = vrot.slane %v1134, %v1165
        %v1168 = vunpack.c.l.s4 1966171168
        %v1169 = vunpack.c.0.s8 %v1168
        %v1170 = vlaneseq
        %v1171 = vshrl.u32 %v1170, 7
        %v1172 = vsub.s32 %v1169, %v1171
        %v1173 = vrot.slane %v1135, %v1172
        %v1175 = vunpack.c.l.s4 1966171168
        %v1176 = vunpack.c.0.s8 %v1175
        %v1177 = vlaneseq
        %v1178 = vshrl.u32 %v1177, 7
        %v1179 = vsub.s32 %v1176, %v1178
        %v1180 = vrot.slane %v1136, %v1179
        %v1182 = vunpack.c.l.s4 1966171168
        %v1183 = vunpack.c.0.s8 %v1182
        %v1184 = vlaneseq
        %v1185 = vshrl.u32 %v1184, 7
        %v1186 = vsub.s32 %v1183, %v1185
        %v1187 = vrot.slane %v1137, %v1186
        %v1189 = vunpack.c.l.s4 1966171168
        %v1190 = vunpack.c.0.s8 %v1189
        %v1191 = vlaneseq
        %v1192 = vshrl.u32 %v1191, 7
        %v1193 = vsub.s32 %v1190, %v1192
        %v1194 = vrot.slane %v1138, %v1193
        %v1195 = vcombine.low %v1145, %v1159
        %v1196 = vcombine.high %v1145, %v1159
        %v1197 = vcombine.low %v1152, %v1166
        %v1198 = vcombine.high %v1152, %v1166
        %v1199 = vcombine.low %v1173, %v1187
        %v1200 = vcombine.high %v1173, %v1187
        %v1201 = vcombine.low %v1180, %v1194
        %v1202 = vcombine.high %v1180, %v1194
        %v1204 = vunpack.c.l.s4 1966171168
        %v1205 = vunpack.c.0.s8 %v1204
        %v1206 = vlaneseq
        %v1207 = vshrl.u32 %v1206, 7
        %v1208 = vsub.s32 %v1205, %v1207
        %v1209 = vrot.slane %v1195, %v1208
        %v1211 = vunpack.c.l.s4 1966171168
        %v1212 = vunpack.c.0.s8 %v1211
        %v1213 = vlaneseq
        %v1214 = vshrl.u32 %v1213, 7
        %v1215 = vsub.s32 %v1212, %v1214
        %v1216 = vrot.slane %v1197, %v1215
        %v1218 = vunpack.c.l.s4 1966171168
        %v1219 = vunpack.c.0.s8 %v1218
        %v1220 = vlaneseq
        %v1221 = vshrl.u32 %v1220, 7
        %v1222 = vsub.s32 %v1219, %v1221
        %v1223 = vrot.slane %v1196, %v1222
        %v1225 = vunpack.c.l.s4 1966171168
        %v1226 = vunpack.c.0.s8 %v1225
        %v1227 = vlaneseq
        %v1228 = vshrl.u32 %v1227, 7
        %v1229 = vsub.s32 %v1226, %v1228
        %v1230 = vrot.slane %v1198, %v1229
        %v1232 = vunpack.c.l.s4 1966171168
        %v1233 = vunpack.c.0.s8 %v1232
        %v1234 = vlaneseq
        %v1235 = vshrl.u32 %v1234, 7
        %v1236 = vsub.s32 %v1233, %v1235
        %v1237 = vrot.slane %v1199, %v1236
        %v1239 = vunpack.c.l.s4 1966171168
        %v1240 = vunpack.c.0.s8 %v1239
        %v1241 = vlaneseq
        %v1242 = vshrl.u32 %v1241, 7
        %v1243 = vsub.s32 %v1240, %v1242
        %v1244 = vrot.slane %v1201, %v1243
        %v1246 = vunpack.c.l.s4 1966171168
        %v1247 = vunpack.c.0.s8 %v1246
        %v1248 = vlaneseq
        %v1249 = vshrl.u32 %v1248, 7
        %v1250 = vsub.s32 %v1247, %v1249
        %v1251 = vrot.slane %v1200, %v1250
        %v1253 = vunpack.c.l.s4 1966171168
        %v1254 = vunpack.c.0.s8 %v1253
        %v1255 = vlaneseq
        %v1256 = vshrl.u32 %v1255, 7
        %v1257 = vsub.s32 %v1254, %v1256
        %v1258 = vrot.slane %v1202, %v1257
        %v1259 = vcombine.low %v1209, %v1237
        %v1260 = vcombine.high %v1209, %v1237
        %v1261 = vcombine.low %v1216, %v1244
        %v1262 = vcombine.high %v1216, %v1244
        %v1263 = vcombine.low %v1223, %v1251
        %v1264 = vcombine.high %v1223, %v1251
        %v1265 = vcombine.low %v1230, %v1258
        %v1266 = vcombine.high %v798, %v798
        %v1268 = vunpack.c.l.s4 1966171168
        %v1269 = vunpack.c.0.s8 %v1268
        %v1270 = vlaneseq
        %v1271 = vshrl.u32 %v1270, 7
        %v1272 = vsub.s32 %v1269, %v1271
        %v1273 = vrot.slane %v798, %v1272
        %v1275 = vunpack.c.l.s4 1966171168
        %v1276 = vunpack.c.0.s8 %v1275
        %v1277 = vlaneseq
        %v1278 = vshrl.u32 %v1277, 7
        %v1279 = vsub.s32 %v1276, %v1278
        %v1280 = vrot.slane %v1266, %v1279
        %v1281 = vcombine.high %v1273, %v1273
        %v1282 = vcombine.high %v1280, %v1280
        %v1284 = vunpack.c.l.s4 1966171168
        %v1285 = vunpack.c.0.s8 %v1284
        %v1286 = vlaneseq
        %v1287 = vshrl.u32 %v1286, 7
        %v1288 = vsub.s32 %v1285, %v1287
        %v1289 = vrot.slane %v1273, %v1288
        %v1291 = vunpack.c.l.s4 1966171168
        %v1292 = vunpack.c.0.s8 %v1291
        %v1293 = vlaneseq
        %v1294 = vshrl.u32 %v1293, 7
        %v1295 = vsub.s32 %v1292, %v1294
        %v1296 = vrot.slane %v1280, %v1295
        %v1298 = vunpack.c.l.s4 1966171168
        %v1299 = vunpack.c.0.s8 %v1298
        %v1300 = vlaneseq
        %v1301 = vshrl.u32 %v1300, 7
        %v1302 = vsub.s32 %v1299, %v1301
        %v1303 = vrot.slane %v1281, %v1302
        %v1305 = vunpack.c.l.s4 1966171168
        %v1306 = vunpack.c.0.s8 %v1305
        %v1307 = vlaneseq
        %v1308 = vshrl.u32 %v1307, 7
        %v1309 = vsub.s32 %v1306, %v1308
        %v1310 = vrot.slane %v1282, %v1309
        %v1311 = vcombine.high %v1289, %v1289
        %v1312 = vcombine.high %v1296, %v1296
        %v1313 = vcombine.high %v1303, %v1303
        %v1314 = vcombine.low %v435, %v481
        %v1315 = vcombine.high %v435, %v481
        %v1316 = vcombine.low %v533, %v568
        %v1317 = vcombine.high %v533, %v568
        %v1318 = vcombine.low %v614, %v666
        %v1319 = vcombine.high %v614, %v666
        %v1320 = vcombine.low %v701, %v747
        %v1321 = vcombine.high %v701, %v747
        %v1323 = vunpack.c.l.s4 1966171168
        %v1324 = vunpack.c.0.s8 %v1323
        %v1325 = vlaneseq
        %v1326 = vshrl.u32 %v1325, 7
        %v1327 = vsub.s32 %v1324, %v1326
        %v1328 = vrot.slane %v1314, %v1327
        %v1330 = vunpack.c.l.s4 1966171168
        %v1331 = vunpack.c.0.s8 %v1330
        %v1332 = vlaneseq
        %v1333 = vshrl.u32 %v1332, 7
        %v1334 = vsub.s32 %v1331, %v1333
        %v1335 = vrot.slane %v1315, %v1334
        %v1337 = vunpack.c.l.s4 1966171168
        %v1338 = vunpack.c.0.s8 %v1337
        %v1339 = vlaneseq
        %v1340 = vshrl.u32 %v1339, 7
        %v1341 = vsub.s32 %v1338, %v1340
        %v1342 = vrot.slane %v1316, %v1341
        %v1344 = vunpack.c.l.s4 1966171168
        %v1345 = vunpack.c.0.s8 %v1344
        %v1346 = vlaneseq
        %v1347 = vshrl.u32 %v1346, 7
        %v1348 = vsub.s32 %v1345, %v1347
        %v1349 = vrot.slane %v1317, %v1348
        %v1351 = vunpack.c.l.s4 1966171168
        %v1352 = vunpack.c.0.s8 %v1351
        %v1353 = vlaneseq
        %v1354 = vshrl.u32 %v1353, 7
        %v1355 = vsub.s32 %v1352, %v1354
        %v1356 = vrot.slane %v1318, %v1355
        %v1358 = vunpack.c.l.s4 1966171168
        %v1359 = vunpack.c.0.s8 %v1358
        %v1360 = vlaneseq
        %v1361 = vshrl.u32 %v1360, 7
        %v1362 = vsub.s32 %v1359, %v1361
        %v1363 = vrot.slane %v1319, %v1362
        %v1365 = vunpack.c.l.s4 1966171168
        %v1366 = vunpack.c.0.s8 %v1365
        %v1367 = vlaneseq
        %v1368 = vshrl.u32 %v1367, 7
        %v1369 = vsub.s32 %v1366, %v1368
        %v1370 = vrot.slane %v1320, %v1369
        %v1372 = vunpack.c.l.s4 1966171168
        %v1373 = vunpack.c.0.s8 %v1372
        %v1374 = vlaneseq
        %v1375 = vshrl.u32 %v1374, 7
        %v1376 = vsub.s32 %v1373, %v1375
        %v1377 = vrot.slane %v1321, %v1376
        %v1378 = vcombine.low %v1328, %v1342
        %v1379 = vcombine.high %v1328, %v1342
        %v1380 = vcombine.low %v1335, %v1349
        %v1381 = vcombine.high %v1335, %v1349
        %v1382 = vcombine.low %v1356, %v1370
        %v1383 = vcombine.high %v1356, %v1370
        %v1384 = vcombine.low %v1363, %v1377
        %v1385 = vcombine.high %v1363, %v1377
        %v1387 = vunpack.c.l.s4 1966171168
        %v1388 = vunpack.c.0.s8 %v1387
        %v1389 = vlaneseq
        %v1390 = vshrl.u32 %v1389, 7
        %v1391 = vsub.s32 %v1388, %v1390
        %v1392 = vrot.slane %v1378, %v1391
        %v1394 = vunpack.c.l.s4 1966171168
        %v1395 = vunpack.c.0.s8 %v1394
        %v1396 = vlaneseq
        %v1397 = vshrl.u32 %v1396, 7
        %v1398 = vsub.s32 %v1395, %v1397
        %v1399 = vrot.slane %v1380, %v1398
        %v1401 = vunpack.c.l.s4 1966171168
        %v1402 = vunpack.c.0.s8 %v1401
        %v1403 = vlaneseq
        %v1404 = vshrl.u32 %v1403, 7
        %v1405 = vsub.s32 %v1402, %v1404
        %v1406 = vrot.slane %v1379, %v1405
        %v1408 = vunpack.c.l.s4 1966171168
        %v1409 = vunpack.c.0.s8 %v1408
        %v1410 = vlaneseq
        %v1411 = vshrl.u32 %v1410, 7
        %v1412 = vsub.s32 %v1409, %v1411
        %v1413 = vrot.slane %v1381, %v1412
        %v1415 = vunpack.c.l.s4 1966171168
        %v1416 = vunpack.c.0.s8 %v1415
        %v1417 = vlaneseq
        %v1418 = vshrl.u32 %v1417, 7
        %v1419 = vsub.s32 %v1416, %v1418
        %v1420 = vrot.slane %v1382, %v1419
        %v1422 = vunpack.c.l.s4 1966171168
        %v1423 = vunpack.c.0.s8 %v1422
        %v1424 = vlaneseq
        %v1425 = vshrl.u32 %v1424, 7
        %v1426 = vsub.s32 %v1423, %v1425
        %v1427 = vrot.slane %v1384, %v1426
        %v1429 = vunpack.c.l.s4 1966171168
        %v1430 = vunpack.c.0.s8 %v1429
        %v1431 = vlaneseq
        %v1432 = vshrl.u32 %v1431, 7
        %v1433 = vsub.s32 %v1430, %v1432
        %v1434 = vrot.slane %v1383, %v1433
        %v1436 = vunpack.c.l.s4 1966171168
        %v1437 = vunpack.c.0.s8 %v1436
        %v1438 = vlaneseq
        %v1439 = vshrl.u32 %v1438, 7
        %v1440 = vsub.s32 %v1437, %v1439
        %v1441 = vrot.slane %v1385, %v1440
        %v1442 = vcombine.low %v1392, %v1420
        %v1443 = vcombine.high %v1392, %v1420
        %v1444 = vcombine.low %v1399, %v1427
        %v1445 = vcombine.high %v1399, %v1427
        %v1446 = vcombine.low %v1406, %v1434
        %v1447 = vcombine.high %v1406, %v1434
        %v1448 = vcombine.low %v1413, %v1441
        %v1449 = vcombine.high %v799, %v799
        %v1451 = vunpack.c.l.s4 1966171168
        %v1452 = vunpack.c.0.s8 %v1451
        %v1453 = vlaneseq
        %v1454 = vshrl.u32 %v1453, 7
        %v1455 = vsub.s32 %v1452, %v1454
        %v1456 = vrot.slane %v799, %v1455
        %v1458 = vunpack.c.l.s4 1966171168
        %v1459 = vunpack.c.0.s8 %v1458
        %v1460 = vlaneseq
        %v1461 = vshrl.u32 %v1460, 7
        %v1462 = vsub.s32 %v1459, %v1461
        %v1463 = vrot.slane %v1449, %v1462
        %v1464 = vcombine.high %v1456, %v1456
        %v1465 = vcombine.high %v1463, %v1463
        %v1467 = vunpack.c.l.s4 1966171168
        %v1468 = vunpack.c.0.s8 %v1467
        %v1469 = vlaneseq
        %v1470 = vshrl.u32 %v1469, 7
        %v1471 = vsub.s32 %v1468, %v1470
        %v1472 = vrot.slane %v1456, %v1471
        %v1474 = vunpack.c.l.s4 1966171168
        %v1475 = vunpack.c.0.s8 %v1474
        %v1476 = vlaneseq
        %v1477 = vshrl.u32 %v1476, 7
        %v1478 = vsub.s32 %v1475, %v1477
        %v1479 = vrot.slane %v1463, %v1478
        %v1481 = vunpack.c.l.s4 1966171168
        %v1482 = vunpack.c.0.s8 %v1481
        %v1483 = vlaneseq
        %v1484 = vshrl.u32 %v1483, 7
        %v1485 = vsub.s32 %v1482, %v1484
        %v1486 = vrot.slane %v1464, %v1485
        %v1488 = vunpack.c.l.s4 1966171168
        %v1489 = vunpack.c.0.s8 %v1488
        %v1490 = vlaneseq
        %v1491 = vshrl.u32 %v1490, 7
        %v1492 = vsub.s32 %v1489, %v1491
        %v1493 = vrot.slane %v1465, %v1492
        %v1494 = vcombine.high %v1472, %v1472
        %v1495 = vcombine.high %v1479, %v1479
        %v1496 = vcombine.high %v1486, %v1486
        %v1497 = vcombine.low %v436, %v488
        %v1498 = vcombine.high %v436, %v488
        %v1499 = vcombine.low %v534, %v569
        %v1500 = vcombine.high %v534, %v569
        %v1501 = vcombine.low %v621, %v667
        %v1502 = vcombine.high %v621, %v667
        %v1503 = vcombine.low %v702, %v754
        %v1504 = vcombine.high %v702, %v754
        %v1506 = vunpack.c.l.s4 1966171168
        %v1507 = vunpack.c.0.s8 %v1506
        %v1508 = vlaneseq
        %v1509 = vshrl.u32 %v1508, 7
        %v1510 = vsub.s32 %v1507, %v1509
        %v1511 = vrot.slane %v1497, %v1510
        %v1513 = vunpack.c.l.s4 1966171168
        %v1514 = vunpack.c.0.s8 %v1513
        %v1515 = vlaneseq
        %v1516 = vshrl.u32 %v1515, 7
        %v1517 = vsub.s32 %v1514, %v1516
        %v1518 = vrot.slane %v1498, %v1517
        %v1520 = vunpack.c.l.s4 1966171168
        %v1521 = vunpack.c.0.s8 %v1520
        %v1522 = vlaneseq
        %v1523 = vshrl.u32 %v1522, 7
        %v1524 = vsub.s32 %v1521, %v1523
        %v1525 = vrot.slane %v1499, %v1524
        %v1527 = vunpack.c.l.s4 1966171168
        %v1528 = vunpack.c.0.s8 %v1527
        %v1529 = vlaneseq
        %v1530 = vshrl.u32 %v1529, 7
        %v1531 = vsub.s32 %v1528, %v1530
        %v1532 = vrot.slane %v1500, %v1531
        %v1534 = vunpack.c.l.s4 1966171168
        %v1535 = vunpack.c.0.s8 %v1534
        %v1536 = vlaneseq
        %v1537 = vshrl.u32 %v1536, 7
        %v1538 = vsub.s32 %v1535, %v1537
        %v1539 = vrot.slane %v1501, %v1538
        %v1541 = vunpack.c.l.s4 1966171168
        %v1542 = vunpack.c.0.s8 %v1541
        %v1543 = vlaneseq
        %v1544 = vshrl.u32 %v1543, 7
        %v1545 = vsub.s32 %v1542, %v1544
        %v1546 = vrot.slane %v1502, %v1545
        %v1548 = vunpack.c.l.s4 1966171168
        %v1549 = vunpack.c.0.s8 %v1548
        %v1550 = vlaneseq
        %v1551 = vshrl.u32 %v1550, 7
        %v1552 = vsub.s32 %v1549, %v1551
        %v1553 = vrot.slane %v1503, %v1552
        %v1555 = vunpack.c.l.s4 1966171168
        %v1556 = vunpack.c.0.s8 %v1555
        %v1557 = vlaneseq
        %v1558 = vshrl.u32 %v1557, 7
        %v1559 = vsub.s32 %v1556, %v1558
        %v1560 = vrot.slane %v1504, %v1559
        %v1561 = vcombine.low %v1511, %v1525
        %v1562 = vcombine.high %v1511, %v1525
        %v1563 = vcombine.low %v1518, %v1532
        %v1564 = vcombine.high %v1518, %v1532
        %v1565 = vcombine.low %v1539, %v1553
        %v1566 = vcombine.high %v1539, %v1553
        %v1567 = vcombine.low %v1546, %v1560
        %v1568 = vcombine.high %v1546, %v1560
        %v1570 = vunpack.c.l.s4 1966171168
        %v1571 = vunpack.c.0.s8 %v1570
        %v1572 = vlaneseq
        %v1573 = vshrl.u32 %v1572, 7
        %v1574 = vsub.s32 %v1571, %v1573
        %v1575 = vrot.slane %v1561, %v1574
        %v1577 = vunpack.c.l.s4 1966171168
        %v1578 = vunpack.c.0.s8 %v1577
        %v1579 = vlaneseq
        %v1580 = vshrl.u32 %v1579, 7
        %v1581 = vsub.s32 %v1578, %v1580
        %v1582 = vrot.slane %v1563, %v1581
        %v1584 = vunpack.c.l.s4 1966171168
        %v1585 = vunpack.c.0.s8 %v1584
        %v1586 = vlaneseq
        %v1587 = vshrl.u32 %v1586, 7
        %v1588 = vsub.s32 %v1585, %v1587
        %v1589 = vrot.slane %v1562, %v1588
        %v1591 = vunpack.c.l.s4 1966171168
        %v1592 = vunpack.c.0.s8 %v1591
        %v1593 = vlaneseq
        %v1594 = vshrl.u32 %v1593, 7
        %v1595 = vsub.s32 %v1592, %v1594
        %v1596 = vrot.slane %v1564, %v1595
        %v1598 = vunpack.c.l.s4 1966171168
        %v1599 = vunpack.c.0.s8 %v1598
        %v1600 = vlaneseq
        %v1601 = vshrl.u32 %v1600, 7
        %v1602 = vsub.s32 %v1599, %v1601
        %v1603 = vrot.slane %v1565, %v1602
        %v1605 = vunpack.c.l.s4 1966171168
        %v1606 = vunpack.c.0.s8 %v1605
        %v1607 = vlaneseq
        %v1608 = vshrl.u32 %v1607, 7
        %v1609 = vsub.s32 %v1606, %v1608
        %v1610 = vrot.slane %v1567, %v1609
        %v1612 = vunpack.c.l.s4 1966171168
        %v1613 = vunpack.c.0.s8 %v1612
        %v1614 = vlaneseq
        %v1615 = vshrl.u32 %v1614, 7
        %v1616 = vsub.s32 %v1613, %v1615
        %v1617 = vrot.slane %v1566, %v1616
        %v1619 = vunpack.c.l.s4 1966171168
        %v1620 = vunpack.c.0.s8 %v1619
        %v1621 = vlaneseq
        %v1622 = vshrl.u32 %v1621, 7
        %v1623 = vsub.s32 %v1620, %v1622
        %v1624 = vrot.slane %v1568, %v1623
        %v1625 = vcombine.low %v1575, %v1603
        %v1626 = vcombine.high %v1575, %v1603
        %v1627 = vcombine.low %v1582, %v1610
        %v1628 = vcombine.high %v1582, %v1610
        %v1629 = vcombine.low %v1589, %v1617
        %v1630 = vcombine.high %v1589, %v1617
        %v1631 = vcombine.low %v1596, %v1624
        %v1632 = vcombine.high %v800, %v800
        %v1634 = vunpack.c.l.s4 1966171168
        %v1635 = vunpack.c.0.s8 %v1634
        %v1636 = vlaneseq
        %v1637 = vshrl.u32 %v1636, 7
        %v1638 = vsub.s32 %v1635, %v1637
        %v1639 = vrot.slane %v800, %v1638
        %v1641 = vunpack.c.l.s4 1966171168
        %v1642 = vunpack.c.0.s8 %v1641
        %v1643 = vlaneseq
        %v1644 = vshrl.u32 %v1643, 7
        %v1645 = vsub.s32 %v1642, %v1644
        %v1646 = vrot.slane %v1632, %v1645
        %v1647 = vcombine.high %v1639, %v1639
        %v1648 = vcombine.high %v1646, %v1646
        %v1650 = vunpack.c.l.s4 1966171168
        %v1651 = vunpack.c.0.s8 %v1650
        %v1652 = vlaneseq
        %v1653 = vshrl.u32 %v1652, 7
        %v1654 = vsub.s32 %v1651, %v1653
        %v1655 = vrot.slane %v1639, %v1654
        %v1657 = vunpack.c.l.s4 1966171168
        %v1658 = vunpack.c.0.s8 %v1657
        %v1659 = vlaneseq
        %v1660 = vshrl.u32 %v1659, 7
        %v1661 = vsub.s32 %v1658, %v1660
        %v1662 = vrot.slane %v1646, %v1661
        %v1664 = vunpack.c.l.s4 1966171168
        %v1665 = vunpack.c.0.s8 %v1664
        %v1666 = vlaneseq
        %v1667 = vshrl.u32 %v1666, 7
        %v1668 = vsub.s32 %v1665, %v1667
        %v1669 = vrot.slane %v1647, %v1668
        %v1671 = vunpack.c.l.s4 1966171168
        %v1672 = vunpack.c.0.s8 %v1671
        %v1673 = vlaneseq
        %v1674 = vshrl.u32 %v1673, 7
        %v1675 = vsub.s32 %v1672, %v1674
        %v1676 = vrot.slane %v1648, %v1675
        %v1677 = vcombine.high %v1655, %v1655
        %v1678 = vcombine.high %v1662, %v1662
        %v1679 = vcombine.high %v1669, %v1669
        %v1680 = vcombine.low %v437, %v495
        %v1681 = vcombine.high %v437, %v495
        %v1682 = vcombine.low %v535, %v570
        %v1683 = vcombine.high %v535, %v570
        %v1684 = vcombine.low %v628, %v668
        %v1685 = vcombine.high %v628, %v668
        %v1686 = vcombine.low %v703, %v761
        %v1687 = vcombine.high %v703, %v761
        %v1689 = vunpack.c.l.s4 1966171168
        %v1690 = vunpack.c.0.s8 %v1689
        %v1691 = vlaneseq
        %v1692 = vshrl.u32 %v1691, 7
        %v1693 = vsub.s32 %v1690, %v1692
        %v1694 = vrot.slane %v1680, %v1693
        %v1696 = vunpack.c.l.s4 1966171168
        %v1697 = vunpack.c.0.s8 %v1696
        %v1698 = vlaneseq
        %v1699 = vshrl.u32 %v1698, 7
        %v1700 = vsub.s32 %v1697, %v1699
        %v1701 = vrot.slane %v1681, %v1700
        %v1703 = vunpack.c.l.s4 1966171168
        %v1704 = vunpack.c.0.s8 %v1703
        %v1705 = vlaneseq
        %v1706 = vshrl.u32 %v1705, 7
        %v1707 = vsub.s32 %v1704, %v1706
        %v1708 = vrot.slane %v1682, %v1707
        %v1710 = vunpack.c.l.s4 1966171168
        %v1711 = vunpack.c.0.s8 %v1710
        %v1712 = vlaneseq
        %v1713 = vshrl.u32 %v1712, 7
        %v1714 = vsub.s32 %v1711, %v1713
        %v1715 = vrot.slane %v1683, %v1714
        %v1717 = vunpack.c.l.s4 1966171168
        %v1718 = vunpack.c.0.s8 %v1717
        %v1719 = vlaneseq
        %v1720 = vshrl.u32 %v1719, 7
        %v1721 = vsub.s32 %v1718, %v1720
        %v1722 = vrot.slane %v1684, %v1721
        %v1724 = vunpack.c.l.s4 1966171168
        %v1725 = vunpack.c.0.s8 %v1724
        %v1726 = vlaneseq
        %v1727 = vshrl.u32 %v1726, 7
        %v1728 = vsub.s32 %v1725, %v1727
        %v1729 = vrot.slane %v1685, %v1728
        %v1731 = vunpack.c.l.s4 1966171168
        %v1732 = vunpack.c.0.s8 %v1731
        %v1733 = vlaneseq
        %v1734 = vshrl.u32 %v1733, 7
        %v1735 = vsub.s32 %v1732, %v1734
        %v1736 = vrot.slane %v1686, %v1735
        %v1738 = vunpack.c.l.s4 1966171168
        %v1739 = vunpack.c.0.s8 %v1738
        %v1740 = vlaneseq
        %v1741 = vshrl.u32 %v1740, 7
        %v1742 = vsub.s32 %v1739, %v1741
        %v1743 = vrot.slane %v1687, %v1742
        %v1744 = vcombine.low %v1694, %v1708
        %v1745 = vcombine.high %v1694, %v1708
        %v1746 = vcombine.low %v1701, %v1715
        %v1747 = vcombine.high %v1701, %v1715
        %v1748 = vcombine.low %v1722, %v1736
        %v1749 = vcombine.high %v1722, %v1736
        %v1750 = vcombine.low %v1729, %v1743
        %v1751 = vcombine.high %v1729, %v1743
        %v1753 = vunpack.c.l.s4 1966171168
        %v1754 = vunpack.c.0.s8 %v1753
        %v1755 = vlaneseq
        %v1756 = vshrl.u32 %v1755, 7
        %v1757 = vsub.s32 %v1754, %v1756
        %v1758 = vrot.slane %v1744, %v1757
        %v1760 = vunpack.c.l.s4 1966171168
        %v1761 = vunpack.c.0.s8 %v1760
        %v1762 = vlaneseq
        %v1763 = vshrl.u32 %v1762, 7
        %v1764 = vsub.s32 %v1761, %v1763
        %v1765 = vrot.slane %v1746, %v1764
        %v1767 = vunpack.c.l.s4 1966171168
        %v1768 = vunpack.c.0.s8 %v1767
        %v1769 = vlaneseq
        %v1770 = vshrl.u32 %v1769, 7
        %v1771 = vsub.s32 %v1768, %v1770
        %v1772 = vrot.slane %v1745, %v1771
        %v1774 = vunpack.c.l.s4 1966171168
        %v1775 = vunpack.c.0.s8 %v1774
        %v1776 = vlaneseq
        %v1777 = vshrl.u32 %v1776, 7
        %v1778 = vsub.s32 %v1775, %v1777
        %v1779 = vrot.slane %v1747, %v1778
        %v1781 = vunpack.c.l.s4 1966171168
        %v1782 = vunpack.c.0.s8 %v1781
        %v1783 = vlaneseq
        %v1784 = vshrl.u32 %v1783, 7
        %v1785 = vsub.s32 %v1782, %v1784
        %v1786 = vrot.slane %v1748, %v1785
        %v1788 = vunpack.c.l.s4 1966171168
        %v1789 = vunpack.c.0.s8 %v1788
        %v1790 = vlaneseq
        %v1791 = vshrl.u32 %v1790, 7
        %v1792 = vsub.s32 %v1789, %v1791
        %v1793 = vrot.slane %v1750, %v1792
        %v1795 = vunpack.c.l.s4 1966171168
        %v1796 = vunpack.c.0.s8 %v1795
        %v1797 = vlaneseq
        %v1798 = vshrl.u32 %v1797, 7
        %v1799 = vsub.s32 %v1796, %v1798
        %v1800 = vrot.slane %v1749, %v1799
        %v1802 = vunpack.c.l.s4 1966171168
        %v1803 = vunpack.c.0.s8 %v1802
        %v1804 = vlaneseq
        %v1805 = vshrl.u32 %v1804, 7
        %v1806 = vsub.s32 %v1803, %v1805
        %v1807 = vrot.slane %v1751, %v1806
        %v1808 = vcombine.low %v1758, %v1786
        %v1809 = vcombine.high %v1758, %v1786
        %v1810 = vcombine.low %v1765, %v1793
        %v1811 = vcombine.high %v1765, %v1793
        %v1812 = vcombine.low %v1772, %v1800
        %v1813 = vcombine.high %v1772, %v1800
        %v1814 = vcombine.low %v1779, %v1807
        %v1815 = vcombine.high %v801, %v801
        %v1817 = vunpack.c.l.s4 1966171168
        %v1818 = vunpack.c.0.s8 %v1817
        %v1819 = vlaneseq
        %v1820 = vshrl.u32 %v1819, 7
        %v1821 = vsub.s32 %v1818, %v1820
        %v1822 = vrot.slane %v801, %v1821
        %v1824 = vunpack.c.l.s4 1966171168
        %v1825 = vunpack.c.0.s8 %v1824
        %v1826 = vlaneseq
        %v1827 = vshrl.u32 %v1826, 7
        %v1828 = vsub.s32 %v1825, %v1827
        %v1829 = vrot.slane %v1815, %v1828
        %v1830 = vcombine.high %v1822, %v1822
        %v1831 = vcombine.high %v1829, %v1829
        %v1833 = vunpack.c.l.s4 1966171168
        %v1834 = vunpack.c.0.s8 %v1833
        %v1835 = vlaneseq
        %v1836 = vshrl.u32 %v1835, 7
        %v1837 = vsub.s32 %v1834, %v1836
        %v1838 = vrot.slane %v1822, %v1837
        %v1840 = vunpack.c.l.s4 1966171168
        %v1841 = vunpack.c.0.s8 %v1840
        %v1842 = vlaneseq
        %v1843 = vshrl.u32 %v1842, 7
        %v1844 = vsub.s32 %v1841, %v1843
        %v1845 = vrot.slane %v1829, %v1844
        %v1847 = vunpack.c.l.s4 1966171168
        %v1848 = vunpack.c.0.s8 %v1847
        %v1849 = vlaneseq
        %v1850 = vshrl.u32 %v1849, 7
        %v1851 = vsub.s32 %v1848, %v1850
        %v1852 = vrot.slane %v1830, %v1851
        %v1854 = vunpack.c.l.s4 1966171168
        %v1855 = vunpack.c.0.s8 %v1854
        %v1856 = vlaneseq
        %v1857 = vshrl.u32 %v1856, 7
        %v1858 = vsub.s32 %v1855, %v1857
        %v1859 = vrot.slane %v1831, %v1858
        %v1860 = vcombine.high %v1838, %v1838
        %v1861 = vcombine.high %v1845, %v1845
        %v1862 = vcombine.high %v1852, %v1852
        %v1863 = vcombine.low %v438, %v502
        %v1864 = vcombine.high %v438, %v502
        %v1865 = vcombine.low %v536, %v571
        %v1866 = vcombine.high %v536, %v571
        %v1867 = vcombine.low %v635, %v669
        %v1868 = vcombine.high %v635, %v669
        %v1869 = vcombine.low %v704, %v768
        %v1870 = vcombine.high %v704, %v768
        %v1872 = vunpack.c.l.s4 1966171168
        %v1873 = vunpack.c.0.s8 %v1872
        %v1874 = vlaneseq
        %v1875 = vshrl.u32 %v1874, 7
        %v1876 = vsub.s32 %v1873, %v1875
        %v1877 = vrot.slane %v1863, %v1876
        %v1879 = vunpack.c.l.s4 1966171168
        %v1880 = vunpack.c.0.s8 %v1879
        %v1881 = vlaneseq
        %v1882 = vshrl.u32 %v1881, 7
        %v1883 = vsub.s32 %v1880, %v1882
        %v1884 = vrot.slane %v1864, %v1883
        %v1886 = vunpack.c.l.s4 1966171168
        %v1887 = vunpack.c.0.s8 %v1886
        %v1888 = vlaneseq
        %v1889 = vshrl.u32 %v1888, 7
        %v1890 = vsub.s32 %v1887, %v1889
        %v1891 = vrot.slane %v1865, %v1890
        %v1893 = vunpack.c.l.s4 1966171168
        %v1894 = vunpack.c.0.s8 %v1893
        %v1895 = vlaneseq
        %v1896 = vshrl.u32 %v1895, 7
        %v1897 = vsub.s32 %v1894, %v1896
        %v1898 = vrot.slane %v1866, %v1897
        %v1900 = vunpack.c.l.s4 1966171168
        %v1901 = vunpack.c.0.s8 %v1900
        %v1902 = vlaneseq
        %v1903 = vshrl.u32 %v1902, 7
        %v1904 = vsub.s32 %v1901, %v1903
        %v1905 = vrot.slane %v1867, %v1904
        %v1907 = vunpack.c.l.s4 1966171168
        %v1908 = vunpack.c.0.s8 %v1907
        %v1909 = vlaneseq
        %v1910 = vshrl.u32 %v1909, 7
        %v1911 = vsub.s32 %v1908, %v1910
        %v1912 = vrot.slane %v1868, %v1911
        %v1914 = vunpack.c.l.s4 1966171168
        %v1915 = vunpack.c.0.s8 %v1914
        %v1916 = vlaneseq
        %v1917 = vshrl.u32 %v1916, 7
        %v1918 = vsub.s32 %v1915, %v1917
        %v1919 = vrot.slane %v1869, %v1918
        %v1921 = vunpack.c.l.s4 1966171168
        %v1922 = vunpack.c.0.s8 %v1921
        %v1923 = vlaneseq
        %v1924 = vshrl.u32 %v1923, 7
        %v1925 = vsub.s32 %v1922, %v1924
        %v1926 = vrot.slane %v1870, %v1925
        %v1927 = vcombine.low %v1877, %v1891
        %v1928 = vcombine.high %v1877, %v1891
        %v1929 = vcombine.low %v1884, %v1898
        %v1930 = vcombine.high %v1884, %v1898
        %v1931 = vcombine.low %v1905, %v1919
        %v1932 = vcombine.high %v1905, %v1919
        %v1933 = vcombine.low %v1912, %v1926
        %v1934 = vcombine.high %v1912, %v1926
        %v1936 = vunpack.c.l.s4 1966171168
        %v1937 = vunpack.c.0.s8 %v1936
        %v1938 = vlaneseq
        %v1939 = vshrl.u32 %v1938, 7
        %v1940 = vsub.s32 %v1937, %v1939
        %v1941 = vrot.slane %v1927, %v1940
        %v1943 = vunpack.c.l.s4 1966171168
        %v1944 = vunpack.c.0.s8 %v1943
        %v1945 = vlaneseq
        %v1946 = vshrl.u32 %v1945, 7
        %v1947 = vsub.s32 %v1944, %v1946
        %v1948 = vrot.slane %v1929, %v1947
        %v1950 = vunpack.c.l.s4 1966171168
        %v1951 = vunpack.c.0.s8 %v1950
        %v1952 = vlaneseq
        %v1953 = vshrl.u32 %v1952, 7
        %v1954 = vsub.s32 %v1951, %v1953
        %v1955 = vrot.slane %v1928, %v1954
        %v1957 = vunpack.c.l.s4 1966171168
        %v1958 = vunpack.c.0.s8 %v1957
        %v1959 = vlaneseq
        %v1960 = vshrl.u32 %v1959, 7
        %v1961 = vsub.s32 %v1958, %v1960
        %v1962 = vrot.slane %v1930, %v1961
        %v1964 = vunpack.c.l.s4 1966171168
        %v1965 = vunpack.c.0.s8 %v1964
        %v1966 = vlaneseq
        %v1967 = vshrl.u32 %v1966, 7
        %v1968 = vsub.s32 %v1965, %v1967
        %v1969 = vrot.slane %v1931, %v1968
        %v1971 = vunpack.c.l.s4 1966171168
        %v1972 = vunpack.c.0.s8 %v1971
        %v1973 = vlaneseq
        %v1974 = vshrl.u32 %v1973, 7
        %v1975 = vsub.s32 %v1972, %v1974
        %v1976 = vrot.slane %v1933, %v1975
        %v1978 = vunpack.c.l.s4 1966171168
        %v1979 = vunpack.c.0.s8 %v1978
        %v1980 = vlaneseq
        %v1981 = vshrl.u32 %v1980, 7
        %v1982 = vsub.s32 %v1979, %v1981
        %v1983 = vrot.slane %v1932, %v1982
        %v1985 = vunpack.c.l.s4 1966171168
        %v1986 = vunpack.c.0.s8 %v1985
        %v1987 = vlaneseq
        %v1988 = vshrl.u32 %v1987, 7
        %v1989 = vsub.s32 %v1986, %v1988
        %v1990 = vrot.slane %v1934, %v1989
        %v1991 = vcombine.low %v1941, %v1969
        %v1992 = vcombine.high %v1941, %v1969
        %v1993 = vcombine.low %v1948, %v1976
        %v1994 = vcombine.high %v1948, %v1976
        %v1995 = vcombine.low %v1955, %v1983
        %v1996 = vcombine.high %v1955, %v1983
        %v1997 = vcombine.low %v1962, %v1990
        %v1998 = vcombine.high %v802, %v802
        %v2000 = vunpack.c.l.s4 1966171168
        %v2001 = vunpack.c.0.s8 %v2000
        %v2002 = vlaneseq
        %v2003 = vshrl.u32 %v2002, 7
        %v2004 = vsub.s32 %v2001, %v2003
        %v2005 = vrot.slane %v802, %v2004
        %v2007 = vunpack.c.l.s4 1966171168
        %v2008 = vunpack.c.0.s8 %v2007
        %v2009 = vlaneseq
        %v2010 = vshrl.u32 %v2009, 7
        %v2011 = vsub.s32 %v2008, %v2010
        %v2012 = vrot.slane %v1998, %v2011
        %v2013 = vcombine.high %v2005, %v2005
        %v2014 = vcombine.high %v2012, %v2012
        %v2016 = vunpack.c.l.s4 1966171168
        %v2017 = vunpack.c.0.s8 %v2016
        %v2018 = vlaneseq
        %v2019 = vshrl.u32 %v2018, 7
        %v2020 = vsub.s32 %v2017, %v2019
        %v2021 = vrot.slane %v2005, %v2020
        %v2023 = vunpack.c.l.s4 1966171168
        %v2024 = vunpack.c.0.s8 %v2023
        %v2025 = vlaneseq
        %v2026 = vshrl.u32 %v2025, 7
        %v2027 = vsub.s32 %v2024, %v2026
        %v2028 = vrot.slane %v2012, %v2027
        %v2030 = vunpack.c.l.s4 1966171168
        %v2031 = vunpack.c.0.s8 %v2030
        %v2032 = vlaneseq
        %v2033 = vshrl.u32 %v2032, 7
        %v2034 = vsub.s32 %v2031, %v2033
        %v2035 = vrot.slane %v2013, %v2034
        %v2037 = vunpack.c.l.s4 1966171168
        %v2038 = vunpack.c.0.s8 %v2037
        %v2039 = vlaneseq
        %v2040 = vshrl.u32 %v2039, 7
        %v2041 = vsub.s32 %v2038, %v2040
        %v2042 = vrot.slane %v2014, %v2041
        %v2043 = vcombine.high %v2021, %v2021
        %v2044 = vcombine.high %v2028, %v2028
        %v2045 = vcombine.high %v2035, %v2035
        %v2046 = vcombine.low %v439, %v509
        %v2047 = vcombine.high %v439, %v509
        %v2048 = vcombine.low %v537, %v572
        %v2049 = vcombine.high %v537, %v572
        %v2050 = vcombine.low %v642, %v670
        %v2051 = vcombine.high %v642, %v670
        %v2052 = vcombine.low %v705, %v775
        %v2053 = vcombine.high %v705, %v775
        %v2055 = vunpack.c.l.s4 1966171168
        %v2056 = vunpack.c.0.s8 %v2055
        %v2057 = vlaneseq
        %v2058 = vshrl.u32 %v2057, 7
        %v2059 = vsub.s32 %v2056, %v2058
        %v2060 = vrot.slane %v2046, %v2059
        %v2062 = vunpack.c.l.s4 1966171168
        %v2063 = vunpack.c.0.s8 %v2062
        %v2064 = vlaneseq
        %v2065 = vshrl.u32 %v2064, 7
        %v2066 = vsub.s32 %v2063, %v2065
        %v2067 = vrot.slane %v2047, %v2066
        %v2069 = vunpack.c.l.s4 1966171168
        %v2070 = vunpack.c.0.s8 %v2069
        %v2071 = vlaneseq
        %v2072 = vshrl.u32 %v2071, 7
        %v2073 = vsub.s32 %v2070, %v2072
        %v2074 = vrot.slane %v2048, %v2073
        %v2076 = vunpack.c.l.s4 1966171168
        %v2077 = vunpack.c.0.s8 %v2076
        %v2078 = vlaneseq
        %v2079 = vshrl.u32 %v2078, 7
        %v2080 = vsub.s32 %v2077, %v2079
        %v2081 = vrot.slane %v2049, %v2080
        %v2083 = vunpack.c.l.s4 1966171168
        %v2084 = vunpack.c.0.s8 %v2083
        %v2085 = vlaneseq
        %v2086 = vshrl.u32 %v2085, 7
        %v2087 = vsub.s32 %v2084, %v2086
        %v2088 = vrot.slane %v2050, %v2087
        %v2090 = vunpack.c.l.s4 1966171168
        %v2091 = vunpack.c.0.s8 %v2090
        %v2092 = vlaneseq
        %v2093 = vshrl.u32 %v2092, 7
        %v2094 = vsub.s32 %v2091, %v2093
        %v2095 = vrot.slane %v2051, %v2094
        %v2097 = vunpack.c.l.s4 1966171168
        %v2098 = vunpack.c.0.s8 %v2097
        %v2099 = vlaneseq
        %v2100 = vshrl.u32 %v2099, 7
        %v2101 = vsub.s32 %v2098, %v2100
        %v2102 = vrot.slane %v2052, %v2101
        %v2104 = vunpack.c.l.s4 1966171168
        %v2105 = vunpack.c.0.s8 %v2104
        %v2106 = vlaneseq
        %v2107 = vshrl.u32 %v2106, 7
        %v2108 = vsub.s32 %v2105, %v2107
        %v2109 = vrot.slane %v2053, %v2108
        %v2110 = vcombine.low %v2060, %v2074
        %v2111 = vcombine.high %v2060, %v2074
        %v2112 = vcombine.low %v2067, %v2081
        %v2113 = vcombine.high %v2067, %v2081
        %v2114 = vcombine.low %v2088, %v2102
        %v2115 = vcombine.high %v2088, %v2102
        %v2116 = vcombine.low %v2095, %v2109
        %v2117 = vcombine.high %v2095, %v2109
        %v2119 = vunpack.c.l.s4 1966171168
        %v2120 = vunpack.c.0.s8 %v2119
        %v2121 = vlaneseq
        %v2122 = vshrl.u32 %v2121, 7
        %v2123 = vsub.s32 %v2120, %v2122
        %v2124 = vrot.slane %v2110, %v2123
        %v2126 = vunpack.c.l.s4 1966171168
        %v2127 = vunpack.c.0.s8 %v2126
        %v2128 = vlaneseq
        %v2129 = vshrl.u32 %v2128, 7
        %v2130 = vsub.s32 %v2127, %v2129
        %v2131 = vrot.slane %v2112, %v2130
        %v2133 = vunpack.c.l.s4 1966171168
        %v2134 = vunpack.c.0.s8 %v2133
        %v2135 = vlaneseq
        %v2136 = vshrl.u32 %v2135, 7
        %v2137 = vsub.s32 %v2134, %v2136
        %v2138 = vrot.slane %v2111, %v2137
        %v2140 = vunpack.c.l.s4 1966171168
        %v2141 = vunpack.c.0.s8 %v2140
        %v2142 = vlaneseq
        %v2143 = vshrl.u32 %v2142, 7
        %v2144 = vsub.s32 %v2141, %v2143
        %v2145 = vrot.slane %v2113, %v2144
        %v2147 = vunpack.c.l.s4 1966171168
        %v2148 = vunpack.c.0.s8 %v2147
        %v2149 = vlaneseq
        %v2150 = vshrl.u32 %v2149, 7
        %v2151 = vsub.s32 %v2148, %v2150
        %v2152 = vrot.slane %v2114, %v2151
        %v2154 = vunpack.c.l.s4 1966171168
        %v2155 = vunpack.c.0.s8 %v2154
        %v2156 = vlaneseq
        %v2157 = vshrl.u32 %v2156, 7
        %v2158 = vsub.s32 %v2155, %v2157
        %v2159 = vrot.slane %v2116, %v2158
        %v2161 = vunpack.c.l.s4 1966171168
        %v2162 = vunpack.c.0.s8 %v2161
        %v2163 = vlaneseq
        %v2164 = vshrl.u32 %v2163, 7
        %v2165 = vsub.s32 %v2162, %v2164
        %v2166 = vrot.slane %v2115, %v2165
        %v2168 = vunpack.c.l.s4 1966171168
        %v2169 = vunpack.c.0.s8 %v2168
        %v2170 = vlaneseq
        %v2171 = vshrl.u32 %v2170, 7
        %v2172 = vsub.s32 %v2169, %v2171
        %v2173 = vrot.slane %v2117, %v2172
        %v2174 = vcombine.low %v2124, %v2152
        %v2175 = vcombine.high %v2124, %v2152
        %v2176 = vcombine.low %v2131, %v2159
        %v2177 = vcombine.high %v2131, %v2159
        %v2178 = vcombine.low %v2138, %v2166
        %v2179 = vcombine.high %v2138, %v2166
        %v2180 = vcombine.low %v2145, %v2173
        %v2181 = vcombine.high %v803, %v803
        %v2183 = vunpack.c.l.s4 1966171168
        %v2184 = vunpack.c.0.s8 %v2183
        %v2185 = vlaneseq
        %v2186 = vshrl.u32 %v2185, 7
        %v2187 = vsub.s32 %v2184, %v2186
        %v2188 = vrot.slane %v803, %v2187
        %v2190 = vunpack.c.l.s4 1966171168
        %v2191 = vunpack.c.0.s8 %v2190
        %v2192 = vlaneseq
        %v2193 = vshrl.u32 %v2192, 7
        %v2194 = vsub.s32 %v2191, %v2193
        %v2195 = vrot.slane %v2181, %v2194
        %v2196 = vcombine.high %v2188, %v2188
        %v2197 = vcombine.high %v2195, %v2195
        %v2199 = vunpack.c.l.s4 1966171168
        %v2200 = vunpack.c.0.s8 %v2199
        %v2201 = vlaneseq
        %v2202 = vshrl.u32 %v2201, 7
        %v2203 = vsub.s32 %v2200, %v2202
        %v2204 = vrot.slane %v2188, %v2203
        %v2206 = vunpack.c.l.s4 1966171168
        %v2207 = vunpack.c.0.s8 %v2206
        %v2208 = vlaneseq
        %v2209 = vshrl.u32 %v2208, 7
        %v2210 = vsub.s32 %v2207, %v2209
        %v2211 = vrot.slane %v2195, %v2210
        %v2213 = vunpack.c.l.s4 1966171168
        %v2214 = vunpack.c.0.s8 %v2213
        %v2215 = vlaneseq
        %v2216 = vshrl.u32 %v2215, 7
        %v2217 = vsub.s32 %v2214, %v2216
        %v2218 = vrot.slane %v2196, %v2217
        %v2220 = vunpack.c.l.s4 1966171168
        %v2221 = vunpack.c.0.s8 %v2220
        %v2222 = vlaneseq
        %v2223 = vshrl.u32 %v2222, 7
        %v2224 = vsub.s32 %v2221, %v2223
        %v2225 = vrot.slane %v2197, %v2224
        %v2226 = vcombine.high %v2204, %v2204
        %v2227 = vcombine.high %v2211, %v2211
        %v2228 = vcombine.high %v2218, %v2218
        %v2229 = vcombine.low %v1076, %v1080
        %v2230 = vcombine.high %v1076, %v1080
        %v2231 = vcombine.low %v1077, %v1081
        %v2232 = vcombine.high %v1077, %v1081
        %v2233 = vcombine.low %v1078, %v1082
        %v2234 = vcombine.high %v1078, %v1082
        %v2235 = vcombine.low %v1079, %v1259
        %v2236 = vcombine.high %v1079, %v1259
        %v2238 = vunpack.c.l.s4 1966171168
        %v2239 = vunpack.c.0.s8 %v2238
        %v2240 = vlaneseq
        %v2241 = vshrl.u32 %v2240, 7
        %v2242 = vsub.s32 %v2239, %v2241
        %v2243 = vrot.slane %v2229, %v2242
        %v2245 = vunpack.c.l.s4 1966171168
        %v2246 = vunpack.c.0.s8 %v2245
        %v2247 = vlaneseq
        %v2248 = vshrl.u32 %v2247, 7
        %v2249 = vsub.s32 %v2246, %v2248
        %v2250 = vrot.slane %v2230, %v2249
        %v2252 = vunpack.c.l.s4 1966171168
        %v2253 = vunpack.c.0.s8 %v2252
        %v2254 = vlaneseq
        %v2255 = vshrl.u32 %v2254, 7
        %v2256 = vsub.s32 %v2253, %v2255
        %v2257 = vrot.slane %v2231, %v2256
        %v2259 = vunpack.c.l.s4 1966171168
        %v2260 = vunpack.c.0.s8 %v2259
        %v2261 = vlaneseq
        %v2262 = vshrl.u32 %v2261, 7
        %v2263 = vsub.s32 %v2260, %v2262
        %v2264 = vrot.slane %v2232, %v2263
        %v2266 = vunpack.c.l.s4 1966171168
        %v2267 = vunpack.c.0.s8 %v2266
        %v2268 = vlaneseq
        %v2269 = vshrl.u32 %v2268, 7
        %v2270 = vsub.s32 %v2267, %v2269
        %v2271 = vrot.slane %v2233, %v2270
        %v2273 = vunpack.c.l.s4 1966171168
        %v2274 = vunpack.c.0.s8 %v2273
        %v2275 = vlaneseq
        %v2276 = vshrl.u32 %v2275, 7
        %v2277 = vsub.s32 %v2274, %v2276
        %v2278 = vrot.slane %v2234, %v2277
        %v2280 = vunpack.c.l.s4 1966171168
        %v2281 = vunpack.c.0.s8 %v2280
        %v2282 = vlaneseq
        %v2283 = vshrl.u32 %v2282, 7
        %v2284 = vsub.s32 %v2281, %v2283
        %v2285 = vrot.slane %v2235, %v2284
        %v2287 = vunpack.c.l.s4 1966171168
        %v2288 = vunpack.c.0.s8 %v2287
        %v2289 = vlaneseq
        %v2290 = vshrl.u32 %v2289, 7
        %v2291 = vsub.s32 %v2288, %v2290
        %v2292 = vrot.slane %v2236, %v2291
        %v2293 = vcombine.low %v2243, %v2257
        %v2294 = vcombine.high %v2243, %v2257
        %v2295 = vcombine.low %v2250, %v2264
        %v2296 = vcombine.high %v2250, %v2264
        %v2297 = vcombine.low %v2271, %v2285
        %v2298 = vcombine.high %v2271, %v2285
        %v2299 = vcombine.low %v2278, %v2292
        %v2300 = vcombine.high %v2278, %v2292
        %v2302 = vunpack.c.l.s4 1966171168
        %v2303 = vunpack.c.0.s8 %v2302
        %v2304 = vlaneseq
        %v2305 = vshrl.u32 %v2304, 7
        %v2306 = vsub.s32 %v2303, %v2305
        %v2307 = vrot.slane %v2293, %v2306
        %v2309 = vunpack.c.l.s4 1966171168
        %v2310 = vunpack.c.0.s8 %v2309
        %v2311 = vlaneseq
        %v2312 = vshrl.u32 %v2311, 7
        %v2313 = vsub.s32 %v2310, %v2312
        %v2314 = vrot.slane %v2295, %v2313
        %v2316 = vunpack.c.l.s4 1966171168
        %v2317 = vunpack.c.0.s8 %v2316
        %v2318 = vlaneseq
        %v2319 = vshrl.u32 %v2318, 7
        %v2320 = vsub.s32 %v2317, %v2319
        %v2321 = vrot.slane %v2294, %v2320
        %v2323 = vunpack.c.l.s4 1966171168
        %v2324 = vunpack.c.0.s8 %v2323
        %v2325 = vlaneseq
        %v2326 = vshrl.u32 %v2325, 7
        %v2327 = vsub.s32 %v2324, %v2326
        %v2328 = vrot.slane %v2296, %v2327
        %v2330 = vunpack.c.l.s4 1966171168
        %v2331 = vunpack.c.0.s8 %v2330
        %v2332 = vlaneseq
        %v2333 = vshrl.u32 %v2332, 7
        %v2334 = vsub.s32 %v2331, %v2333
        %v2335 = vrot.slane %v2297, %v2334
        %v2337 = vunpack.c.l.s4 1966171168
        %v2338 = vunpack.c.0.s8 %v2337
        %v2339 = vlaneseq
        %v2340 = vshrl.u32 %v2339, 7
        %v2341 = vsub.s32 %v2338, %v2340
        %v2342 = vrot.slane %v2299, %v2341
        %v2344 = vunpack.c.l.s4 1966171168
        %v2345 = vunpack.c.0.s8 %v2344
        %v2346 = vlaneseq
        %v2347 = vshrl.u32 %v2346, 7
        %v2348 = vsub.s32 %v2345, %v2347
        %v2349 = vrot.slane %v2298, %v2348
        %v2351 = vunpack.c.l.s4 1966171168
        %v2352 = vunpack.c.0.s8 %v2351
        %v2353 = vlaneseq
        %v2354 = vshrl.u32 %v2353, 7
        %v2355 = vsub.s32 %v2352, %v2354
        %v2356 = vrot.slane %v2300, %v2355
        %v2357 = vcombine.low %v2307, %v2335
        %v2358 = vcombine.high %v2307, %v2335
        %v2359 = vcombine.low %v2314, %v2342
        %v2360 = vcombine.high %v2314, %v2342
        %v2361 = vcombine.low %v2321, %v2349
        %v2362 = vcombine.high %v2321, %v2349
        %v2363 = vcombine.low %v2328, %v2356
        %v2364 = vcombine.high %v2328, %v2356
        %v2365 = vcombine.low %v1106, %v1120
        %v2366 = vcombine.low %v1128, %v1130
        %v2367 = vcombine.low %v1113, %v1127
        %v2368 = vcombine.low %v1129, %v1289
        %v2370 = vunpack.c.l.s4 1966171168
        %v2371 = vunpack.c.0.s8 %v2370
        %v2372 = vlaneseq
        %v2373 = vshrl.u32 %v2372, 7
        %v2374 = vsub.s32 %v2371, %v2373
        %v2375 = vrot.slane %v2365, %v2374
        %v2377 = vunpack.c.l.s4 1966171168
        %v2378 = vunpack.c.0.s8 %v2377
        %v2379 = vlaneseq
        %v2380 = vshrl.u32 %v2379, 7
        %v2381 = vsub.s32 %v2378, %v2380
        %v2382 = vrot.slane %v2366, %v2381
        %v2384 = vunpack.c.l.s4 1966171168
        %v2385 = vunpack.c.0.s8 %v2384
        %v2386 = vlaneseq
        %v2387 = vshrl.u32 %v2386, 7
        %v2388 = vsub.s32 %v2385, %v2387
        %v2389 = vrot.slane %v2367, %v2388
        %v2391 = vunpack.c.l.s4 1966171168
        %v2392 = vunpack.c.0.s8 %v2391
        %v2393 = vlaneseq
        %v2394 = vshrl.u32 %v2393, 7
        %v2395 = vsub.s32 %v2392, %v2394
        %v2396 = vrot.slane %v2368, %v2395
        %v2397 = vcombine.low %v2375, %v2382
        %v2398 = vcombine.low %v2389, %v2396
        %v2400 = vunpack.c.l.s4 1966171168
        %v2401 = vunpack.c.0.s8 %v2400
        %v2402 = vlaneseq
        %v2403 = vshrl.u32 %v2402, 7
        %v2404 = vsub.s32 %v2401, %v2403
        %v2405 = vrot.slane %v2397, %v2404
        %v2407 = vunpack.c.l.s4 1966171168
        %v2408 = vunpack.c.0.s8 %v2407
        %v2409 = vlaneseq
        %v2410 = vshrl.u32 %v2409, 7
        %v2411 = vsub.s32 %v2408, %v2410
        %v2412 = vrot.slane %v2398, %v2411
        %v2413 = vcombine.low %v2405, %v2412
        %v2414 = vcombine.low %v1263, %v1260
        %v2415 = vcombine.high %v1263, %v1260
        %v2416 = vcombine.low %v1264, %v1261
        %v2417 = vcombine.high %v1264, %v1261
        %v2418 = vcombine.low %v1265, %v1262
        %v2419 = vcombine.high %v1265, %v1262
        %v2420 = vcombine.low %v1442, %v1446
        %v2421 = vcombine.high %v1442, %v1446
        %v2423 = vunpack.c.l.s4 1966171168
        %v2424 = vunpack.c.0.s8 %v2423
        %v2425 = vlaneseq
        %v2426 = vshrl.u32 %v2425, 7
        %v2427 = vsub.s32 %v2424, %v2426
        %v2428 = vrot.slane %v2414, %v2427
        %v2430 = vunpack.c.l.s4 1966171168
        %v2431 = vunpack.c.0.s8 %v2430
        %v2432 = vlaneseq
        %v2433 = vshrl.u32 %v2432, 7
        %v2434 = vsub.s32 %v2431, %v2433
        %v2435 = vrot.slane %v2415, %v2434
        %v2437 = vunpack.c.l.s4 1966171168
        %v2438 = vunpack.c.0.s8 %v2437
        %v2439 = vlaneseq
        %v2440 = vshrl.u32 %v2439, 7
        %v2441 = vsub.s32 %v2438, %v2440
        %v2442 = vrot.slane %v2416, %v2441
        %v2444 = vunpack.c.l.s4 1966171168
        %v2445 = vunpack.c.0.s8 %v2444
        %v2446 = vlaneseq
        %v2447 = vshrl.u32 %v2446, 7
        %v2448 = vsub.s32 %v2445, %v2447
        %v2449 = vrot.slane %v2417, %v2448
        %v2451 = vunpack.c.l.s4 1966171168
        %v2452 = vunpack.c.0.s8 %v2451
        %v2453 = vlaneseq
        %v2454 = vshrl.u32 %v2453, 7
        %v2455 = vsub.s32 %v2452, %v2454
        %v2456 = vrot.slane %v2418, %v2455
        %v2458 = vunpack.c.l.s4 1966171168
        %v2459 = vunpack.c.0.s8 %v2458
        %v2460 = vlaneseq
        %v2461 = vshrl.u32 %v2460, 7
        %v2462 = vsub.s32 %v2459, %v2461
        %v2463 = vrot.slane %v2419, %v2462
        %v2465 = vunpack.c.l.s4 1966171168
        %v2466 = vunpack.c.0.s8 %v2465
        %v2467 = vlaneseq
        %v2468 = vshrl.u32 %v2467, 7
        %v2469 = vsub.s32 %v2466, %v2468
        %v2470 = vrot.slane %v2420, %v2469
        %v2472 = vunpack.c.l.s4 1966171168
        %v2473 = vunpack.c.0.s8 %v2472
        %v2474 = vlaneseq
        %v2475 = vshrl.u32 %v2474, 7
        %v2476 = vsub.s32 %v2473, %v2475
        %v2477 = vrot.slane %v2421, %v2476
        %v2478 = vcombine.low %v2428, %v2442
        %v2479 = vcombine.high %v2428, %v2442
        %v2480 = vcombine.low %v2435, %v2449
        %v2481 = vcombine.high %v2435, %v2449
        %v2482 = vcombine.low %v2456, %v2470
        %v2483 = vcombine.high %v2456, %v2470
        %v2484 = vcombine.low %v2463, %v2477
        %v2485 = vcombine.high %v2463, %v2477
        %v2487 = vunpack.c.l.s4 1966171168
        %v2488 = vunpack.c.0.s8 %v2487
        %v2489 = vlaneseq
        %v2490 = vshrl.u32 %v2489, 7
        %v2491 = vsub.s32 %v2488, %v2490
        %v2492 = vrot.slane %v2478, %v2491
        %v2494 = vunpack.c.l.s4 1966171168
        %v2495 = vunpack.c.0.s8 %v2494
        %v2496 = vlaneseq
        %v2497 = vshrl.u32 %v2496, 7
        %v2498 = vsub.s32 %v2495, %v2497
        %v2499 = vrot.slane %v2480, %v2498
        %v2501 = vunpack.c.l.s4 1966171168
        %v2502 = vunpack.c.0.s8 %v2501
        %v2503 = vlaneseq
        %v2504 = vshrl.u32 %v2503, 7
        %v2505 = vsub.s32 %v2502, %v2504
        %v2506 = vrot.slane %v2479, %v2505
        %v2508 = vunpack.c.l.s4 1966171168
        %v2509 = vunpack.c.0.s8 %v2508
        %v2510 = vlaneseq
        %v2511 = vshrl.u32 %v2510, 7
        %v2512 = vsub.s32 %v2509, %v2511
        %v2513 = vrot.slane %v2481, %v2512
        %v2515 = vunpack.c.l.s4 1966171168
        %v2516 = vunpack.c.0.s8 %v2515
        %v2517 = vlaneseq
        %v2518 = vshrl.u32 %v2517, 7
        %v2519 = vsub.s32 %v2516, %v2518
        %v2520 = vrot.slane %v2482, %v2519
        %v2522 = vunpack.c.l.s4 1966171168
        %v2523 = vunpack.c.0.s8 %v2522
        %v2524 = vlaneseq
        %v2525 = vshrl.u32 %v2524, 7
        %v2526 = vsub.s32 %v2523, %v2525
        %v2527 = vrot.slane %v2484, %v2526
        %v2529 = vunpack.c.l.s4 1966171168
        %v2530 = vunpack.c.0.s8 %v2529
        %v2531 = vlaneseq
        %v2532 = vshrl.u32 %v2531, 7
        %v2533 = vsub.s32 %v2530, %v2532
        %v2534 = vrot.slane %v2483, %v2533
        %v2536 = vunpack.c.l.s4 1966171168
        %v2537 = vunpack.c.0.s8 %v2536
        %v2538 = vlaneseq
        %v2539 = vshrl.u32 %v2538, 7
        %v2540 = vsub.s32 %v2537, %v2539
        %v2541 = vrot.slane %v2485, %v2540
        %v2542 = vcombine.low %v2492, %v2520
        %v2543 = vcombine.high %v2492, %v2520
        %v2544 = vcombine.low %v2499, %v2527
        %v2545 = vcombine.high %v2499, %v2527
        %v2546 = vcombine.low %v2506, %v2534
        %v2547 = vcombine.high %v2506, %v2534
        %v2548 = vcombine.low %v2513, %v2541
        %v2549 = vcombine.high %v2513, %v2541
        %v2550 = vcombine.low %v1303, %v1311
        %v2551 = vcombine.low %v1313, %v1296
        %v2552 = vcombine.low %v1310, %v1312
        %v2553 = vcombine.low %v1472, %v1486
        %v2555 = vunpack.c.l.s4 1966171168
        %v2556 = vunpack.c.0.s8 %v2555
        %v2557 = vlaneseq
        %v2558 = vshrl.u32 %v2557, 7
        %v2559 = vsub.s32 %v2556, %v2558
        %v2560 = vrot.slane %v2550, %v2559
        %v2562 = vunpack.c.l.s4 1966171168
        %v2563 = vunpack.c.0.s8 %v2562
        %v2564 = vlaneseq
        %v2565 = vshrl.u32 %v2564, 7
        %v2566 = vsub.s32 %v2563, %v2565
        %v2567 = vrot.slane %v2551, %v2566
        %v2569 = vunpack.c.l.s4 1966171168
        %v2570 = vunpack.c.0.s8 %v2569
        %v2571 = vlaneseq
        %v2572 = vshrl.u32 %v2571, 7
        %v2573 = vsub.s32 %v2570, %v2572
        %v2574 = vrot.slane %v2552, %v2573
        %v2576 = vunpack.c.l.s4 1966171168
        %v2577 = vunpack.c.0.s8 %v2576
        %v2578 = vlaneseq
        %v2579 = vshrl.u32 %v2578, 7
        %v2580 = vsub.s32 %v2577, %v2579
        %v2581 = vrot.slane %v2553, %v2580
        %v2582 = vcombine.low %v2560, %v2567
        %v2583 = vcombine.low %v2574, %v2581
        %v2585 = vunpack.c.l.s4 1966171168
        %v2586 = vunpack.c.0.s8 %v2585
        %v2587 = vlaneseq
        %v2588 = vshrl.u32 %v2587, 7
        %v2589 = vsub.s32 %v2586, %v2588
        %v2590 = vrot.slane %v2582, %v2589
        %v2592 = vunpack.c.l.s4 1966171168
        %v2593 = vunpack.c.0.s8 %v2592
        %v2594 = vlaneseq
        %v2595 = vshrl.u32 %v2594, 7
        %v2596 = vsub.s32 %v2593, %v2595
        %v2597 = vrot.slane %v2583, %v2596
        %v2598 = vcombine.low %v2590, %v2597
        %v2599 = vcombine.low %v1443, %v1447
        %v2600 = vcombine.high %v1443, %v1447
        %v2601 = vcombine.low %v1444, %v1448
        %v2602 = vcombine.high %v1444, %v1448
        %v2603 = vcombine.low %v1445, %v1625
        %v2604 = vcombine.high %v1445, %v1625
        %v2605 = vcombine.low %v1629, %v1626
        %v2606 = vcombine.high %v1629, %v1626
        %v2608 = vunpack.c.l.s4 1966171168
        %v2609 = vunpack.c.0.s8 %v2608
        %v2610 = vlaneseq
        %v2611 = vshrl.u32 %v2610, 7
        %v2612 = vsub.s32 %v2609, %v2611
        %v2613 = vrot.slane %v2599, %v2612
        %v2615 = vunpack.c.l.s4 1966171168
        %v2616 = vunpack.c.0.s8 %v2615
        %v2617 = vlaneseq
        %v2618 = vshrl.u32 %v2617, 7
        %v2619 = vsub.s32 %v2616, %v2618
        %v2620 = vrot.slane %v2600, %v2619
        %v2622 = vunpack.c.l.s4 1966171168
        %v2623 = vunpack.c.0.s8 %v2622
        %v2624 = vlaneseq
        %v2625 = vshrl.u32 %v2624, 7
        %v2626 = vsub.s32 %v2623, %v2625
        %v2627 = vrot.slane %v2601, %v2626
        %v2629 = vunpack.c.l.s4 1966171168
        %v2630 = vunpack.c.0.s8 %v2629
        %v2631 = vlaneseq
        %v2632 = vshrl.u32 %v2631, 7
        %v2633 = vsub.s32 %v2630, %v2632
        %v2634 = vrot.slane %v2602, %v2633
        %v2636 = vunpack.c.l.s4 1966171168
        %v2637 = vunpack.c.0.s8 %v2636
        %v2638 = vlaneseq
        %v2639 = vshrl.u32 %v2638, 7
        %v2640 = vsub.s32 %v2637, %v2639
        %v2641 = vrot.slane %v2603, %v2640
        %v2643 = vunpack.c.l.s4 1966171168
        %v2644 = vunpack.c.0.s8 %v2643
        %v2645 = vlaneseq
        %v2646 = vshrl.u32 %v2645, 7
        %v2647 = vsub.s32 %v2644, %v2646
        %v2648 = vrot.slane %v2604, %v2647
        %v2650 = vunpack.c.l.s4 1966171168
        %v2651 = vunpack.c.0.s8 %v2650
        %v2652 = vlaneseq
        %v2653 = vshrl.u32 %v2652, 7
        %v2654 = vsub.s32 %v2651, %v2653
        %v2655 = vrot.slane %v2605, %v2654
        %v2657 = vunpack.c.l.s4 1966171168
        %v2658 = vunpack.c.0.s8 %v2657
        %v2659 = vlaneseq
        %v2660 = vshrl.u32 %v2659, 7
        %v2661 = vsub.s32 %v2658, %v2660
        %v2662 = vrot.slane %v2606, %v2661
        %v2663 = vcombine.low %v2613, %v2627
        %v2664 = vcombine.high %v2613, %v2627
        %v2665 = vcombine.low %v2620, %v2634
        %v2666 = vcombine.high %v2620, %v2634
        %v2667 = vcombine.low %v2641, %v2655
        %v2668 = vcombine.high %v2641, %v2655
        %v2669 = vcombine.low %v2648, %v2662
        %v2670 = vcombine.high %v2648, %v2662
        %v2672 = vunpack.c.l.s4 1966171168
        %v2673 = vunpack.c.0.s8 %v2672
        %v2674 = vlaneseq
        %v2675 = vshrl.u32 %v2674, 7
        %v2676 = vsub.s32 %v2673, %v2675
        %v2677 = vrot.slane %v2663, %v2676
        %v2679 = vunpack.c.l.s4 1966171168
        %v2680 = vunpack.c.0.s8 %v2679
        %v2681 = vlaneseq
        %v2682 = vshrl.u32 %v2681, 7
        %v2683 = vsub.s32 %v2680, %v2682
        %v2684 = vrot.slane %v2665, %v2683
        %v2686 = vunpack.c.l.s4 1966171168
        %v2687 = vunpack.c.0.s8 %v2686
        %v2688 = vlaneseq
        %v2689 = vshrl.u32 %v2688, 7
        %v2690 = vsub.s32 %v2687, %v2689
        %v2691 = vrot.slane %v2664, %v2690
        %v2693 = vunpack.c.l.s4 1966171168
        %v2694 = vunpack.c.0.s8 %v2693
        %v2695 = vlaneseq
        %v2696 = vshrl.u32 %v2695, 7
        %v2697 = vsub.s32 %v2694, %v2696
        %v2698 = vrot.slane %v2666, %v2697
        %v2700 = vunpack.c.l.s4 1966171168
        %v2701 = vunpack.c.0.s8 %v2700
        %v2702 = vlaneseq
        %v2703 = vshrl.u32 %v2702, 7
        %v2704 = vsub.s32 %v2701, %v2703
        %v2705 = vrot.slane %v2667, %v2704
        %v2707 = vunpack.c.l.s4 1966171168
        %v2708 = vunpack.c.0.s8 %v2707
        %v2709 = vlaneseq
        %v2710 = vshrl.u32 %v2709, 7
        %v2711 = vsub.s32 %v2708, %v2710
        %v2712 = vrot.slane %v2669, %v2711
        %v2714 = vunpack.c.l.s4 1966171168
        %v2715 = vunpack.c.0.s8 %v2714
        %v2716 = vlaneseq
        %v2717 = vshrl.u32 %v2716, 7
        %v2718 = vsub.s32 %v2715, %v2717
        %v2719 = vrot.slane %v2668, %v2718
        %v2721 = vunpack.c.l.s4 1966171168
        %v2722 = vunpack.c.0.s8 %v2721
        %v2723 = vlaneseq
        %v2724 = vshrl.u32 %v2723, 7
        %v2725 = vsub.s32 %v2722, %v2724
        %v2726 = vrot.slane %v2670, %v2725
        %v2727 = vcombine.low %v2677, %v2705
        %v2728 = vcombine.high %v2677, %v2705
        %v2729 = vcombine.low %v2684, %v2712
        %v2730 = vcombine.high %v2684, %v2712
        %v2731 = vcombine.low %v2691, %v2719
        %v2732 = vcombine.high %v2691, %v2719
        %v2733 = vcombine.low %v2698, %v2726
        %v2734 = vcombine.high %v2698, %v2726
        %v2735 = vcombine.low %v1494, %v1496
        %v2736 = vcombine.low %v1479, %v1493
        %v2737 = vcombine.low %v1495, %v1655
        %v2738 = vcombine.low %v1669, %v1677
        %v2740 = vunpack.c.l.s4 1966171168
        %v2741 = vunpack.c.0.s8 %v2740
        %v2742 = vlaneseq
        %v2743 = vshrl.u32 %v2742, 7
        %v2744 = vsub.s32 %v2741, %v2743
        %v2745 = vrot.slane %v2735, %v2744
        %v2747 = vunpack.c.l.s4 1966171168
        %v2748 = vunpack.c.0.s8 %v2747
        %v2749 = vlaneseq
        %v2750 = vshrl.u32 %v2749, 7
        %v2751 = vsub.s32 %v2748, %v2750
        %v2752 = vrot.slane %v2736, %v2751
        %v2754 = vunpack.c.l.s4 1966171168
        %v2755 = vunpack.c.0.s8 %v2754
        %v2756 = vlaneseq
        %v2757 = vshrl.u32 %v2756, 7
        %v2758 = vsub.s32 %v2755, %v2757
        %v2759 = vrot.slane %v2737, %v2758
        %v2761 = vunpack.c.l.s4 1966171168
        %v2762 = vunpack.c.0.s8 %v2761
        %v2763 = vlaneseq
        %v2764 = vshrl.u32 %v2763, 7
        %v2765 = vsub.s32 %v2762, %v2764
        %v2766 = vrot.slane %v2738, %v2765
        %v2767 = vcombine.low %v2745, %v2752
        %v2768 = vcombine.low %v2759, %v2766
        %v2770 = vunpack.c.l.s4 1966171168
        %v2771 = vunpack.c.0.s8 %v2770
        %v2772 = vlaneseq
        %v2773 = vshrl.u32 %v2772, 7
        %v2774 = vsub.s32 %v2771, %v2773
        %v2775 = vrot.slane %v2767, %v2774
        %v2777 = vunpack.c.l.s4 1966171168
        %v2778 = vunpack.c.0.s8 %v2777
        %v2779 = vlaneseq
        %v2780 = vshrl.u32 %v2779, 7
        %v2781 = vsub.s32 %v2778, %v2780
        %v2782 = vrot.slane %v2768, %v2781
        %v2783 = vcombine.low %v2775, %v2782
        %v2784 = vcombine.low %v1630, %v1627
        %v2785 = vcombine.high %v1630, %v1627
        %v2786 = vcombine.low %v1631, %v1628
        %v2787 = vcombine.high %v1631, %v1628
        %v2788 = vcombine.low %v1808, %v1812
        %v2789 = vcombine.high %v1808, %v1812
        %v2790 = vcombine.low %v1809, %v1813
        %v2791 = vcombine.high %v1809, %v1813
        %v2793 = vunpack.c.l.s4 1966171168
        %v2794 = vunpack.c.0.s8 %v2793
        %v2795 = vlaneseq
        %v2796 = vshrl.u32 %v2795, 7
        %v2797 = vsub.s32 %v2794, %v2796
        %v2798 = vrot.slane %v2784, %v2797
        %v2800 = vunpack.c.l.s4 1966171168
        %v2801 = vunpack.c.0.s8 %v2800
        %v2802 = vlaneseq
        %v2803 = vshrl.u32 %v2802, 7
        %v2804 = vsub.s32 %v2801, %v2803
        %v2805 = vrot.slane %v2785, %v2804
        %v2807 = vunpack.c.l.s4 1966171168
        %v2808 = vunpack.c.0.s8 %v2807
        %v2809 = vlaneseq
        %v2810 = vshrl.u32 %v2809, 7
        %v2811 = vsub.s32 %v2808, %v2810
        %v2812 = vrot.slane %v2786, %v2811
        %v2814 = vunpack.c.l.s4 1966171168
        %v2815 = vunpack.c.0.s8 %v2814
        %v2816 = vlaneseq
        %v2817 = vshrl.u32 %v2816, 7
        %v2818 = vsub.s32 %v2815, %v2817
        %v2819 = vrot.slane %v2787, %v2818
        %v2821 = vunpack.c.l.s4 1966171168
        %v2822 = vunpack.c.0.s8 %v2821
        %v2823 = vlaneseq
        %v2824 = vshrl.u32 %v2823, 7
        %v2825 = vsub.s32 %v2822, %v2824
        %v2826 = vrot.slane %v2788, %v2825
        %v2828 = vunpack.c.l.s4 1966171168
        %v2829 = vunpack.c.0.s8 %v2828
        %v2830 = vlaneseq
        %v2831 = vshrl.u32 %v2830, 7
        %v2832 = vsub.s32 %v2829, %v2831
        %v2833 = vrot.slane %v2789, %v2832
        %v2835 = vunpack.c.l.s4 1966171168
        %v2836 = vunpack.c.0.s8 %v2835
        %v2837 = vlaneseq
        %v2838 = vshrl.u32 %v2837, 7
        %v2839 = vsub.s32 %v2836, %v2838
        %v2840 = vrot.slane %v2790, %v2839
        %v2842 = vunpack.c.l.s4 1966171168
        %v2843 = vunpack.c.0.s8 %v2842
        %v2844 = vlaneseq
        %v2845 = vshrl.u32 %v2844, 7
        %v2846 = vsub.s32 %v2843, %v2845
        %v2847 = vrot.slane %v2791, %v2846
        %v2848 = vcombine.low %v2798, %v2812
        %v2849 = vcombine.high %v2798, %v2812
        %v2850 = vcombine.low %v2805, %v2819
        %v2851 = vcombine.high %v2805, %v2819
        %v2852 = vcombine.low %v2826, %v2840
        %v2853 = vcombine.high %v2826, %v2840
        %v2854 = vcombine.low %v2833, %v2847
        %v2855 = vcombine.high %v2833, %v2847
        %v2857 = vunpack.c.l.s4 1966171168
        %v2858 = vunpack.c.0.s8 %v2857
        %v2859 = vlaneseq
        %v2860 = vshrl.u32 %v2859, 7
        %v2861 = vsub.s32 %v2858, %v2860
        %v2862 = vrot.slane %v2848, %v2861
        %v2864 = vunpack.c.l.s4 1966171168
        %v2865 = vunpack.c.0.s8 %v2864
        %v2866 = vlaneseq
        %v2867 = vshrl.u32 %v2866, 7
        %v2868 = vsub.s32 %v2865, %v2867
        %v2869 = vrot.slane %v2850, %v2868
        %v2871 = vunpack.c.l.s4 1966171168
        %v2872 = vunpack.c.0.s8 %v2871
        %v2873 = vlaneseq
        %v2874 = vshrl.u32 %v2873, 7
        %v2875 = vsub.s32 %v2872, %v2874
        %v2876 = vrot.slane %v2849, %v2875
        %v2878 = vunpack.c.l.s4 1966171168
        %v2879 = vunpack.c.0.s8 %v2878
        %v2880 = vlaneseq
        %v2881 = vshrl.u32 %v2880, 7
        %v2882 = vsub.s32 %v2879, %v2881
        %v2883 = vrot.slane %v2851, %v2882
        %v2885 = vunpack.c.l.s4 1966171168
        %v2886 = vunpack.c.0.s8 %v2885
        %v2887 = vlaneseq
        %v2888 = vshrl.u32 %v2887, 7
        %v2889 = vsub.s32 %v2886, %v2888
        %v2890 = vrot.slane %v2852, %v2889
        %v2892 = vunpack.c.l.s4 1966171168
        %v2893 = vunpack.c.0.s8 %v2892
        %v2894 = vlaneseq
        %v2895 = vshrl.u32 %v2894, 7
        %v2896 = vsub.s32 %v2893, %v2895
        %v2897 = vrot.slane %v2854, %v2896
        %v2899 = vunpack.c.l.s4 1966171168
        %v2900 = vunpack.c.0.s8 %v2899
        %v2901 = vlaneseq
        %v2902 = vshrl.u32 %v2901, 7
        %v2903 = vsub.s32 %v2900, %v2902
        %v2904 = vrot.slane %v2853, %v2903
        %v2906 = vunpack.c.l.s4 1966171168
        %v2907 = vunpack.c.0.s8 %v2906
        %v2908 = vlaneseq
        %v2909 = vshrl.u32 %v2908, 7
        %v2910 = vsub.s32 %v2907, %v2909
        %v2911 = vrot.slane %v2855, %v2910
        %v2912 = vcombine.low %v2862, %v2890
        %v2913 = vcombine.high %v2862, %v2890
        %v2914 = vcombine.low %v2869, %v2897
        %v2915 = vcombine.high %v2869, %v2897
        %v2916 = vcombine.low %v2876, %v2904
        %v2917 = vcombine.high %v2876, %v2904
        %v2918 = vcombine.low %v2883, %v2911
        %v2919 = vcombine.high %v2883, %v2911
        %v2920 = vcombine.low %v1679, %v1662
        %v2921 = vcombine.low %v1676, %v1678
        %v2922 = vcombine.low %v1838, %v1852
        %v2923 = vcombine.low %v1860, %v1862
        %v2925 = vunpack.c.l.s4 1966171168
        %v2926 = vunpack.c.0.s8 %v2925
        %v2927 = vlaneseq
        %v2928 = vshrl.u32 %v2927, 7
        %v2929 = vsub.s32 %v2926, %v2928
        %v2930 = vrot.slane %v2920, %v2929
        %v2932 = vunpack.c.l.s4 1966171168
        %v2933 = vunpack.c.0.s8 %v2932
        %v2934 = vlaneseq
        %v2935 = vshrl.u32 %v2934, 7
        %v2936 = vsub.s32 %v2933, %v2935
        %v2937 = vrot.slane %v2921, %v2936
        %v2939 = vunpack.c.l.s4 1966171168
        %v2940 = vunpack.c.0.s8 %v2939
        %v2941 = vlaneseq
        %v2942 = vshrl.u32 %v2941, 7
        %v2943 = vsub.s32 %v2940, %v2942
        %v2944 = vrot.slane %v2922, %v2943
        %v2946 = vunpack.c.l.s4 1966171168
        %v2947 = vunpack.c.0.s8 %v2946
        %v2948 = vlaneseq
        %v2949 = vshrl.u32 %v2948, 7
        %v2950 = vsub.s32 %v2947, %v2949
        %v2951 = vrot.slane %v2923, %v2950
        %v2952 = vcombine.low %v2930, %v2937
        %v2953 = vcombine.low %v2944, %v2951
        %v2955 = vunpack.c.l.s4 1966171168
        %v2956 = vunpack.c.0.s8 %v2955
        %v2957 = vlaneseq
        %v2958 = vshrl.u32 %v2957, 7
        %v2959 = vsub.s32 %v2956, %v2958
        %v2960 = vrot.slane %v2952, %v2959
        %v2962 = vunpack.c.l.s4 1966171168
        %v2963 = vunpack.c.0.s8 %v2962
        %v2964 = vlaneseq
        %v2965 = vshrl.u32 %v2964, 7
        %v2966 = vsub.s32 %v2963, %v2965
        %v2967 = vrot.slane %v2953, %v2966
        %v2968 = vcombine.low %v2960, %v2967
        %v2969 = vcombine.low %v1810, %v1814
        %v2970 = vcombine.high %v1810, %v1814
        %v2971 = vcombine.low %v1811, %v1991
        %v2972 = vcombine.high %v1811, %v1991
        %v2973 = vcombine.low %v1995, %v1992
        %v2974 = vcombine.high %v1995, %v1992
        %v2975 = vcombine.low %v1996, %v1993
        %v2976 = vcombine.high %v1996, %v1993
        %v2978 = vunpack.c.l.s4 1966171168
        %v2979 = vunpack.c.0.s8 %v2978
        %v2980 = vlaneseq
        %v2981 = vshrl.u32 %v2980, 7
        %v2982 = vsub.s32 %v2979, %v2981
        %v2983 = vrot.slane %v2969, %v2982
        %v2985 = vunpack.c.l.s4 1966171168
        %v2986 = vunpack.c.0.s8 %v2985
        %v2987 = vlaneseq
        %v2988 = vshrl.u32 %v2987, 7
        %v2989 = vsub.s32 %v2986, %v2988
        %v2990 = vrot.slane %v2970, %v2989
        %v2992 = vunpack.c.l.s4 1966171168
        %v2993 = vunpack.c.0.s8 %v2992
        %v2994 = vlaneseq
        %v2995 = vshrl.u32 %v2994, 7
        %v2996 = vsub.s32 %v2993, %v2995
        %v2997 = vrot.slane %v2971, %v2996
        %v2999 = vunpack.c.l.s4 1966171168
        %v3000 = vunpack.c.0.s8 %v2999
        %v3001 = vlaneseq
        %v3002 = vshrl.u32 %v3001, 7
        %v3003 = vsub.s32 %v3000, %v3002
        %v3004 = vrot.slane %v2972, %v3003
        %v3006 = vunpack.c.l.s4 1966171168
        %v3007 = vunpack.c.0.s8 %v3006
        %v3008 = vlaneseq
        %v3009 = vshrl.u32 %v3008, 7
        %v3010 = vsub.s32 %v3007, %v3009
        %v3011 = vrot.slane %v2973, %v3010
        %v3013 = vunpack.c.l.s4 1966171168
        %v3014 = vunpack.c.0.s8 %v3013
        %v3015 = vlaneseq
        %v3016 = vshrl.u32 %v3015, 7
        %v3017 = vsub.s32 %v3014, %v3016
        %v3018 = vrot.slane %v2974, %v3017
        %v3020 = vunpack.c.l.s4 1966171168
        %v3021 = vunpack.c.0.s8 %v3020
        %v3022 = vlaneseq
        %v3023 = vshrl.u32 %v3022, 7
        %v3024 = vsub.s32 %v3021, %v3023
        %v3025 = vrot.slane %v2975, %v3024
        %v3027 = vunpack.c.l.s4 1966171168
        %v3028 = vunpack.c.0.s8 %v3027
        %v3029 = vlaneseq
        %v3030 = vshrl.u32 %v3029, 7
        %v3031 = vsub.s32 %v3028, %v3030
        %v3032 = vrot.slane %v2976, %v3031
        %v3033 = vcombine.low %v2983, %v2997
        %v3034 = vcombine.high %v2983, %v2997
        %v3035 = vcombine.low %v2990, %v3004
        %v3036 = vcombine.high %v2990, %v3004
        %v3037 = vcombine.low %v3011, %v3025
        %v3038 = vcombine.high %v3011, %v3025
        %v3039 = vcombine.low %v3018, %v3032
        %v3040 = vcombine.high %v3018, %v3032
        %v3042 = vunpack.c.l.s4 1966171168
        %v3043 = vunpack.c.0.s8 %v3042
        %v3044 = vlaneseq
        %v3045 = vshrl.u32 %v3044, 7
        %v3046 = vsub.s32 %v3043, %v3045
        %v3047 = vrot.slane %v3033, %v3046
        %v3049 = vunpack.c.l.s4 1966171168
        %v3050 = vunpack.c.0.s8 %v3049
        %v3051 = vlaneseq
        %v3052 = vshrl.u32 %v3051, 7
        %v3053 = vsub.s32 %v3050, %v3052
        %v3054 = vrot.slane %v3035, %v3053
        %v3056 = vunpack.c.l.s4 1966171168
        %v3057 = vunpack.c.0.s8 %v3056
        %v3058 = vlaneseq
        %v3059 = vshrl.u32 %v3058, 7
        %v3060 = vsub.s32 %v3057, %v3059
        %v3061 = vrot.slane %v3034, %v3060
        %v3063 = vunpack.c.l.s4 1966171168
        %v3064 = vunpack.c.0.s8 %v3063
        %v3065 = vlaneseq
        %v3066 = vshrl.u32 %v3065, 7
        %v3067 = vsub.s32 %v3064, %v3066
        %v3068 = vrot.slane %v3036, %v3067
        %v3070 = vunpack.c.l.s4 1966171168
        %v3071 = vunpack.c.0.s8 %v3070
        %v3072 = vlaneseq
        %v3073 = vshrl.u32 %v3072, 7
        %v3074 = vsub.s32 %v3071, %v3073
        %v3075 = vrot.slane %v3037, %v3074
        %v3077 = vunpack.c.l.s4 1966171168
        %v3078 = vunpack.c.0.s8 %v3077
        %v3079 = vlaneseq
        %v3080 = vshrl.u32 %v3079, 7
        %v3081 = vsub.s32 %v3078, %v3080
        %v3082 = vrot.slane %v3039, %v3081
        %v3084 = vunpack.c.l.s4 1966171168
        %v3085 = vunpack.c.0.s8 %v3084
        %v3086 = vlaneseq
        %v3087 = vshrl.u32 %v3086, 7
        %v3088 = vsub.s32 %v3085, %v3087
        %v3089 = vrot.slane %v3038, %v3088
        %v3091 = vunpack.c.l.s4 1966171168
        %v3092 = vunpack.c.0.s8 %v3091
        %v3093 = vlaneseq
        %v3094 = vshrl.u32 %v3093, 7
        %v3095 = vsub.s32 %v3092, %v3094
        %v3096 = vrot.slane %v3040, %v3095
        %v3097 = vcombine.low %v3047, %v3075
        %v3098 = vcombine.high %v3047, %v3075
        %v3099 = vcombine.low %v3054, %v3082
        %v3100 = vcombine.high %v3054, %v3082
        %v3101 = vcombine.low %v3061, %v3089
        %v3102 = vcombine.high %v3061, %v3089
        %v3103 = vcombine.low %v3068, %v3096
        %v3104 = vcombine.high %v3068, %v3096
        %v3105 = vcombine.low %v1845, %v1859
        %v3106 = vcombine.low %v1861, %v2021
        %v3107 = vcombine.low %v2035, %v2043
        %v3108 = vcombine.low %v2045, %v2028
        %v3110 = vunpack.c.l.s4 1966171168
        %v3111 = vunpack.c.0.s8 %v3110
        %v3112 = vlaneseq
        %v3113 = vshrl.u32 %v3112, 7
        %v3114 = vsub.s32 %v3111, %v3113
        %v3115 = vrot.slane %v3105, %v3114
        %v3117 = vunpack.c.l.s4 1966171168
        %v3118 = vunpack.c.0.s8 %v3117
        %v3119 = vlaneseq
        %v3120 = vshrl.u32 %v3119, 7
        %v3121 = vsub.s32 %v3118, %v3120
        %v3122 = vrot.slane %v3106, %v3121
        %v3124 = vunpack.c.l.s4 1966171168
        %v3125 = vunpack.c.0.s8 %v3124
        %v3126 = vlaneseq
        %v3127 = vshrl.u32 %v3126, 7
        %v3128 = vsub.s32 %v3125, %v3127
        %v3129 = vrot.slane %v3107, %v3128
        %v3131 = vunpack.c.l.s4 1966171168
        %v3132 = vunpack.c.0.s8 %v3131
        %v3133 = vlaneseq
        %v3134 = vshrl.u32 %v3133, 7
        %v3135 = vsub.s32 %v3132, %v3134
        %v3136 = vrot.slane %v3108, %v3135
        %v3137 = vcombine.low %v3115, %v3122
        %v3138 = vcombine.low %v3129, %v3136
        %v3140 = vunpack.c.l.s4 1966171168
        %v3141 = vunpack.c.0.s8 %v3140
        %v3142 = vlaneseq
        %v3143 = vshrl.u32 %v3142, 7
        %v3144 = vsub.s32 %v3141, %v3143
        %v3145 = vrot.slane %v3137, %v3144
        %v3147 = vunpack.c.l.s4 1966171168
        %v3148 = vunpack.c.0.s8 %v3147
        %v3149 = vlaneseq
        %v3150 = vshrl.u32 %v3149, 7
        %v3151 = vsub.s32 %v3148, %v3150
        %v3152 = vrot.slane %v3138, %v3151
        %v3153 = vcombine.low %v3145, %v3152
        %v3154 = vcombine.low %v1997, %v1994
        %v3155 = vcombine.high %v1997, %v1994
        %v3156 = vcombine.low %v2174, %v2178
        %v3157 = vcombine.high %v2174, %v2178
        %v3158 = vcombine.low %v2175, %v2179
        %v3159 = vcombine.high %v2175, %v2179
        %v3160 = vcombine.low %v2176, %v2180
        %v3161 = vcombine.high %v2176, %v2180
        %v3163 = vunpack.c.l.s4 1966171168
        %v3164 = vunpack.c.0.s8 %v3163
        %v3165 = vlaneseq
        %v3166 = vshrl.u32 %v3165, 7
        %v3167 = vsub.s32 %v3164, %v3166
        %v3168 = vrot.slane %v3154, %v3167
        %v3170 = vunpack.c.l.s4 1966171168
        %v3171 = vunpack.c.0.s8 %v3170
        %v3172 = vlaneseq
        %v3173 = vshrl.u32 %v3172, 7
        %v3174 = vsub.s32 %v3171, %v3173
        %v3175 = vrot.slane %v3155, %v3174
        %v3177 = vunpack.c.l.s4 1966171168
        %v3178 = vunpack.c.0.s8 %v3177
        %v3179 = vlaneseq
        %v3180 = vshrl.u32 %v3179, 7
        %v3181 = vsub.s32 %v3178, %v3180
        %v3182 = vrot.slane %v3156, %v3181
        %v3184 = vunpack.c.l.s4 1966171168
        %v3185 = vunpack.c.0.s8 %v3184
        %v3186 = vlaneseq
        %v3187 = vshrl.u32 %v3186, 7
        %v3188 = vsub.s32 %v3185, %v3187
        %v3189 = vrot.slane %v3157, %v3188
        %v3191 = vunpack.c.l.s4 1966171168
        %v3192 = vunpack.c.0.s8 %v3191
        %v3193 = vlaneseq
        %v3194 = vshrl.u32 %v3193, 7
        %v3195 = vsub.s32 %v3192, %v3194
        %v3196 = vrot.slane %v3158, %v3195
        %v3198 = vunpack.c.l.s4 1966171168
        %v3199 = vunpack.c.0.s8 %v3198
        %v3200 = vlaneseq
        %v3201 = vshrl.u32 %v3200, 7
        %v3202 = vsub.s32 %v3199, %v3201
        %v3203 = vrot.slane %v3159, %v3202
        %v3205 = vunpack.c.l.s4 1966171168
        %v3206 = vunpack.c.0.s8 %v3205
        %v3207 = vlaneseq
        %v3208 = vshrl.u32 %v3207, 7
        %v3209 = vsub.s32 %v3206, %v3208
        %v3210 = vrot.slane %v3160, %v3209
        %v3212 = vunpack.c.l.s4 1966171168
        %v3213 = vunpack.c.0.s8 %v3212
        %v3214 = vlaneseq
        %v3215 = vshrl.u32 %v3214, 7
        %v3216 = vsub.s32 %v3213, %v3215
        %v3217 = vrot.slane %v3161, %v3216
        %v3218 = vcombine.low %v3168, %v3182
        %v3219 = vcombine.high %v3168, %v3182
        %v3220 = vcombine.low %v3175, %v3189
        %v3221 = vcombine.high %v3175, %v3189
        %v3222 = vcombine.low %v3196, %v3210
        %v3223 = vcombine.high %v3196, %v3210
        %v3224 = vcombine.low %v3203, %v3217
        %v3225 = vcombine.high %v3203, %v3217
        %v3227 = vunpack.c.l.s4 1966171168
        %v3228 = vunpack.c.0.s8 %v3227
        %v3229 = vlaneseq
        %v3230 = vshrl.u32 %v3229, 7
        %v3231 = vsub.s32 %v3228, %v3230
        %v3232 = vrot.slane %v3218, %v3231
        %v3234 = vunpack.c.l.s4 1966171168
        %v3235 = vunpack.c.0.s8 %v3234
        %v3236 = vlaneseq
        %v3237 = vshrl.u32 %v3236, 7
        %v3238 = vsub.s32 %v3235, %v3237
        %v3239 = vrot.slane %v3220, %v3238
        %v3241 = vunpack.c.l.s4 1966171168
        %v3242 = vunpack.c.0.s8 %v3241
        %v3243 = vlaneseq
        %v3244 = vshrl.u32 %v3243, 7
        %v3245 = vsub.s32 %v3242, %v3244
        %v3246 = vrot.slane %v3219, %v3245
        %v3248 = vunpack.c.l.s4 1966171168
        %v3249 = vunpack.c.0.s8 %v3248
        %v3250 = vlaneseq
        %v3251 = vshrl.u32 %v3250, 7
        %v3252 = vsub.s32 %v3249, %v3251
        %v3253 = vrot.slane %v3221, %v3252
        %v3255 = vunpack.c.l.s4 1966171168
        %v3256 = vunpack.c.0.s8 %v3255
        %v3257 = vlaneseq
        %v3258 = vshrl.u32 %v3257, 7
        %v3259 = vsub.s32 %v3256, %v3258
        %v3260 = vrot.slane %v3222, %v3259
        %v3262 = vunpack.c.l.s4 1966171168
        %v3263 = vunpack.c.0.s8 %v3262
        %v3264 = vlaneseq
        %v3265 = vshrl.u32 %v3264, 7
        %v3266 = vsub.s32 %v3263, %v3265
        %v3267 = vrot.slane %v3224, %v3266
        %v3269 = vunpack.c.l.s4 1966171168
        %v3270 = vunpack.c.0.s8 %v3269
        %v3271 = vlaneseq
        %v3272 = vshrl.u32 %v3271, 7
        %v3273 = vsub.s32 %v3270, %v3272
        %v3274 = vrot.slane %v3223, %v3273
        %v3276 = vunpack.c.l.s4 1966171168
        %v3277 = vunpack.c.0.s8 %v3276
        %v3278 = vlaneseq
        %v3279 = vshrl.u32 %v3278, 7
        %v3280 = vsub.s32 %v3277, %v3279
        %v3281 = vrot.slane %v3225, %v3280
        %v3282 = vcombine.low %v3232, %v3260
        %v3283 = vcombine.high %v3232, %v3260
        %v3284 = vcombine.low %v3239, %v3267
        %v3285 = vcombine.high %v3239, %v3267
        %v3286 = vcombine.low %v3246, %v3274
        %v3287 = vcombine.high %v3246, %v3274
        %v3288 = vcombine.low %v3253, %v3281
        %v3289 = vcombine.high %v3253, %v3281
        %v3290 = vcombine.low %v2042, %v2044
        %v3291 = vcombine.low %v2204, %v2218
        %v3292 = vcombine.low %v2226, %v2228
        %v3293 = vcombine.low %v2211, %v2225
        %v3295 = vunpack.c.l.s4 1966171168
        %v3296 = vunpack.c.0.s8 %v3295
        %v3297 = vlaneseq
        %v3298 = vshrl.u32 %v3297, 7
        %v3299 = vsub.s32 %v3296, %v3298
        %v3300 = vrot.slane %v3290, %v3299
        %v3302 = vunpack.c.l.s4 1966171168
        %v3303 = vunpack.c.0.s8 %v3302
        %v3304 = vlaneseq
        %v3305 = vshrl.u32 %v3304, 7
        %v3306 = vsub.s32 %v3303, %v3305
        %v3307 = vrot.slane %v3291, %v3306
        %v3309 = vunpack.c.l.s4 1966171168
        %v3310 = vunpack.c.0.s8 %v3309
        %v3311 = vlaneseq
        %v3312 = vshrl.u32 %v3311, 7
        %v3313 = vsub.s32 %v3310, %v3312
        %v3314 = vrot.slane %v3292, %v3313
        %v3316 = vunpack.c.l.s4 1966171168
        %v3317 = vunpack.c.0.s8 %v3316
        %v3318 = vlaneseq
        %v3319 = vshrl.u32 %v3318, 7
        %v3320 = vsub.s32 %v3317, %v3319
        %v3321 = vrot.slane %v3293, %v3320
        %v3322 = vcombine.low %v3300, %v3307
        %v3323 = vcombine.low %v3314, %v3321
        %v3325 = vunpack.c.l.s4 1966171168
        %v3326 = vunpack.c.0.s8 %v3325
        %v3327 = vlaneseq
        %v3328 = vshrl.u32 %v3327, 7
        %v3329 = vsub.s32 %v3326, %v3328
        %v3330 = vrot.slane %v3322, %v3329
        %v3332 = vunpack.c.l.s4 1966171168
        %v3333 = vunpack.c.0.s8 %v3332
        %v3334 = vlaneseq
        %v3335 = vshrl.u32 %v3334, 7
        %v3336 = vsub.s32 %v3333, %v3335
        %v3337 = vrot.slane %v3323, %v3336
        %v3338 = vcombine.low %v3330, %v3337
        %v3339 = vcombine.high %v2177, %v2177
        %v3341 = vunpack.c.l.s4 1966171168
        %v3342 = vunpack.c.0.s8 %v3341
        %v3343 = vlaneseq
        %v3344 = vshrl.u32 %v3343, 7
        %v3345 = vsub.s32 %v3342, %v3344
        %v3346 = vrot.slane %v2177, %v3345
        %v3348 = vunpack.c.l.s4 1966171168
        %v3349 = vunpack.c.0.s8 %v3348
        %v3350 = vlaneseq
        %v3351 = vshrl.u32 %v3350, 7
        %v3352 = vsub.s32 %v3349, %v3351
        %v3353 = vrot.slane %v3339, %v3352
        %v3354 = vcombine.high %v3346, %v3346
        %v3355 = vcombine.high %v3353, %v3353
        %v3357 = vunpack.c.l.s4 1966171168
        %v3358 = vunpack.c.0.s8 %v3357
        %v3359 = vlaneseq
        %v3360 = vshrl.u32 %v3359, 7
        %v3361 = vsub.s32 %v3358, %v3360
        %v3362 = vrot.slane %v3346, %v3361
        %v3364 = vunpack.c.l.s4 1966171168
        %v3365 = vunpack.c.0.s8 %v3364
        %v3366 = vlaneseq
        %v3367 = vshrl.u32 %v3366, 7
        %v3368 = vsub.s32 %v3365, %v3367
        %v3369 = vrot.slane %v3353, %v3368
        %v3371 = vunpack.c.l.s4 1966171168
        %v3372 = vunpack.c.0.s8 %v3371
        %v3373 = vlaneseq
        %v3374 = vshrl.u32 %v3373, 7
        %v3375 = vsub.s32 %v3372, %v3374
        %v3376 = vrot.slane %v3354, %v3375
        %v3378 = vunpack.c.l.s4 1966171168
        %v3379 = vunpack.c.0.s8 %v3378
        %v3380 = vlaneseq
        %v3381 = vshrl.u32 %v3380, 7
        %v3382 = vsub.s32 %v3379, %v3381
        %v3383 = vrot.slane %v3355, %v3382
        %v3384 = vcombine.high %v3362, %v3362
        %v3385 = vcombine.high %v3369, %v3369
        %v3386 = vcombine.high %v3376, %v3376
        %v3387 = vcombine.high %v3383, %v3383
        %v3389 = vunpack.c.l.s4 1966171168
        %v3390 = vunpack.c.0.s8 %v3389
        %v3391 = vlaneseq
        %v3392 = vshrl.u32 %v3391, 7
        %v3393 = vsub.s32 %v3390, %v3392
        %v3394 = vrot.slane %v2227, %v3393
        %v3396 = vunpack.c.l.s4 1966171168
        %v3397 = vunpack.c.0.s8 %v3396
        %v3398 = vlaneseq
        %v3399 = vshrl.u32 %v3398, 7
        %v3400 = vsub.s32 %v3397, %v3399
        %v3401 = vrot.slane %v3394, %v3400
        %v3609 = vunpack.c.l.b16 %v804
        %v3610 = vunpack.c.l.b16 %v805
        %v3611 = vunpack.c.l.b16 %v806
        %v3612 = vunpack.c.l.b16 %v807
        %v3613 = vunpack.c.l.b16 %v808
        %v3614 = vunpack.c.l.b16 %v809
        %v3615 = vunpack.c.l.b16 %v810
        %v3616 = vunpack.c.l.b16 %v811
        %v3617 = vunpack.c.l.b16 %v812
        %v3618 = vunpack.c.l.b16 %v813
        %v3619 = vunpack.c.l.b16 %v814
        %v3620 = vunpack.c.l.b16 %v815
        %v3621 = vunpack.c.l.b16 %v816
        %v3622 = vunpack.c.l.b16 %v817
        %v3623 = vunpack.c.l.b16 %v818
        %v3624 = vunpack.c.l.b16 %v819
        %v3625 = vunpack.c.l.b16 %v820
        %v3626 = vunpack.c.l.b16 %v821
        %v3627 = vunpack.c.l.b16 %v822
        %v3628 = vunpack.c.l.b16 %v823
        %v3629 = vunpack.c.l.b16 %v824
        %v3630 = vunpack.c.l.b16 %v825
        %v3631 = vunpack.c.l.b16 %v826
        %v3632 = vunpack.c.l.b16 %v827
        %v3633 = vunpack.c.l.b16 %v828
        %v3634 = vunpack.c.l.b16 %v829
        %v3635 = vunpack.c.l.b16 %v830
        %v3636 = vunpack.c.l.b16 %v831
        %v3637 = vunpack.c.l.b16 %v832
        %v3638 = vunpack.c.l.b16 %v833
        %v3639 = vunpack.c.l.b16 %v834
        %v3640 = vunpack.c.l.b16 %v835
        %v3641 = vunpack.c.l.b16 %v836
        %v3642 = vunpack.c.l.b16 %v837
        %v3643 = vunpack.c.l.b16 %v838
        %v3644 = vunpack.c.l.b16 %v839
        %v3645 = vunpack.c.l.b16 %v840
        %v3646 = vunpack.c.l.b16 %v841
        %v3647 = vunpack.c.l.b16 %v842
        %v3648 = vunpack.c.l.b16 %v843
        %v3649 = vunpack.c.l.b16 %v844
        %v3650 = vunpack.c.l.b16 %v845
        %v3651 = vunpack.c.l.b16 %v846
        %v3652 = vunpack.c.l.b16 %v847
        %v3653 = vunpack.c.l.b16 %v848
        %v3654 = vunpack.c.l.b16 %v849
        %v3655 = vunpack.c.l.b16 %v850
        %v3656 = vunpack.c.l.b16 %v851
        %v3657 = vunpack.c.l.b16 %v852
        %v3658 = vunpack.c.l.b16 %v853
        %v3659 = vunpack.c.l.b16 %v854
        %v3660 = vunpack.c.l.b16 %v855
        %v3661 = vunpack.c.l.b16 %v856
        %v3662 = vunpack.c.l.b16 %v857
        %v3663 = vunpack.c.l.b16 %v858
        %v3664 = vunpack.c.l.b16 %v859
        %v3665 = vunpack.c.l.b16 %v860
        %v3666 = vunpack.c.l.b16 %v861
        %v3667 = vunpack.c.l.b16 %v862
        %v3668 = vunpack.c.l.b16 %v863
        %v3669 = vunpack.c.l.b16 %v864
        %v3670 = vunpack.c.l.b16 %v865
        %v3671 = vunpack.c.l.b16 %v866
        %v3672 = vunpack.c.l.b16 %v867
        %v3673 = vunpack.c.l.b16 %v868
        %v3674 = vunpack.c.l.b16 %v869
        %v3675 = vunpack.c.l.b16 %v870
        %v3676 = vunpack.c.l.b16 %v871
        %v3677 = vunpack.c.l.b16 %v872
        %v3678 = vunpack.c.l.b16 %v873
        %v3679 = vunpack.c.l.b16 %v874
        %v3680 = vunpack.c.l.b16 %v875
        %v3681 = vunpack.c.l.b16 %v876
        %v3682 = vunpack.c.l.b16 %v877
        %v3683 = vunpack.c.l.b16 %v878
        %v3684 = vunpack.c.l.b16 %v879
        %v3685 = vunpack.c.l.b16 %v880
        %v3686 = vunpack.c.l.b16 %v881
        %v3687 = vunpack.c.l.b16 %v882
        %v3688 = vunpack.c.l.b16 %v883
        %v3689 = vunpack.c.l.b16 %v884
        %v3690 = vunpack.c.l.b16 %v885
        %v3691 = vunpack.c.l.b16 %v886
        %v3692 = vunpack.c.l.b16 %v887
        %v3693 = vunpack.c.l.b16 %v888
        %v3694 = vunpack.c.l.b16 %v889
        %v3695 = vunpack.c.l.b16 %v890
        %v3696 = vunpack.c.l.b16 %v891
        %v3697 = vunpack.c.l.b16 %v892
        %v3698 = vunpack.c.l.b16 %v893
        %v3699 = vunpack.c.l.b16 %v894
        %v3700 = vunpack.c.l.b16 %v895
        %v3701 = vunpack.c.l.b16 %v896
        %v3702 = vunpack.c.l.b16 %v897
        %v3703 = vunpack.c.l.b16 %v898
        %v3704 = vunpack.c.l.b16 %v899
        %v3705 = vunpack.c.l.b16 %v900
        %v3706 = vunpack.c.l.b16 %v901
        %v3707 = vunpack.c.l.b16 %v902
        %v3708 = vunpack.c.l.b16 %v903
        %v3709 = vunpack.c.l.b16 %v904
        %v3710 = vunpack.c.l.b16 %v905
        %v3711 = vunpack.c.l.b16 %v906
        %v3712 = vunpack.c.l.b16 %v907
        %v3713 = vunpack.c.l.b16 %v908
        %v3714 = vunpack.c.l.b16 %v909
        %v3715 = vunpack.c.l.b16 %v910
        %v3716 = vunpack.c.l.b16 %v911
        %v3717 = vunpack.c.l.b16 %v912
        %v3718 = vunpack.c.l.b16 %v913
        %v3719 = vunpack.c.l.b16 %v914
        %v3720 = vunpack.c.l.b16 %v915
        %v3721 = vunpack.c.l.b16 %v916
        %v3722 = vunpack.c.l.b16 %v917
        %v3723 = vunpack.c.l.b16 %v918
        %v3724 = vunpack.c.l.b16 %v919
        %v3725 = vunpack.c.l.b16 %v920
        %v3726 = vunpack.c.l.b16 %v921
        %v3727 = vunpack.c.l.b16 %v922
        %v3728 = vunpack.c.l.b16 %v923
        %v3729 = vunpack.c.l.b16 %v924
        %v3730 = vunpack.c.l.b16 %v925
        %v3731 = vunpack.c.l.b16 %v926
        %v3732 = vunpack.c.l.b16 %v927
        %v3733 = vunpack.c.l.b16 %v928
        %v3734 = vunpack.c.l.b16 %v929
        %v3735 = vunpack.c.l.b16 %v930
        %v3736 = vunpack.c.l.b16 %v931
        %v3737 = vunpack.c.l.b16 %v932
        %v3738 = vunpack.c.l.b16 %v933
        %v3739 = vunpack.c.l.b16 %v934
        %v3740 = vunpack.c.l.b16 %v935
        %v3741 = vunpack.c.l.b16 %v936
        %v3742 = vunpack.c.l.b16 %v937
        %v3743 = vunpack.c.l.b16 %v938
        %v3744 = vunpack.c.l.b16 %v939
        %v3745 = vunpack.c.l.b16 %v940
        %v3746 = vunpack.c.l.b16 %v941
        %v3747 = vunpack.c.l.b16 %v942
        %v3748 = vunpack.c.l.b16 %v943
        %v3749 = vunpack.c.l.b16 %v944
        %v3750 = vunpack.c.l.b16 %v945
        %v3751 = vunpack.c.l.b16 %v946
        %v3752 = vunpack.c.l.b16 %v947
        %v3753 = vpack.c.b16 %v3610, %v3609
        %v3754 = vpack.c.b16 %v3612, %v3611
        %v3755 = vpack.c.b16 %v3614, %v3613
        %v3756 = vpack.c.b16 %v3616, %v3615
        %v3757 = vpack.c.b16 %v3618, %v3617
        %v3758 = vpack.c.b16 %v3620, %v3619
        %v3759 = vpack.c.b16 %v3622, %v3621
        %v3760 = vpack.c.b16 %v3624, %v3623
        %v3761 = vpack.c.b16 %v3626, %v3625
        %v3762 = vpack.c.b16 %v3628, %v3627
        %v3763 = vpack.c.b16 %v3630, %v3629
        %v3764 = vpack.c.b16 %v3632, %v3631
        %v3765 = vpack.c.b16 %v3634, %v3633
        %v3766 = vpack.c.b16 %v3636, %v3635
        %v3767 = vpack.c.b16 %v3638, %v3637
        %v3768 = vpack.c.b16 %v3640, %v3639
        %v3769 = vpack.c.b16 %v3642, %v3641
        %v3770 = vpack.c.b16 %v3644, %v3643
        %v3771 = vpack.c.b16 %v3646, %v3645
        %v3772 = vpack.c.b16 %v3648, %v3647
        %v3773 = vpack.c.b16 %v3650, %v3649
        %v3774 = vpack.c.b16 %v3652, %v3651
        %v3775 = vpack.c.b16 %v3654, %v3653
        %v3776 = vpack.c.b16 %v3656, %v3655
        %v3777 = vpack.c.b16 %v3658, %v3657
        %v3778 = vpack.c.b16 %v3660, %v3659
        %v3779 = vpack.c.b16 %v3662, %v3661
        %v3780 = vpack.c.b16 %v3664, %v3663
        %v3781 = vpack.c.b16 %v3666, %v3665
        %v3782 = vpack.c.b16 %v3668, %v3667
        %v3783 = vpack.c.b16 %v3670, %v3669
        %v3784 = vpack.c.b16 %v3672, %v3671
        %v3785 = vpack.c.b16 %v3674, %v3673
        %v3786 = vpack.c.b16 %v3676, %v3675
        %v3787 = vpack.c.b16 %v3678, %v3677
        %v3788 = vpack.c.b16 %v3680, %v3679
        %v3789 = vpack.c.b16 %v3682, %v3681
        %v3790 = vpack.c.b16 %v3684, %v3683
        %v3791 = vpack.c.b16 %v3686, %v3685
        %v3792 = vpack.c.b16 %v3688, %v3687
        %v3793 = vpack.c.b16 %v3690, %v3689
        %v3794 = vpack.c.b16 %v3692, %v3691
        %v3795 = vpack.c.b16 %v3694, %v3693
        %v3796 = vpack.c.b16 %v3696, %v3695
        %v3797 = vpack.c.b16 %v3698, %v3697
        %v3798 = vpack.c.b16 %v3700, %v3699
        %v3799 = vpack.c.b16 %v3702, %v3701
        %v3800 = vpack.c.b16 %v3704, %v3703
        %v3801 = vpack.c.b16 %v3706, %v3705
        %v3802 = vpack.c.b16 %v3708, %v3707
        %v3803 = vpack.c.b16 %v3710, %v3709
        %v3804 = vpack.c.b16 %v3712, %v3711
        %v3805 = vpack.c.b16 %v3714, %v3713
        %v3806 = vpack.c.b16 %v3716, %v3715
        %v3807 = vpack.c.b16 %v3718, %v3717
        %v3808 = vpack.c.b16 %v3720, %v3719
        %v3809 = vpack.c.b16 %v3722, %v3721
        %v3810 = vpack.c.b16 %v3724, %v3723
        %v3811 = vpack.c.b16 %v3726, %v3725
        %v3812 = vpack.c.b16 %v3728, %v3727
        %v3813 = vpack.c.b16 %v3730, %v3729
        %v3814 = vpack.c.b16 %v3732, %v3731
        %v3815 = vpack.c.b16 %v3734, %v3733
        %v3816 = vpack.c.b16 %v3736, %v3735
        %v3817 = vpack.c.b16 %v3738, %v3737
        %v3818 = vpack.c.b16 %v3740, %v3739
        %v3819 = vpack.c.b16 %v3742, %v3741
        %v3820 = vpack.c.b16 %v3744, %v3743
        %v3821 = vpack.c.b16 %v3746, %v3745
        %v3822 = vpack.c.b16 %v3748, %v3747
        %v3823 = vpack.c.b16 %v3750, %v3749
        %v3824 = vpack.c.b16 %v3752, %v3751
        %3897 = vmatprep.subr.bf16.mxu0 0
        %3898 = vmatpush1.bf16.msra.mxu0 %v3753
        %3899 = vmatprep.subr.bf16.mxu0 0
        %3900 = vmatpush1.bf16.msra.mxu0 %v3754
        %3901 = vmatprep.subr.bf16.mxu0 0
        %3902 = vmatpush1.bf16.msra.mxu0 %v3755
        %3903 = vmatprep.subr.bf16.mxu0 0
        %3904 = vmatpush1.bf16.msra.mxu0 %v3756
        %3905 = vmatprep.subr.bf16.mxu0 0
        %3906 = vmatpush1.bf16.msra.mxu0 %v3757
        %3907 = vmatprep.subr.bf16.mxu0 0
        %3908 = vmatpush1.bf16.msra.mxu0 %v3758
        %3909 = vmatprep.subr.bf16.mxu0 0
        %3910 = vmatpush1.bf16.msra.mxu0 %v3759
        %3911 = vmatprep.subr.bf16.mxu0 0
        %3912 = vmatpush1.bf16.msra.mxu0 %v3760
        %3913 = vmatprep.subr.bf16.mxu0 0
        %3914 = vmatpush1.bf16.msra.mxu0 %v3761
        %3915 = vmatprep.subr.bf16.mxu0 0
        %3916 = vmatpush1.bf16.msra.mxu0 %v3762
        %3917 = vmatprep.subr.bf16.mxu0 0
        %3918 = vmatpush1.bf16.msra.mxu0 %v3763
        %3919 = vmatprep.subr.bf16.mxu0 0
        %3920 = vmatpush1.bf16.msra.mxu0 %v3764
        %3921 = vmatprep.subr.bf16.mxu0 0
        %3922 = vmatpush1.bf16.msra.mxu0 %v3765
        %3923 = vmatprep.subr.bf16.mxu0 0
        %3924 = vmatpush1.bf16.msra.mxu0 %v3766
        %3925 = vmatprep.subr.bf16.mxu0 0
        %3926 = vmatpush1.bf16.msra.mxu0 %v3767
        %3927 = vmatprep.subr.bf16.mxu0 0
        %3928 = vmatpush1.bf16.msra.mxu0 %v3768
        %3929 = vmatprep.mubr.bf16.mxu0 %v2361
        %3930 = vmatmul.mubr.bf16.gmra.mrb[0].mxu0 %v2357
        %v3931 = vpop.f32.mrb[0].mxu0
        %v3932 = vadd.f32 0.0, %v3931
        %v3933 = vpop.f32.mrb[0].mxu0
        %v3934 = vpop.f32.mrb[0].mxu0
        %v3935 = vadd.f32 0.0, %v3934
        %v3936 = vpop.f32.mrb[0].mxu0
        %3937 = vmatprep.mubr.bf16.mxu0 %v2546
        %3938 = vmatmul.mubr.bf16.gmra.mrb[0].mxu0 %v2542
        %v3939 = vpop.f32.mrb[0].mxu0
        %v3940 = vadd.f32 0.0, %v3939
        %v3941 = vpop.f32.mrb[0].mxu0
        %v3942 = vpop.f32.mrb[0].mxu0
        %v3943 = vadd.f32 0.0, %v3942
        %v3944 = vpop.f32.mrb[0].mxu0
        %3945 = vmatprep.mubr.bf16.mxu0 %v2731
        %3946 = vmatmul.mubr.bf16.gmra.mrb[0].mxu0 %v2727
        %v3947 = vpop.f32.mrb[0].mxu0
        %v3948 = vadd.f32 0.0, %v3947
        %v3949 = vpop.f32.mrb[0].mxu0
        %v3950 = vpop.f32.mrb[0].mxu0
        %v3951 = vadd.f32 0.0, %v3950
        %v3952 = vpop.f32.mrb[0].mxu0
        %3953 = vmatprep.mubr.bf16.mxu0 %v2916
        %3954 = vmatmul.mubr.bf16.gmra.mrb[0].mxu0 %v2912
        %v3955 = vpop.f32.mrb[0].mxu0
        %v3956 = vadd.f32 0.0, %v3955
        %v3957 = vpop.f32.mrb[0].mxu0
        %v3958 = vpop.f32.mrb[0].mxu0
        %v3959 = vadd.f32 0.0, %v3958
        %v3960 = vpop.f32.mrb[0].mxu0
        %3961 = vmatprep.mubr.bf16.mxu0 %v3101
        %3962 = vmatmul.mubr.bf16.gmra.mrb[0].mxu0 %v3097
        %v3963 = vpop.f32.mrb[0].mxu0
        %v3964 = vadd.f32 0.0, %v3963
        %v3965 = vpop.f32.mrb[0].mxu0
        %v3966 = vpop.f32.mrb[0].mxu0
        %v3967 = vadd.f32 0.0, %v3966
        %v3968 = vpop.f32.mrb[0].mxu0
        %3969 = vmatprep.mubr.bf16.mxu0 %v3286
        %3970 = vmatmul.mubr.bf16.gmra.mrb[0].mxu0 %v3282
        %v3971 = vpop.f32.mrb[0].mxu0
        %v3972 = vadd.f32 0.0, %v3971
        %v3973 = vpop.f32.mrb[0].mxu0
        %v3974 = vpop.f32.mrb[0].mxu0
        %v3975 = vadd.f32 0.0, %v3974
        %v3976 = vpop.f32.mrb[0].mxu0
        %3977 = vmatprep.mubr.bf16.mxu0 %v3376
        %3978 = vmatmul.mubr.bf16.gmra.mrb[0].mxu0 %v3362
        %v3979 = vpop.f32.mrb[0].mxu0
        %v3980 = vadd.f32 0.0, %v3979
        %v3981 = vpop.f32.mrb[0].mxu0
        %v3982 = vpop.f32.mrb[0].mxu0
        %v3983 = vpop.f32.mrb[0].mxu0
        %3984 = vdwg.mxu0
        %3985 = vmatprep.subr.bf16.mxu0 0
        %3986 = vmatpush1.bf16.msra.mxu0 %v3769
        %3987 = vmatprep.subr.bf16.mxu0 0
        %3988 = vmatpush1.bf16.msra.mxu0 %v3770
        %3989 = vmatprep.subr.bf16.mxu0 0
        %3990 = vmatpush1.bf16.msra.mxu0 %v3771
        %3991 = vmatprep.subr.bf16.mxu0 0
        %3992 = vmatpush1.bf16.msra.mxu0 %v3772
        %3993 = vmatprep.subr.bf16.mxu0 0
        %3994 = vmatpush1.bf16.msra.mxu0 %v3773
        %3995 = vmatprep.subr.bf16.mxu0 0
        %3996 = vmatpush1.bf16.msra.mxu0 %v3774
        %3997 = vmatprep.subr.bf16.mxu0 0
        %3998 = vmatpush1.bf16.msra.mxu0 %v3775
        %3999 = vmatprep.subr.bf16.mxu0 0
        %4000 = vmatpush1.bf16.msra.mxu0 %v3776
        %4001 = vmatprep.subr.bf16.mxu0 0
        %4002 = vmatpush1.bf16.msra.mxu0 %v3777
        %4003 = vmatprep.subr.bf16.mxu0 0
        %4004 = vmatpush1.bf16.msra.mxu0 %v3778
        %4005 = vmatprep.subr.bf16.mxu0 0
        %4006 = vmatpush1.bf16.msra.mxu0 %v3779
        %4007 = vmatprep.subr.bf16.mxu0 0
        %4008 = vmatpush1.bf16.msra.mxu0 %v3780
        %4009 = vmatprep.subr.bf16.mxu0 0
        %4010 = vmatpush1.bf16.msra.mxu0 %v3781
        %4011 = vmatprep.subr.bf16.mxu0 0
        %4012 = vmatpush1.bf16.msra.mxu0 %v3782
        %4013 = vmatprep.subr.bf16.mxu0 0
        %4014 = vmatpush1.bf16.msra.mxu0 %v3783
        %4015 = vmatprep.subr.bf16.mxu0 0
        %4016 = vmatpush1.bf16.msra.mxu0 %v3784
        %4017 = vmatprep.mubr.bf16.mxu0 %v2362
        %4018 = vmatmul.mubr.bf16.gmra.mrb[0].mxu0 %v2358
        %v4019 = vpop.f32.mrb[0].mxu0
        %v4020 = vadd.f32 %v3932, %v4019
        %v4021 = vpop.f32.mrb[0].mxu0
        %v4022 = vpop.f32.mrb[0].mxu0
        %v4023 = vadd.f32 %v3935, %v4022
        %v4024 = vpop.f32.mrb[0].mxu0
        %4025 = vmatprep.mubr.bf16.mxu0 %v2547
        %4026 = vmatmul.mubr.bf16.gmra.mrb[0].mxu0 %v2543
        %v4027 = vpop.f32.mrb[0].mxu0
        %v4028 = vadd.f32 %v3940, %v4027
        %v4029 = vpop.f32.mrb[0].mxu0
        %v4030 = vpop.f32.mrb[0].mxu0
        %v4031 = vadd.f32 %v3943, %v4030
        %v4032 = vpop.f32.mrb[0].mxu0
        %4033 = vmatprep.mubr.bf16.mxu0 %v2732
        %4034 = vmatmul.mubr.bf16.gmra.mrb[0].mxu0 %v2728
        %v4035 = vpop.f32.mrb[0].mxu0
        %v4036 = vadd.f32 %v3948, %v4035
        %v4037 = vpop.f32.mrb[0].mxu0
        %v4038 = vpop.f32.mrb[0].mxu0
        %v4039 = vadd.f32 %v3951, %v4038
        %v4040 = vpop.f32.mrb[0].mxu0
        %4041 = vmatprep.mubr.bf16.mxu0 %v2917
        %4042 = vmatmul.mubr.bf16.gmra.mrb[0].mxu0 %v2913
        %v4043 = vpop.f32.mrb[0].mxu0
        %v4044 = vadd.f32 %v3956, %v4043
        %v4045 = vpop.f32.mrb[0].mxu0
        %v4046 = vpop.f32.mrb[0].mxu0
        %v4047 = vadd.f32 %v3959, %v4046
        %v4048 = vpop.f32.mrb[0].mxu0
        %4049 = vmatprep.mubr.bf16.mxu0 %v3102
        %4050 = vmatmul.mubr.bf16.gmra.mrb[0].mxu0 %v3098
        %v4051 = vpop.f32.mrb[0].mxu0
        %v4052 = vadd.f32 %v3964, %v4051
        %v4053 = vpop.f32.mrb[0].mxu0
        %v4054 = vpop.f32.mrb[0].mxu0
        %v4055 = vadd.f32 %v3967, %v4054
        %v4056 = vpop.f32.mrb[0].mxu0
        %4057 = vmatprep.mubr.bf16.mxu0 %v3287
        %4058 = vmatmul.mubr.bf16.gmra.mrb[0].mxu0 %v3283
        %v4059 = vpop.f32.mrb[0].mxu0
        %v4060 = vadd.f32 %v3972, %v4059
        %v4061 = vpop.f32.mrb[0].mxu0
        %v4062 = vpop.f32.mrb[0].mxu0
        %v4063 = vadd.f32 %v3975, %v4062
        %v4064 = vpop.f32.mrb[0].mxu0
        %4065 = vmatprep.mubr.bf16.mxu0 %v3386
        %4066 = vmatmul.mubr.bf16.gmra.mrb[0].mxu0 %v3384
        %v4067 = vpop.f32.mrb[0].mxu0
        %v4068 = vadd.f32 %v3980, %v4067
        %v4069 = vpop.f32.mrb[0].mxu0
        %v4070 = vpop.f32.mrb[0].mxu0
        %v4071 = vpop.f32.mrb[0].mxu0
        %4072 = vdwg.mxu0
        %4073 = vmatprep.subr.bf16.mxu0 0
        %4074 = vmatpush1.bf16.msra.mxu0 %v3785
        %4075 = vmatprep.subr.bf16.mxu0 0
        %4076 = vmatpush1.bf16.msra.mxu0 %v3786
        %4077 = vmatprep.subr.bf16.mxu0 0
        %4078 = vmatpush1.bf16.msra.mxu0 %v3787
        %4079 = vmatprep.subr.bf16.mxu0 0
        %4080 = vmatpush1.bf16.msra.mxu0 %v3788
        %4081 = vmatprep.subr.bf16.mxu0 0
        %4082 = vmatpush1.bf16.msra.mxu0 %v3789
        %4083 = vmatprep.subr.bf16.mxu0 0
        %4084 = vmatpush1.bf16.msra.mxu0 %v3790
        %4085 = vmatprep.subr.bf16.mxu0 0
        %4086 = vmatpush1.bf16.msra.mxu0 %v3791
        %4087 = vmatprep.subr.bf16.mxu0 0
        %4088 = vmatpush1.bf16.msra.mxu0 %v3792
        %4089 = vmatprep.subr.bf16.mxu0 0
        %4090 = vmatpush1.bf16.msra.mxu0 %v3793
        %4091 = vmatprep.subr.bf16.mxu0 0
        %4092 = vmatpush1.bf16.msra.mxu0 %v3794
        %4093 = vmatprep.subr.bf16.mxu0 0
        %4094 = vmatpush1.bf16.msra.mxu0 %v3795
        %4095 = vmatprep.subr.bf16.mxu0 0
        %4096 = vmatpush1.bf16.msra.mxu0 %v3796
        %4097 = vmatprep.subr.bf16.mxu0 0
        %4098 = vmatpush1.bf16.msra.mxu0 %v3797
        %4099 = vmatprep.subr.bf16.mxu0 0
        %4100 = vmatpush1.bf16.msra.mxu0 %v3798
        %4101 = vmatprep.subr.bf16.mxu0 0
        %4102 = vmatpush1.bf16.msra.mxu0 %v3799
        %4103 = vmatprep.subr.bf16.mxu0 0
        %4104 = vmatpush1.bf16.msra.mxu0 %v3800
        %4105 = vmatprep.mubr.bf16.mxu0 %v2363
        %4106 = vmatmul.mubr.bf16.gmra.mrb[0].mxu0 %v2359
        %v4107 = vpop.f32.mrb[0].mxu0
        %v4108 = vadd.f32 %v4020, %v4107
        %v4109 = vpop.f32.mrb[0].mxu0
        %v4110 = vpop.f32.mrb[0].mxu0
        %v4111 = vadd.f32 %v4023, %v4110
        %v4112 = vpop.f32.mrb[0].mxu0
        %4113 = vmatprep.mubr.bf16.mxu0 %v2548
        %4114 = vmatmul.mubr.bf16.gmra.mrb[0].mxu0 %v2544
        %v4115 = vpop.f32.mrb[0].mxu0
        %v4116 = vadd.f32 %v4028, %v4115
        %v4117 = vpop.f32.mrb[0].mxu0
        %v4118 = vpop.f32.mrb[0].mxu0
        %v4119 = vadd.f32 %v4031, %v4118
        %v4120 = vpop.f32.mrb[0].mxu0
        %4121 = vmatprep.mubr.bf16.mxu0 %v2733
        %4122 = vmatmul.mubr.bf16.gmra.mrb[0].mxu0 %v2729
        %v4123 = vpop.f32.mrb[0].mxu0
        %v4124 = vadd.f32 %v4036, %v4123
        %v4125 = vpop.f32.mrb[0].mxu0
        %v4126 = vpop.f32.mrb[0].mxu0
        %v4127 = vadd.f32 %v4039, %v4126
        %v4128 = vpop.f32.mrb[0].mxu0
        %4129 = vmatprep.mubr.bf16.mxu0 %v2918
        %4130 = vmatmul.mubr.bf16.gmra.mrb[0].mxu0 %v2914
        %v4131 = vpop.f32.mrb[0].mxu0
        %v4132 = vadd.f32 %v4044, %v4131
        %v4133 = vpop.f32.mrb[0].mxu0
        %v4134 = vpop.f32.mrb[0].mxu0
        %v4135 = vadd.f32 %v4047, %v4134
        %v4136 = vpop.f32.mrb[0].mxu0
        %4137 = vmatprep.mubr.bf16.mxu0 %v3103
        %4138 = vmatmul.mubr.bf16.gmra.mrb[0].mxu0 %v3099
        %v4139 = vpop.f32.mrb[0].mxu0
        %v4140 = vadd.f32 %v4052, %v4139
        %v4141 = vpop.f32.mrb[0].mxu0
        %v4142 = vpop.f32.mrb[0].mxu0
        %v4143 = vadd.f32 %v4055, %v4142
        %v4144 = vpop.f32.mrb[0].mxu0
        %4145 = vmatprep.mubr.bf16.mxu0 %v3288
        %4146 = vmatmul.mubr.bf16.gmra.mrb[0].mxu0 %v3284
        %v4147 = vpop.f32.mrb[0].mxu0
        %v4148 = vadd.f32 %v4060, %v4147
        %v4149 = vpop.f32.mrb[0].mxu0
        %v4150 = vpop.f32.mrb[0].mxu0
        %v4151 = vadd.f32 %v4063, %v4150
        %v4152 = vpop.f32.mrb[0].mxu0
        %4153 = vmatprep.mubr.bf16.mxu0 %v3383
        %4154 = vmatmul.mubr.bf16.gmra.mrb[0].mxu0 %v3369
        %v4155 = vpop.f32.mrb[0].mxu0
        %v4156 = vadd.f32 %v4068, %v4155
        %v4157 = vpop.f32.mrb[0].mxu0
        %v4158 = vpop.f32.mrb[0].mxu0
        %v4159 = vpop.f32.mrb[0].mxu0
        %4160 = vdwg.mxu0
        %4161 = vmatprep.subr.bf16.mxu0 0
        %4162 = vmatpush1.bf16.msra.mxu0 %v3801
        %4163 = vmatprep.subr.bf16.mxu0 0
        %4164 = vmatpush1.bf16.msra.mxu0 %v3802
        %4165 = vmatprep.subr.bf16.mxu0 0
        %4166 = vmatpush1.bf16.msra.mxu0 %v3803
        %4167 = vmatprep.subr.bf16.mxu0 0
        %4168 = vmatpush1.bf16.msra.mxu0 %v3804
        %4169 = vmatprep.subr.bf16.mxu0 0
        %4170 = vmatpush1.bf16.msra.mxu0 %v3805
        %4171 = vmatprep.subr.bf16.mxu0 0
        %4172 = vmatpush1.bf16.msra.mxu0 %v3806
        %4173 = vmatprep.subr.bf16.mxu0 0
        %4174 = vmatpush1.bf16.msra.mxu0 %v3807
        %4175 = vmatprep.subr.bf16.mxu0 0
        %4176 = vmatpush1.bf16.msra.mxu0 %v3808
        %4177 = vmatprep.subr.bf16.mxu0 0
        %4178 = vmatpush1.bf16.msra.mxu0 %v3809
        %4179 = vmatprep.subr.bf16.mxu0 0
        %4180 = vmatpush1.bf16.msra.mxu0 %v3810
        %4181 = vmatprep.subr.bf16.mxu0 0
        %4182 = vmatpush1.bf16.msra.mxu0 %v3811
        %4183 = vmatprep.subr.bf16.mxu0 0
        %4184 = vmatpush1.bf16.msra.mxu0 %v3812
        %4185 = vmatprep.subr.bf16.mxu0 0
        %4186 = vmatpush1.bf16.msra.mxu0 %v3813
        %4187 = vmatprep.subr.bf16.mxu0 0
        %4188 = vmatpush1.bf16.msra.mxu0 %v3814
        %4189 = vmatprep.subr.bf16.mxu0 0
        %4190 = vmatpush1.bf16.msra.mxu0 %v3815
        %4191 = vmatprep.subr.bf16.mxu0 0
        %4192 = vmatpush1.bf16.msra.mxu0 %v3816
        %4193 = vmatprep.mubr.bf16.mxu0 %v2364
        %4194 = vmatmul.mubr.bf16.gmra.mrb[0].mxu0 %v2360
        %v4195 = vpop.f32.mrb[0].mxu0
        %v4196 = vadd.f32 %v4108, %v4195
        %v4197 = vpop.f32.mrb[0].mxu0
        %v4198 = vpop.f32.mrb[0].mxu0
        %v4199 = vadd.f32 %v4111, %v4198
        %v4200 = vpop.f32.mrb[0].mxu0
        %4201 = vmatprep.mubr.bf16.mxu0 %v2549
        %4202 = vmatmul.mubr.bf16.gmra.mrb[0].mxu0 %v2545
        %v4203 = vpop.f32.mrb[0].mxu0
        %v4204 = vadd.f32 %v4116, %v4203
        %v4205 = vpop.f32.mrb[0].mxu0
        %v4206 = vpop.f32.mrb[0].mxu0
        %v4207 = vadd.f32 %v4119, %v4206
        %v4208 = vpop.f32.mrb[0].mxu0
        %4209 = vmatprep.mubr.bf16.mxu0 %v2734
        %4210 = vmatmul.mubr.bf16.gmra.mrb[0].mxu0 %v2730
        %v4211 = vpop.f32.mrb[0].mxu0
        %v4212 = vadd.f32 %v4124, %v4211
        %v4213 = vpop.f32.mrb[0].mxu0
        %v4214 = vpop.f32.mrb[0].mxu0
        %v4215 = vadd.f32 %v4127, %v4214
        %v4216 = vpop.f32.mrb[0].mxu0
        %4217 = vmatprep.mubr.bf16.mxu0 %v2919
        %4218 = vmatmul.mubr.bf16.gmra.mrb[0].mxu0 %v2915
        %v4219 = vpop.f32.mrb[0].mxu0
        %v4220 = vadd.f32 %v4132, %v4219
        %v4221 = vpop.f32.mrb[0].mxu0
        %v4222 = vpop.f32.mrb[0].mxu0
        %v4223 = vadd.f32 %v4135, %v4222
        %v4224 = vpop.f32.mrb[0].mxu0
        %4225 = vmatprep.mubr.bf16.mxu0 %v3104
        %4226 = vmatmul.mubr.bf16.gmra.mrb[0].mxu0 %v3100
        %v4227 = vpop.f32.mrb[0].mxu0
        %v4228 = vadd.f32 %v4140, %v4227
        %v4229 = vpop.f32.mrb[0].mxu0
        %v4230 = vpop.f32.mrb[0].mxu0
        %v4231 = vadd.f32 %v4143, %v4230
        %v4232 = vpop.f32.mrb[0].mxu0
        %4233 = vmatprep.mubr.bf16.mxu0 %v3289
        %4234 = vmatmul.mubr.bf16.gmra.mrb[0].mxu0 %v3285
        %v4235 = vpop.f32.mrb[0].mxu0
        %v4236 = vadd.f32 %v4148, %v4235
        %v4237 = vpop.f32.mrb[0].mxu0
        %v4238 = vpop.f32.mrb[0].mxu0
        %v4239 = vadd.f32 %v4151, %v4238
        %v4240 = vpop.f32.mrb[0].mxu0
        %4241 = vmatprep.mubr.bf16.mxu0 %v3387
        %4242 = vmatmul.mubr.bf16.gmra.mrb[0].mxu0 %v3385
        %v4243 = vpop.f32.mrb[0].mxu0
        %v4244 = vadd.f32 %v4156, %v4243
        %v4245 = vpop.f32.mrb[0].mxu0
        %v4246 = vpop.f32.mrb[0].mxu0
        %v4247 = vpop.f32.mrb[0].mxu0
        %4248 = vdwg.mxu0
        %4249 = vmatprep.subr.bf16.mxu0 0
        %4250 = vmatpush1.bf16.msra.mxu0 %v3817
        %4251 = vmatprep.subr.bf16.mxu0 0
        %4252 = vmatpush1.bf16.msra.mxu0 %v3818
        %4253 = vmatprep.subr.bf16.mxu0 0
        %4254 = vmatpush1.bf16.msra.mxu0 %v3819
        %4255 = vmatprep.subr.bf16.mxu0 0
        %4256 = vmatpush1.bf16.msra.mxu0 %v3820
        %4257 = vmatprep.subr.bf16.mxu0 0
        %4258 = vmatpush1.bf16.msra.mxu0 %v3821
        %4259 = vmatprep.subr.bf16.mxu0 0
        %4260 = vmatpush1.bf16.msra.mxu0 %v3822
        %4261 = vmatprep.subr.bf16.mxu0 0
        %4262 = vmatpush1.bf16.msra.mxu0 %v3823
        %4263 = vmatprep.subr.bf16.mxu0 0
        %4264 = vmatpush1.bf16.msra.mxu0 %v3824
        %4265 = vmatprep.subr.bf16.mxu0 0
        %4266 = vmatpush1.bf16.msra.mxu0 0
        %4267 = vmatprep.subr.bf16.mxu0 0
        %4268 = vmatpush1.bf16.msra.mxu0 0
        %4269 = vmatprep.subr.bf16.mxu0 0
        %4270 = vmatpush1.bf16.msra.mxu0 0
        %4271 = vmatprep.subr.bf16.mxu0 0
        %4272 = vmatpush1.bf16.msra.mxu0 0
        %4273 = vmatprep.subr.bf16.mxu0 0
        %4274 = vmatpush1.bf16.msra.mxu0 0
        %4275 = vmatprep.subr.bf16.mxu0 0
        %4276 = vmatpush1.bf16.msra.mxu0 0
        %4277 = vmatprep.subr.bf16.mxu0 0
        %4278 = vmatpush1.bf16.msra.mxu0 0
        %4279 = vmatprep.subr.bf16.mxu0 0
        %4280 = vmatpush1.bf16.msra.mxu0 0
        %4281 = vmatprep.mubr.bf16.mxu0 0
        %4282 = vmatmul.mubr.bf16.gmra.mrb[0].mxu0 %v2413
        %v4283 = vpop.f32.mrb[0].mxu0
        %v4284 = vadd.f32 %v4196, %v4283
        %v4285 = vpop.f32.mrb[0].mxu0
        %v4286 = vpop.f32.mrb[0].mxu0
        %v4287 = vadd.f32 %v4199, %v4286
        %v4288 = vpop.f32.mrb[0].mxu0
        %4289 = vmatprep.mubr.bf16.mxu0 0
        %4290 = vmatmul.mubr.bf16.gmra.mrb[0].mxu0 %v2598
        %v4291 = vpop.f32.mrb[0].mxu0
        %v4292 = vadd.f32 %v4204, %v4291
        %v4293 = vpop.f32.mrb[0].mxu0
        %v4294 = vpop.f32.mrb[0].mxu0
        %v4295 = vadd.f32 %v4207, %v4294
        %v4296 = vpop.f32.mrb[0].mxu0
        %4297 = vmatprep.mubr.bf16.mxu0 0
        %4298 = vmatmul.mubr.bf16.gmra.mrb[0].mxu0 %v2783
        %v4299 = vpop.f32.mrb[0].mxu0
        %v4300 = vadd.f32 %v4212, %v4299
        %v4301 = vpop.f32.mrb[0].mxu0
        %v4302 = vpop.f32.mrb[0].mxu0
        %v4303 = vadd.f32 %v4215, %v4302
        %v4304 = vpop.f32.mrb[0].mxu0
        %4305 = vmatprep.mubr.bf16.mxu0 0
        %4306 = vmatmul.mubr.bf16.gmra.mrb[0].mxu0 %v2968
        %v4307 = vpop.f32.mrb[0].mxu0
        %v4308 = vadd.f32 %v4220, %v4307
        %v4309 = vpop.f32.mrb[0].mxu0
        %v4310 = vpop.f32.mrb[0].mxu0
        %v4311 = vadd.f32 %v4223, %v4310
        %v4312 = vpop.f32.mrb[0].mxu0
        %4313 = vmatprep.mubr.bf16.mxu0 0
        %4314 = vmatmul.mubr.bf16.gmra.mrb[0].mxu0 %v3153
        %v4315 = vpop.f32.mrb[0].mxu0
        %v4316 = vadd.f32 %v4228, %v4315
        %v4317 = vpop.f32.mrb[0].mxu0
        %v4318 = vpop.f32.mrb[0].mxu0
        %v4319 = vadd.f32 %v4231, %v4318
        %v4320 = vpop.f32.mrb[0].mxu0
        %4321 = vmatprep.mubr.bf16.mxu0 0
        %4322 = vmatmul.mubr.bf16.gmra.mrb[0].mxu0 %v3338
        %v4323 = vpop.f32.mrb[0].mxu0
        %v4324 = vadd.f32 %v4236, %v4323
        %v4325 = vpop.f32.mrb[0].mxu0
        %v4326 = vpop.f32.mrb[0].mxu0
        %v4327 = vadd.f32 %v4239, %v4326
        %v4328 = vpop.f32.mrb[0].mxu0
        %4329 = vmatprep.mubr.bf16.mxu0 0
        %4330 = vmatmul.mubr.bf16.gmra.mrb[0].mxu0 %v3401
        %v4331 = vpop.f32.mrb[0].mxu0
        %v4332 = vadd.f32 %v4244, %v4331
        %v4333 = vpop.f32.mrb[0].mxu0
        %v4334 = vpop.f32.mrb[0].mxu0
        %v4335 = vpop.f32.mrb[0].mxu0
        %4336 = vdwg.mxu0
        %v4350 = vcombine.high %v4284, %v4284
        %v4352 = vunpack.c.l.s4 1983009808
        %v4353 = vunpack.c.0.s8 %v4352
        %v4354 = vlaneseq
        %v4355 = vshrl.u32 %v4354, 7
        %v4356 = vsub.s32 %v4353, %v4355
        %v4357 = vrot.slane %v4284, %v4356
        %v4359 = vunpack.c.l.s4 1983009808
        %v4360 = vunpack.c.0.s8 %v4359
        %v4361 = vlaneseq
        %v4362 = vshrl.u32 %v4361, 7
        %v4363 = vsub.s32 %v4360, %v4362
        %v4364 = vrot.slane %v4350, %v4363
        %v4365 = vcombine.high %v4357, %v4357
        %v4366 = vcombine.high %v4364, %v4364
        %v4367 = vcombine.high %v4287, %v4287
        %v4369 = vunpack.c.l.s4 1983009808
        %v4370 = vunpack.c.0.s8 %v4369
        %v4371 = vlaneseq
        %v4372 = vshrl.u32 %v4371, 7
        %v4373 = vsub.s32 %v4370, %v4372
        %v4374 = vrot.slane %v4287, %v4373
        %v4376 = vunpack.c.l.s4 1983009808
        %v4377 = vunpack.c.0.s8 %v4376
        %v4378 = vlaneseq
        %v4379 = vshrl.u32 %v4378, 7
        %v4380 = vsub.s32 %v4377, %v4379
        %v4381 = vrot.slane %v4367, %v4380
        %v4382 = vcombine.high %v4374, %v4374
        %v4383 = vcombine.high %v4381, %v4381
        %v4384 = vcombine.high %v4292, %v4292
        %v4386 = vunpack.c.l.s4 1983009808
        %v4387 = vunpack.c.0.s8 %v4386
        %v4388 = vlaneseq
        %v4389 = vshrl.u32 %v4388, 7
        %v4390 = vsub.s32 %v4387, %v4389
        %v4391 = vrot.slane %v4292, %v4390
        %v4393 = vunpack.c.l.s4 1983009808
        %v4394 = vunpack.c.0.s8 %v4393
        %v4395 = vlaneseq
        %v4396 = vshrl.u32 %v4395, 7
        %v4397 = vsub.s32 %v4394, %v4396
        %v4398 = vrot.slane %v4384, %v4397
        %v4399 = vcombine.high %v4391, %v4391
        %v4400 = vcombine.high %v4398, %v4398
        %v4401 = vcombine.high %v4295, %v4295
        %v4403 = vunpack.c.l.s4 1983009808
        %v4404 = vunpack.c.0.s8 %v4403
        %v4405 = vlaneseq
        %v4406 = vshrl.u32 %v4405, 7
        %v4407 = vsub.s32 %v4404, %v4406
        %v4408 = vrot.slane %v4295, %v4407
        %v4410 = vunpack.c.l.s4 1983009808
        %v4411 = vunpack.c.0.s8 %v4410
        %v4412 = vlaneseq
        %v4413 = vshrl.u32 %v4412, 7
        %v4414 = vsub.s32 %v4411, %v4413
        %v4415 = vrot.slane %v4401, %v4414
        %v4416 = vcombine.high %v4408, %v4408
        %v4417 = vcombine.high %v4415, %v4415
        %v4418 = vcombine.high %v4300, %v4300
        %v4420 = vunpack.c.l.s4 1983009808
        %v4421 = vunpack.c.0.s8 %v4420
        %v4422 = vlaneseq
        %v4423 = vshrl.u32 %v4422, 7
        %v4424 = vsub.s32 %v4421, %v4423
        %v4425 = vrot.slane %v4300, %v4424
        %v4427 = vunpack.c.l.s4 1983009808
        %v4428 = vunpack.c.0.s8 %v4427
        %v4429 = vlaneseq
        %v4430 = vshrl.u32 %v4429, 7
        %v4431 = vsub.s32 %v4428, %v4430
        %v4432 = vrot.slane %v4418, %v4431
        %v4433 = vcombine.high %v4425, %v4425
        %v4434 = vcombine.high %v4432, %v4432
        %v4435 = vcombine.high %v4303, %v4303
        %v4437 = vunpack.c.l.s4 1983009808
        %v4438 = vunpack.c.0.s8 %v4437
        %v4439 = vlaneseq
        %v4440 = vshrl.u32 %v4439, 7
        %v4441 = vsub.s32 %v4438, %v4440
        %v4442 = vrot.slane %v4303, %v4441
        %v4444 = vunpack.c.l.s4 1983009808
        %v4445 = vunpack.c.0.s8 %v4444
        %v4446 = vlaneseq
        %v4447 = vshrl.u32 %v4446, 7
        %v4448 = vsub.s32 %v4445, %v4447
        %v4449 = vrot.slane %v4435, %v4448
        %v4450 = vcombine.high %v4442, %v4442
        %v4451 = vcombine.high %v4449, %v4449
        %v4452 = vcombine.high %v4308, %v4308
        %v4454 = vunpack.c.l.s4 1983009808
        %v4455 = vunpack.c.0.s8 %v4454
        %v4456 = vlaneseq
        %v4457 = vshrl.u32 %v4456, 7
        %v4458 = vsub.s32 %v4455, %v4457
        %v4459 = vrot.slane %v4308, %v4458
        %v4461 = vunpack.c.l.s4 1983009808
        %v4462 = vunpack.c.0.s8 %v4461
        %v4463 = vlaneseq
        %v4464 = vshrl.u32 %v4463, 7
        %v4465 = vsub.s32 %v4462, %v4464
        %v4466 = vrot.slane %v4452, %v4465
        %v4467 = vcombine.high %v4459, %v4459
        %v4468 = vcombine.high %v4466, %v4466
        %v4469 = vcombine.high %v4311, %v4311
        %v4471 = vunpack.c.l.s4 1983009808
        %v4472 = vunpack.c.0.s8 %v4471
        %v4473 = vlaneseq
        %v4474 = vshrl.u32 %v4473, 7
        %v4475 = vsub.s32 %v4472, %v4474
        %v4476 = vrot.slane %v4311, %v4475
        %v4478 = vunpack.c.l.s4 1983009808
        %v4479 = vunpack.c.0.s8 %v4478
        %v4480 = vlaneseq
        %v4481 = vshrl.u32 %v4480, 7
        %v4482 = vsub.s32 %v4479, %v4481
        %v4483 = vrot.slane %v4469, %v4482
        %v4484 = vcombine.high %v4476, %v4476
        %v4485 = vcombine.high %v4483, %v4483
        %v4486 = vcombine.high %v4316, %v4316
        %v4488 = vunpack.c.l.s4 1983009808
        %v4489 = vunpack.c.0.s8 %v4488
        %v4490 = vlaneseq
        %v4491 = vshrl.u32 %v4490, 7
        %v4492 = vsub.s32 %v4489, %v4491
        %v4493 = vrot.slane %v4316, %v4492
        %v4495 = vunpack.c.l.s4 1983009808
        %v4496 = vunpack.c.0.s8 %v4495
        %v4497 = vlaneseq
        %v4498 = vshrl.u32 %v4497, 7
        %v4499 = vsub.s32 %v4496, %v4498
        %v4500 = vrot.slane %v4486, %v4499
        %v4501 = vcombine.high %v4493, %v4493
        %v4502 = vcombine.high %v4500, %v4500
        %v4503 = vcombine.high %v4319, %v4319
        %v4505 = vunpack.c.l.s4 1983009808
        %v4506 = vunpack.c.0.s8 %v4505
        %v4507 = vlaneseq
        %v4508 = vshrl.u32 %v4507, 7
        %v4509 = vsub.s32 %v4506, %v4508
        %v4510 = vrot.slane %v4319, %v4509
        %v4512 = vunpack.c.l.s4 1983009808
        %v4513 = vunpack.c.0.s8 %v4512
        %v4514 = vlaneseq
        %v4515 = vshrl.u32 %v4514, 7
        %v4516 = vsub.s32 %v4513, %v4515
        %v4517 = vrot.slane %v4503, %v4516
        %v4518 = vcombine.high %v4510, %v4510
        %v4519 = vcombine.high %v4517, %v4517
        %v4520 = vcombine.high %v4324, %v4324
        %v4522 = vunpack.c.l.s4 1983009808
        %v4523 = vunpack.c.0.s8 %v4522
        %v4524 = vlaneseq
        %v4525 = vshrl.u32 %v4524, 7
        %v4526 = vsub.s32 %v4523, %v4525
        %v4527 = vrot.slane %v4324, %v4526
        %v4529 = vunpack.c.l.s4 1983009808
        %v4530 = vunpack.c.0.s8 %v4529
        %v4531 = vlaneseq
        %v4532 = vshrl.u32 %v4531, 7
        %v4533 = vsub.s32 %v4530, %v4532
        %v4534 = vrot.slane %v4520, %v4533
        %v4535 = vcombine.high %v4527, %v4527
        %v4536 = vcombine.high %v4534, %v4534
        %v4537 = vcombine.high %v4327, %v4327
        %v4539 = vunpack.c.l.s4 1983009808
        %v4540 = vunpack.c.0.s8 %v4539
        %v4541 = vlaneseq
        %v4542 = vshrl.u32 %v4541, 7
        %v4543 = vsub.s32 %v4540, %v4542
        %v4544 = vrot.slane %v4327, %v4543
        %v4546 = vunpack.c.l.s4 1983009808
        %v4547 = vunpack.c.0.s8 %v4546
        %v4548 = vlaneseq
        %v4549 = vshrl.u32 %v4548, 7
        %v4550 = vsub.s32 %v4547, %v4549
        %v4551 = vrot.slane %v4537, %v4550
        %v4552 = vcombine.high %v4544, %v4544
        %v4553 = vcombine.high %v4551, %v4551
        %v4555 = vunpack.c.l.s4 1983009808
        %v4556 = vunpack.c.0.s8 %v4555
        %v4557 = vlaneseq
        %v4558 = vshrl.u32 %v4557, 7
        %v4559 = vsub.s32 %v4556, %v4558
        %v4560 = vrot.slane %v4332, %v4559
        %v4610 = vld [vmem:[%s290] sm:$0x1]
        %v4612 = vlaneseq
        %v4613 = vshrl.u32 %v4612, 7
        %v4614 = vsub.s32 0, %v4613
        %v4615 = vrot.slane %v4610, %v4614
        %v4616 = vcombine.high %v4615, %v4615
        %v4618 = vunpack.c.l.s4 1983009808
        %v4619 = vunpack.c.0.s8 %v4618
        %v4620 = vlaneseq
        %v4621 = vshrl.u32 %v4620, 7
        %v4622 = vsub.s32 %v4619, %v4621
        %v4623 = vrot.slane %v4615, %v4622
        %v4625 = vunpack.c.l.s4 1983009808
        %v4626 = vunpack.c.0.s8 %v4625
        %v4627 = vlaneseq
        %v4628 = vshrl.u32 %v4627, 7
        %v4629 = vsub.s32 %v4626, %v4628
        %v4630 = vrot.slane %v4616, %v4629
        %v4631 = vcombine.high %v4623, %v4623
        %v4632 = vcombine.high %v4630, %v4630
        %v4637 = vmul.f32 %v4357, %v4623
        %v4638 = vmul.f32 %v4365, %v4631
        %v4639 = vmul.f32 %v4364, %v4630
        %v4640 = vmul.f32 %v4366, %v4632
        %v4641 = vmul.f32 %v4374, %v4623
        %v4642 = vmul.f32 %v4382, %v4631
        %v4643 = vmul.f32 %v4381, %v4630
        %v4644 = vmul.f32 %v4383, %v4623
        %v4645 = vmul.f32 %v4391, %v4631
        %v4646 = vmul.f32 %v4399, %v4630
        %v4647 = vmul.f32 %v4398, %v4632
        %v4648 = vmul.f32 %v4400, %v4623
        %v4649 = vmul.f32 %v4408, %v4631
        %v4650 = vmul.f32 %v4416, %v4630
        %v4651 = vmul.f32 %v4415, %v4623
        %v4652 = vmul.f32 %v4417, %v4631
        %v4653 = vmul.f32 %v4425, %v4630
        %v4654 = vmul.f32 %v4433, %v4632
        %v4655 = vmul.f32 %v4432, %v4623
        %v4656 = vmul.f32 %v4434, %v4631
        %v4657 = vmul.f32 %v4442, %v4630
        %v4658 = vmul.f32 %v4450, %v4623
        %v4659 = vmul.f32 %v4449, %v4631
        %v4660 = vmul.f32 %v4451, %v4630
        %v4661 = vmul.f32 %v4459, %v4632
        %v4662 = vmul.f32 %v4467, %v4623
        %v4663 = vmul.f32 %v4466, %v4631
        %v4664 = vmul.f32 %v4468, %v4630
        %v4665 = vmul.f32 %v4476, %v4623
        %v4666 = vmul.f32 %v4484, %v4631
        %v4667 = vmul.f32 %v4483, %v4630
        %v4668 = vmul.f32 %v4485, %v4632
        %v4669 = vmul.f32 %v4493, %v4623
        %v4670 = vmul.f32 %v4501, %v4631
        %v4671 = vmul.f32 %v4500, %v4630
        %v4672 = vmul.f32 %v4502, %v4623
        %v4673 = vmul.f32 %v4510, %v4631
        %v4674 = vmul.f32 %v4518, %v4630
        %v4675 = vmul.f32 %v4517, %v4632
        %v4676 = vmul.f32 %v4519, %v4623
        %v4677 = vmul.f32 %v4527, %v4631
        %v4678 = vmul.f32 %v4535, %v4630
        %v4679 = vmul.f32 %v4534, %v4623
        %v4680 = vmul.f32 %v4536, %v4631
        %v4681 = vmul.f32 %v4544, %v4630
        %v4682 = vmul.f32 %v4552, %v4632
        %v4683 = vmul.f32 %v4551, %v4623
        %v4684 = vmul.f32 %v4553, %v4631
        %v4685 = vmul.f32 %v4560, %v4630
        %v4686 = vld [vmem:[%s293] sm:$0x1]
        %v4688 = vlaneseq
        %v4689 = vshrl.u32 %v4688, 7
        %v4690 = vsub.s32 0, %v4689
        %v4691 = vrot.slane %v4686, %v4690
        %v4692 = vcombine.high %v4691, %v4691
        %v4694 = vunpack.c.l.s4 1983009808
        %v4695 = vunpack.c.0.s8 %v4694
        %v4696 = vlaneseq
        %v4697 = vshrl.u32 %v4696, 7
        %v4698 = vsub.s32 %v4695, %v4697
        %v4699 = vrot.slane %v4691, %v4698
        %v4701 = vunpack.c.l.s4 1983009808
        %v4702 = vunpack.c.0.s8 %v4701
        %v4703 = vlaneseq
        %v4704 = vshrl.u32 %v4703, 7
        %v4705 = vsub.s32 %v4702, %v4704
        %v4706 = vrot.slane %v4692, %v4705
        %v4707 = vcombine.high %v4699, %v4699
        %v4708 = vcombine.high %v4706, %v4706
        %v4713 = vadd.f32 %v4637, %v4699
        %v4714 = vadd.f32 %v4638, %v4707
        %v4715 = vadd.f32 %v4639, %v4706
        %v4716 = vadd.f32 %v4640, %v4708
        %v4717 = vadd.f32 %v4641, %v4699
        %v4718 = vadd.f32 %v4642, %v4707
        %v4719 = vadd.f32 %v4643, %v4706
        %v4720 = vadd.f32 %v4644, %v4699
        %v4721 = vadd.f32 %v4645, %v4707
        %v4722 = vadd.f32 %v4646, %v4706
        %v4723 = vadd.f32 %v4647, %v4708
        %v4724 = vadd.f32 %v4648, %v4699
        %v4725 = vadd.f32 %v4649, %v4707
        %v4726 = vadd.f32 %v4650, %v4706
        %v4727 = vadd.f32 %v4651, %v4699
        %v4728 = vadd.f32 %v4652, %v4707
        %v4729 = vadd.f32 %v4653, %v4706
        %v4730 = vadd.f32 %v4654, %v4708
        %v4731 = vadd.f32 %v4655, %v4699
        %v4732 = vadd.f32 %v4656, %v4707
        %v4733 = vadd.f32 %v4657, %v4706
        %v4734 = vadd.f32 %v4658, %v4699
        %v4735 = vadd.f32 %v4659, %v4707
        %v4736 = vadd.f32 %v4660, %v4706
        %v4737 = vadd.f32 %v4661, %v4708
        %v4738 = vadd.f32 %v4662, %v4699
        %v4739 = vadd.f32 %v4663, %v4707
        %v4740 = vadd.f32 %v4664, %v4706
        %v4741 = vadd.f32 %v4665, %v4699
        %v4742 = vadd.f32 %v4666, %v4707
        %v4743 = vadd.f32 %v4667, %v4706
        %v4744 = vadd.f32 %v4668, %v4708
        %v4745 = vadd.f32 %v4669, %v4699
        %v4746 = vadd.f32 %v4670, %v4707
        %v4747 = vadd.f32 %v4671, %v4706
        %v4748 = vadd.f32 %v4672, %v4699
        %v4749 = vadd.f32 %v4673, %v4707
        %v4750 = vadd.f32 %v4674, %v4706
        %v4751 = vadd.f32 %v4675, %v4708
        %v4752 = vadd.f32 %v4676, %v4699
        %v4753 = vadd.f32 %v4677, %v4707
        %v4754 = vadd.f32 %v4678, %v4706
        %v4755 = vadd.f32 %v4679, %v4699
        %v4756 = vadd.f32 %v4680, %v4707
        %v4757 = vadd.f32 %v4681, %v4706
        %v4758 = vadd.f32 %v4682, %v4708
        %v4759 = vadd.f32 %v4683, %v4699
        %v4760 = vadd.f32 %v4684, %v4707
        %v4761 = vadd.f32 %v4685, %v4706
        %v4762 = vmax.f32 %v4713, 0.0
        %v4763 = vmax.f32 %v4714, 0.0
        %v4764 = vmax.f32 %v4715, 0.0
        %v4765 = vmax.f32 %v4716, 0.0
        %v4766 = vmax.f32 %v4717, 0.0
        %v4767 = vmax.f32 %v4718, 0.0
        %v4768 = vmax.f32 %v4719, 0.0
        %v4769 = vmax.f32 %v4720, 0.0
        %v4770 = vmax.f32 %v4721, 0.0
        %v4771 = vmax.f32 %v4722, 0.0
        %v4772 = vmax.f32 %v4723, 0.0
        %v4773 = vmax.f32 %v4724, 0.0
        %v4774 = vmax.f32 %v4725, 0.0
        %v4775 = vmax.f32 %v4726, 0.0
        %v4776 = vmax.f32 %v4727, 0.0
        %v4777 = vmax.f32 %v4728, 0.0
        %v4778 = vmax.f32 %v4729, 0.0
        %v4779 = vmax.f32 %v4730, 0.0
        %v4780 = vmax.f32 %v4731, 0.0
        %v4781 = vmax.f32 %v4732, 0.0
        %v4782 = vmax.f32 %v4733, 0.0
        %v4783 = vmax.f32 %v4734, 0.0
        %v4784 = vmax.f32 %v4735, 0.0
        %v4785 = vmax.f32 %v4736, 0.0
        %v4786 = vmax.f32 %v4737, 0.0
        %v4787 = vmax.f32 %v4738, 0.0
        %v4788 = vmax.f32 %v4739, 0.0
        %v4789 = vmax.f32 %v4740, 0.0
        %v4790 = vmax.f32 %v4741, 0.0
        %v4791 = vmax.f32 %v4742, 0.0
        %v4792 = vmax.f32 %v4743, 0.0
        %v4793 = vmax.f32 %v4744, 0.0
        %v4794 = vmax.f32 %v4745, 0.0
        %v4795 = vmax.f32 %v4746, 0.0
        %v4796 = vmax.f32 %v4747, 0.0
        %v4797 = vmax.f32 %v4748, 0.0
        %v4798 = vmax.f32 %v4749, 0.0
        %v4799 = vmax.f32 %v4750, 0.0
        %v4800 = vmax.f32 %v4751, 0.0
        %v4801 = vmax.f32 %v4752, 0.0
        %v4802 = vmax.f32 %v4753, 0.0
        %v4803 = vmax.f32 %v4754, 0.0
        %v4804 = vmax.f32 %v4755, 0.0
        %v4805 = vmax.f32 %v4756, 0.0
        %v4806 = vmax.f32 %v4757, 0.0
        %v4807 = vmax.f32 %v4758, 0.0
        %v4808 = vmax.f32 %v4759, 0.0
        %v4809 = vmax.f32 %v4760, 0.0
        %v4810 = vmax.f32 %v4761, 0.0
        %v4860 = vcombine.low %v4762, %v4763
        %v4861 = vcombine.low %v4764, %v4765
        %v4863 = vunpack.c.l.s4 1983009808
        %v4864 = vunpack.c.0.s8 %v4863
        %v4865 = vlaneseq
        %v4866 = vshrl.u32 %v4865, 7
        %v4867 = vsub.s32 %v4864, %v4866
        %v4868 = vrot.slane %v4860, %v4867
        %v4870 = vunpack.c.l.s4 1983009808
        %v4871 = vunpack.c.0.s8 %v4870
        %v4872 = vlaneseq
        %v4873 = vshrl.u32 %v4872, 7
        %v4874 = vsub.s32 %v4871, %v4873
        %v4875 = vrot.slane %v4861, %v4874
        %v4876 = vcombine.low %v4868, %v4875
        %v4877 = vcombine.low %v4766, %v4767
        %v4879 = vunpack.c.l.s4 1983009808
        %v4880 = vunpack.c.0.s8 %v4879
        %v4881 = vlaneseq
        %v4882 = vshrl.u32 %v4881, 7
        %v4883 = vsub.s32 %v4880, %v4882
        %v4884 = vrot.slane %v4877, %v4883
        %v4886 = vunpack.c.l.s4 1983009808
        %v4887 = vunpack.c.0.s8 %v4886
        %v4888 = vlaneseq
        %v4889 = vshrl.u32 %v4888, 7
        %v4890 = vsub.s32 %v4887, %v4889
        %v4891 = vrot.slane %v4768, %v4890
        %v4892 = vcombine.low %v4884, %v4891
        %v4893 = vcombine.low %v4769, %v4770
        %v4894 = vcombine.low %v4771, %v4772
        %v4896 = vunpack.c.l.s4 1983009808
        %v4897 = vunpack.c.0.s8 %v4896
        %v4898 = vlaneseq
        %v4899 = vshrl.u32 %v4898, 7
        %v4900 = vsub.s32 %v4897, %v4899
        %v4901 = vrot.slane %v4893, %v4900
        %v4903 = vunpack.c.l.s4 1983009808
        %v4904 = vunpack.c.0.s8 %v4903
        %v4905 = vlaneseq
        %v4906 = vshrl.u32 %v4905, 7
        %v4907 = vsub.s32 %v4904, %v4906
        %v4908 = vrot.slane %v4894, %v4907
        %v4909 = vcombine.low %v4901, %v4908
        %v4910 = vcombine.low %v4773, %v4774
        %v4912 = vunpack.c.l.s4 1983009808
        %v4913 = vunpack.c.0.s8 %v4912
        %v4914 = vlaneseq
        %v4915 = vshrl.u32 %v4914, 7
        %v4916 = vsub.s32 %v4913, %v4915
        %v4917 = vrot.slane %v4910, %v4916
        %v4919 = vunpack.c.l.s4 1983009808
        %v4920 = vunpack.c.0.s8 %v4919
        %v4921 = vlaneseq
        %v4922 = vshrl.u32 %v4921, 7
        %v4923 = vsub.s32 %v4920, %v4922
        %v4924 = vrot.slane %v4775, %v4923
        %v4925 = vcombine.low %v4917, %v4924
        %v4926 = vcombine.low %v4776, %v4777
        %v4927 = vcombine.low %v4778, %v4779
        %v4929 = vunpack.c.l.s4 1983009808
        %v4930 = vunpack.c.0.s8 %v4929
        %v4931 = vlaneseq
        %v4932 = vshrl.u32 %v4931, 7
        %v4933 = vsub.s32 %v4930, %v4932
        %v4934 = vrot.slane %v4926, %v4933
        %v4936 = vunpack.c.l.s4 1983009808
        %v4937 = vunpack.c.0.s8 %v4936
        %v4938 = vlaneseq
        %v4939 = vshrl.u32 %v4938, 7
        %v4940 = vsub.s32 %v4937, %v4939
        %v4941 = vrot.slane %v4927, %v4940
        %v4942 = vcombine.low %v4934, %v4941
        %v4943 = vcombine.low %v4780, %v4781
        %v4945 = vunpack.c.l.s4 1983009808
        %v4946 = vunpack.c.0.s8 %v4945
        %v4947 = vlaneseq
        %v4948 = vshrl.u32 %v4947, 7
        %v4949 = vsub.s32 %v4946, %v4948
        %v4950 = vrot.slane %v4943, %v4949
        %v4952 = vunpack.c.l.s4 1983009808
        %v4953 = vunpack.c.0.s8 %v4952
        %v4954 = vlaneseq
        %v4955 = vshrl.u32 %v4954, 7
        %v4956 = vsub.s32 %v4953, %v4955
        %v4957 = vrot.slane %v4782, %v4956
        %v4958 = vcombine.low %v4950, %v4957
        %v4959 = vcombine.low %v4783, %v4784
        %v4960 = vcombine.low %v4785, %v4786
        %v4962 = vunpack.c.l.s4 1983009808
        %v4963 = vunpack.c.0.s8 %v4962
        %v4964 = vlaneseq
        %v4965 = vshrl.u32 %v4964, 7
        %v4966 = vsub.s32 %v4963, %v4965
        %v4967 = vrot.slane %v4959, %v4966
        %v4969 = vunpack.c.l.s4 1983009808
        %v4970 = vunpack.c.0.s8 %v4969
        %v4971 = vlaneseq
        %v4972 = vshrl.u32 %v4971, 7
        %v4973 = vsub.s32 %v4970, %v4972
        %v4974 = vrot.slane %v4960, %v4973
        %v4975 = vcombine.low %v4967, %v4974
        %v4976 = vcombine.low %v4787, %v4788
        %v4978 = vunpack.c.l.s4 1983009808
        %v4979 = vunpack.c.0.s8 %v4978
        %v4980 = vlaneseq
        %v4981 = vshrl.u32 %v4980, 7
        %v4982 = vsub.s32 %v4979, %v4981
        %v4983 = vrot.slane %v4976, %v4982
        %v4985 = vunpack.c.l.s4 1983009808
        %v4986 = vunpack.c.0.s8 %v4985
        %v4987 = vlaneseq
        %v4988 = vshrl.u32 %v4987, 7
        %v4989 = vsub.s32 %v4986, %v4988
        %v4990 = vrot.slane %v4789, %v4989
        %v4991 = vcombine.low %v4983, %v4990
        %v4992 = vcombine.low %v4790, %v4791
        %v4993 = vcombine.low %v4792, %v4793
        %v4995 = vunpack.c.l.s4 1983009808
        %v4996 = vunpack.c.0.s8 %v4995
        %v4997 = vlaneseq
        %v4998 = vshrl.u32 %v4997, 7
        %v4999 = vsub.s32 %v4996, %v4998
        %v5000 = vrot.slane %v4992, %v4999
        %v5002 = vunpack.c.l.s4 1983009808
        %v5003 = vunpack.c.0.s8 %v5002
        %v5004 = vlaneseq
        %v5005 = vshrl.u32 %v5004, 7
        %v5006 = vsub.s32 %v5003, %v5005
        %v5007 = vrot.slane %v4993, %v5006
        %v5008 = vcombine.low %v5000, %v5007
        %v5009 = vcombine.low %v4794, %v4795
        %v5011 = vunpack.c.l.s4 1983009808
        %v5012 = vunpack.c.0.s8 %v5011
        %v5013 = vlaneseq
        %v5014 = vshrl.u32 %v5013, 7
        %v5015 = vsub.s32 %v5012, %v5014
        %v5016 = vrot.slane %v5009, %v5015
        %v5018 = vunpack.c.l.s4 1983009808
        %v5019 = vunpack.c.0.s8 %v5018
        %v5020 = vlaneseq
        %v5021 = vshrl.u32 %v5020, 7
        %v5022 = vsub.s32 %v5019, %v5021
        %v5023 = vrot.slane %v4796, %v5022
        %v5024 = vcombine.low %v5016, %v5023
        %v5025 = vcombine.low %v4797, %v4798
        %v5026 = vcombine.low %v4799, %v4800
        %v5028 = vunpack.c.l.s4 1983009808
        %v5029 = vunpack.c.0.s8 %v5028
        %v5030 = vlaneseq
        %v5031 = vshrl.u32 %v5030, 7
        %v5032 = vsub.s32 %v5029, %v5031
        %v5033 = vrot.slane %v5025, %v5032
        %v5035 = vunpack.c.l.s4 1983009808
        %v5036 = vunpack.c.0.s8 %v5035
        %v5037 = vlaneseq
        %v5038 = vshrl.u32 %v5037, 7
        %v5039 = vsub.s32 %v5036, %v5038
        %v5040 = vrot.slane %v5026, %v5039
        %v5041 = vcombine.low %v5033, %v5040
        %v5042 = vcombine.low %v4801, %v4802
        %v5044 = vunpack.c.l.s4 1983009808
        %v5045 = vunpack.c.0.s8 %v5044
        %v5046 = vlaneseq
        %v5047 = vshrl.u32 %v5046, 7
        %v5048 = vsub.s32 %v5045, %v5047
        %v5049 = vrot.slane %v5042, %v5048
        %v5051 = vunpack.c.l.s4 1983009808
        %v5052 = vunpack.c.0.s8 %v5051
        %v5053 = vlaneseq
        %v5054 = vshrl.u32 %v5053, 7
        %v5055 = vsub.s32 %v5052, %v5054
        %v5056 = vrot.slane %v4803, %v5055
        %v5057 = vcombine.low %v5049, %v5056
        %v5058 = vcombine.low %v4804, %v4805
        %v5059 = vcombine.low %v4806, %v4807
        %v5061 = vunpack.c.l.s4 1983009808
        %v5062 = vunpack.c.0.s8 %v5061
        %v5063 = vlaneseq
        %v5064 = vshrl.u32 %v5063, 7
        %v5065 = vsub.s32 %v5062, %v5064
        %v5066 = vrot.slane %v5058, %v5065
        %v5068 = vunpack.c.l.s4 1983009808
        %v5069 = vunpack.c.0.s8 %v5068
        %v5070 = vlaneseq
        %v5071 = vshrl.u32 %v5070, 7
        %v5072 = vsub.s32 %v5069, %v5071
        %v5073 = vrot.slane %v5059, %v5072
        %v5074 = vcombine.low %v5066, %v5073
        %v5075 = vcombine.low %v4808, %v4809
        %v5077 = vunpack.c.l.s4 1983009808
        %v5078 = vunpack.c.0.s8 %v5077
        %v5079 = vlaneseq
        %v5080 = vshrl.u32 %v5079, 7
        %v5081 = vsub.s32 %v5078, %v5080
        %v5082 = vrot.slane %v5075, %v5081
        %v5084 = vunpack.c.l.s4 1983009808
        %v5085 = vunpack.c.0.s8 %v5084
        %v5086 = vlaneseq
        %v5087 = vshrl.u32 %v5086, 7
        %v5088 = vsub.s32 %v5085, %v5087
        %v5089 = vrot.slane %v4810, %v5088
        %v5090 = vcombine.low %v5082, %v5089
        %5105 = vst [vmem:[%s306] sm:$0xff] %v4876
        %5106 = vst [vmem:[%s306 + $0x8] sm:$0x3f] %v4892
        %5107 = vst [vmem:[%s306 + $0x10] sm:$0xff] %v4909
        %5108 = vst [vmem:[%s306 + $0x18] sm:$0x3f] %v4925
        %5109 = vst [vmem:[%s306 + $0x20] sm:$0xff] %v4942
        %5110 = vst [vmem:[%s306 + $0x28] sm:$0x3f] %v4958
        %5111 = vst [vmem:[%s306 + $0x30] sm:$0xff] %v4975
        %5112 = vst [vmem:[%s306 + $0x38] sm:$0x3f] %v4991
        %5113 = vst [vmem:[%s306 + $0x40] sm:$0xff] %v5008
        %5114 = vst [vmem:[%s306 + $0x48] sm:$0x3f] %v5024
        %5115 = vst [vmem:[%s306 + $0x50] sm:$0xff] %v5041
        %5116 = vst [vmem:[%s306 + $0x58] sm:$0x3f] %v5057
        %5117 = vst [vmem:[%s306 + $0x60] sm:$0xff] %v5074
        %5118 = vst [vmem:[%s306 + $0x68] sm:$0x3f] %v5090
        %s5119 = smul.u32 7, %s25
        %p5120 = scmp.lt.s32.totalorder %s24, 1
        %s5121 = scalar_select %p5120, %s24, 1
        %p5122 = scmp.lt.s32.totalorder %s5119, 13
        %s5123 = scalar_select %p5122, %s5119, 13
        %p5124 = scmp.lt.s32.totalorder %s26, 0
        %s5125 = scalar_select %p5124, %s26, 0
        %s5126 = smul.addr %s5123, 2
        %s5127 = sadd.s32 %s5125, %s5126
        %s5128 = smul.addr %s5121, 28
        %s5129 = sadd.s32 %s5127, %s5128
        %s5130 = smul.addr %s5129, 8
        %s5131 = scalar_lea.vmem %s4, %s5130
        // Predicated region
        $region45: #{tpu_custom_call.1} parent=35 // pred_check
          %p5132 = pneg %p164
        $region46: #{tpu_custom_call.1} parent=35 // pred_check_branch
          %5134 = sbr.rel (%p5132) target = $region48
        $region47: #{tpu_custom_call.1} parent=35 // pred_region
          %s5135 = smul.u32 7, %s25
        $region48: #{tpu_custom_call.1} parent=35 // pred_fallthru
          _
      $region36: #{tpu_custom_call.1} parent=5 // pred_fallthru
        _
      %p5136 = scmp.le.s32.totalorder 2, %s14
      // Predicated region
      $region49: #{tpu_custom_call.1} parent=5 // pred_check
        %p5137 = pneg %p5136
      $region50: #{tpu_custom_call.1} parent=5 // pred_check_branch
        %5139 = sbr.rel (%p5137) target = $region52
      $region51: #{tpu_custom_call.1} parent=5 // pred_region
        %s5140 = ssub.s32 %s14, 2
        // Predicated region
        $region53: #{tpu_custom_call.1} parent=51 // pred_check
          %p5141 = pneg %p170
        $region54: #{tpu_custom_call.1} parent=51 // pred_check_branch
          %5143 = sbr.rel (%p5141) target = $region56
        $region55: #{tpu_custom_call.1} parent=51 // pred_region
          %s5144 = smul.u32 7, %s28
          %p5145 = scmp.lt.s32.totalorder %s27, 1
          %s5146 = scalar_select %p5145, %s27, 1
          %p5147 = scmp.lt.s32.totalorder %s5144, 13
          %s5148 = scalar_select %p5147, %s5144, 13
          %p5149 = scmp.lt.s32.totalorder %s29, 0
          %s5150 = scalar_select %p5149, %s29, 0
          %s5151 = smul.addr %s5148, 2
          %s5152 = sadd.s32 %s5150, %s5151
          %s5153 = smul.addr %s5146, 28
          %s5154 = sadd.s32 %s5152, %s5153
          %s5155 = smul.addr %s5154, 8
          %s5156 = scalar_lea.vmem %s4, %s5155
        $region56: #{tpu_custom_call.1} parent=51 // pred_fallthru
          _
      $region52: #{tpu_custom_call.1} parent=5 // pred_fallthru
        _
    $region6: #{tpu_custom_call.1} parent=1 // loop_footer
      %s18 = sadd.s32 1, %s14
    $region7: #{tpu_custom_call.1} parent=1 // loop_footer_branch
      %13 = sbr.rel target = $region3
    $region8: #{tpu_custom_call.1} parent=1 // loop_exit
      _
    %5157 = vsyncpa [#allocation3], 1
    %s5158 = scalar_lea.sflag [#allocation3], 1
    %5159 = vsyncpa %s5158, 1
    %5160 = vsyncpa [#allocation5], 1

</llo_original>
